<compile_context>
chip_gen: v7x
topology: tpu7x:2x2x1
jax: 0.10.0
libtpu: 0.0.40
codegen_flags: <defaults>
</compile_context>

<pallas_src>
import functools

import numpy as np
import jax
import jax.numpy as jnp
from jax import lax
from jax.experimental import pallas as pl
from jax.experimental.pallas import tpu as pltpu

TOPK = 200      # matches `neg_exp_logits.topk(200)` in the PyTorch module
N_BISECT = 26   # threshold-bisection steps; rel. error <= N * 2^-26 on denom


def _supcon_kernel(a_ref, c_ref, labr_ref, labc_ref, mlpp_ref, cnt_ref,
                   logit_ref, *, temperature, n_cols, tile_rows, sub_rows):
    i = pl.program_id(0)

    # ---- anchor . contrast^T for the whole row tile (one well-shaped matmul).
    a = a_ref[...]                            # [T, D]  anchor rows
    c = c_ref[...]                            # [N, D]  all contrast features
    adc = lax.dot_general(a, c, (((1,), (1,)), ((), ())),
                          preferred_element_type=jnp.float32)
    adc = adc * (1.0 / temperature)
    row_max = jnp.max(adc, axis=1, keepdims=True)
    logit_ref[...] = (adc - row_max) * 10.0   # `logits = logits * 10`

    topk_f = float(TOPK)
    n_sub = tile_rows // sub_rows

    # ---- per sub-block: in-kernel masks, exp, top-K sum via bisection.
    @pl.loop(0, n_sub)
    def _(s):
        r0 = pl.multiple_of(s * sub_rows, sub_rows)
        base = i * tile_rows + r0             # global anchor-row index of row 0

        lab_rows = labr_ref[pl.ds(r0, sub_rows), :]        # [R, 1] int32
        lab_cols = labc_ref[...]                           # [1, N] int32
        eq = lab_rows == lab_cols                          # label-equality mask
        col_ids = lax.broadcasted_iota(jnp.int32, (sub_rows, n_cols), 1)
        row_ids = lax.broadcasted_iota(jnp.int32, (sub_rows, n_cols), 0) + base
        not_self = row_ids != col_ids                      # logits_mask
        pos_mask = jnp.logical_and(eq, not_self)           # mask * logits_mask

        logits = logit_ref[pl.ds(r0, sub_rows), :]         # [R, N]
        exp_l = jnp.exp(logits)                            # EUP (free slot)
        pos_exp_sum = jnp.sum(jnp.where(pos_mask, exp_l, 0.0),
                              axis=1, keepdims=True)
        # negative exp-logits: same-label (incl. self) columns zeroed.
        neg = jnp.where(eq, 0.0, exp_l)                    # >= 0 everywhere

        # Threshold bisection: sum of the K largest entries of `neg` per row.
        # Invariants: count(neg > lo) >= K (non-degenerate), count(neg > hi) < K.
        hi = jnp.max(neg, axis=1, keepdims=True)
        lo = jnp.zeros_like(hi)
        for _unused in range(N_BISECT):
            mid = 0.5 * (lo + hi)
            cnt = jnp.sum(jnp.where(neg > mid, 1.0, 0.0), axis=1, keepdims=True)
            take_lo = cnt >= topk_f
            lo = jnp.where(take_lo, mid, lo)
            hi = jnp.where(take_lo, hi, mid)
        above = neg > lo
        cnt_gt = jnp.sum(jnp.where(above, 1.0, 0.0), axis=1, keepdims=True)
        sum_gt = jnp.sum(jnp.where(above, neg, 0.0), axis=1, keepdims=True)
        topk_sum = sum_gt + (topk_f - cnt_gt) * lo         # tie / interval fix

        # denominator: positives (excluding self) + top-K negatives
        denom = pos_exp_sum + topk_sum

        # numerator: sum over positives of (logits - log(denom))
        pos_cnt = jnp.sum(jnp.where(pos_mask, 1.0, 0.0), axis=1, keepdims=True)
        num = (jnp.sum(jnp.where(pos_mask, logits, 0.0), axis=1, keepdims=True)
               - pos_cnt * jnp.log(denom))
        mlpp = num / jnp.maximum(pos_cnt, 1.0)

        mlpp_ref[pl.ds(r0, sub_rows), :] = mlpp
        cnt_ref[pl.ds(r0, sub_rows), :] = pos_cnt


def supcon_topk_loss(features, labels, temperature=1.0, base_temperature=0.5,
                     tile_rows=128, sub_rows=32):
    B, V, D = features.shape
    assert V == 1, "contrast_mode='all' in the reference only runs with n_views==1"
    N = B * V
    assert N >= TOPK, "topk(200) requires at least 200 contrast samples"
    assert N % tile_rows == 0
    assert tile_rows % sub_rows == 0 and sub_rows % 8 == 0

    contrast = features.reshape(N, D).astype(jnp.float32)
    anchors = contrast                      # contrast_mode == 'all'
    labels = labels.reshape(-1).astype(jnp.int32)
    lab_anchor = labels.reshape(N, 1)       # per-anchor-row labels
    lab_column = labels.reshape(1, N)       # per-contrast-column labels

    kernel = functools.partial(_supcon_kernel,
                               temperature=float(temperature),
                               n_cols=N, tile_rows=tile_rows, sub_rows=sub_rows)

    mlpp, possum = pl.pallas_call(
        kernel,
        out_shape=(jax.ShapeDtypeStruct((N, 1), jnp.float32),
                   jax.ShapeDtypeStruct((N, 1), jnp.float32)),
        grid_spec=pltpu.PrefetchScalarGridSpec(
            num_scalar_prefetch=0,
            grid=(N // tile_rows,),
            in_specs=[
                pl.BlockSpec((tile_rows, D), lambda i: (i, 0)),   # anchor rows
                pl.BlockSpec((N, D), lambda i: (0, 0)),           # full contrast (resident)
                pl.BlockSpec((tile_rows, 1), lambda i: (i, 0)),   # anchor-row labels
                pl.BlockSpec((1, N), lambda i: (0, 0)),           # column labels
            ],
            out_specs=(pl.BlockSpec((tile_rows, 1), lambda i: (i, 0)),
                       pl.BlockSpec((tile_rows, 1), lambda i: (i, 0))),
            scratch_shapes=[pltpu.VMEM((tile_rows, N), jnp.float32)],
        ),
        compiler_params=pltpu.CompilerParams(dimension_semantics=("parallel",)),
    )(anchors, contrast, lab_anchor, lab_column)

    mlpp = mlpp[:, 0]
    possum = possum[:, 0]

    # Row selection as masking (equivalent to the reference's boolean-index
    # filtering, since everything up to the final mean is row-local).
    anchor_valid = labels > 0                       # anchor_feature[labels > 0]
    uses = anchor_valid & (possum > 0.0)            # uses = mask.sum(1) > 0
    per_row = -(temperature / base_temperature) * mlpp
    n_use = jnp.sum(uses.astype(jnp.float32))
    loss = jnp.sum(jnp.where(uses, per_row, 0.0)) / jnp.maximum(n_use, 1.0)
    return loss


def _ref_loss_np(features, labels, temperature=1.0, base_temperature=0.5):
    """NumPy port of the PyTorch forward (contrast_mode='all', n_views=1)."""
    f = np.asarray(features, np.float32)
    lab = np.asarray(labels).reshape(-1)
    B, V, D = f.shape
    contrast = np.concatenate([f[:, v] for v in range(V)], axis=0)
    anchor = contrast
    anchor_count = V
    sel = lab > 0
    anchor = anchor[sel]
    adc = anchor @ contrast.T / temperature
    logits = (adc - adc.max(axis=1, keepdims=True)) * 10.0
    mask = (lab[:, None] == lab[None, :]).astype(np.float32)
    mask = np.tile(mask, (anchor_count, V))
    N = B * V
    logits_mask = np.ones((B * anchor_count, N), np.float32)
    idx = np.arange(B * anchor_count)
    logits_mask[idx, idx] = 0.0
    neg_mask = 1.0 - mask
    mask = mask * logits_mask
    mask = mask[sel]
    neg_mask = neg_mask[sel]
    logits_mask = logits_mask[sel]
    exp_logits = np.exp(logits) * logits_mask
    neg_exp = exp_logits * neg_mask
    ind = np.argsort(-neg_exp, axis=1)[:, :TOPK]
    mask_topk = np.zeros_like(mask)
    np.put_along_axis(mask_topk, ind, 1.0, axis=1)
    all_mask = mask + mask_topk
    denom = (exp_logits * all_mask).sum(1, keepdims=True)
    log_prob = logits - np.log(denom)
    uses = mask.sum(1) > 0
    mask = mask[uses]
    log_prob = log_prob[uses]
    mlpp = (mask * log_prob).sum(1) / mask.sum(1)
    loss = -(temperature / base_temperature) * mlpp
    return loss.reshape(anchor_count, -1).mean()


if __name__ == "__main__":
    # TODO(synk): degenerate rows (< 200 strictly-positive negative similarities)
    # have undefined torch.topk tie-breaking among zero-valued entries; the
    # kernel sums all positive negatives there, which matches torch for every
    # non-degenerate input.
    key = jax.random.PRNGKey(0)
    B, V, D = 512, 1, 32            # topk(200) needs >= 200 contrast samples
    kf, kl = jax.random.split(key)
    feats = jax.random.normal(kf, (B, V, D), dtype=jnp.float32)
    feats = feats / jnp.linalg.norm(feats, axis=-1, keepdims=True)
    labels = jax.random.randint(kl, (B,), 0, 8, dtype=jnp.int32)

    loss = jax.jit(supcon_topk_loss)(feats, labels)
    loss = jax.block_until_ready(loss)

    ref = _ref_loss_np(np.asarray(feats), np.asarray(labels))
    assert np.isfinite(float(loss)), "kernel produced non-finite loss"
    assert abs(float(loss) - float(ref)) <= 2e-3 * max(1.0, abs(float(ref))), (
        f"mismatch: kernel={float(loss)} ref={float(ref)}")
    print("KERNEL_OK")
</pallas_src>

<mosaic_0001>
module attributes {stable_mosaic.version = 11 : i64} {
  func.func @_supcon_kernel(%arg0: i32, %arg1: memref<128x32xf32, #tpu.memory_space<vmem>>, %arg2: memref<512x32xf32, #tpu.memory_space<vmem>>, %arg3: memref<128x1xi32, #tpu.memory_space<vmem>>, %arg4: memref<1x512xi32, #tpu.memory_space<vmem>>, %arg5: memref<128x1xf32, #tpu.memory_space<vmem>>, %arg6: memref<128x1xf32, #tpu.memory_space<vmem>>, %arg7: memref<128x512xf32, #tpu.memory_space<vmem>>) attributes {dimension_semantics = [#tpu.dimension_semantics<parallel>], iteration_bounds = array<i64: 4>, scalar_prefetch = 0 : i64, scratch_operands = 1 : i64, tpu.core_type = #tpu.core_type<tc>, window_params = [{transform_indices = @transform_0, window_bounds = array<i64: 128, 32>}, {pipeline_mode = #tpu.pipeline_mode<synchronous>, transform_indices = @transform_1, window_bounds = array<i64: 512, 32>}, {transform_indices = @transform_2, window_bounds = array<i64: 128, 1>}, {pipeline_mode = #tpu.pipeline_mode<synchronous>, transform_indices = @transform_3, window_bounds = array<i64: 1, 512>}, {transform_indices = @transform_4, window_bounds = array<i64: 128, 1>}, {transform_indices = @transform_5, window_bounds = array<i64: 128, 1>}]} {
    %c0 = arith.constant 0 : index
    %c0_0 = arith.constant 0 : index
    %0 = vector.load %arg1[%c0, %c0_0] : memref<128x32xf32, #tpu.memory_space<vmem>>, vector<128x32xf32>
    %c0_1 = arith.constant 0 : index
    %c0_2 = arith.constant 0 : index
    %1 = vector.load %arg2[%c0_1, %c0_2] : memref<512x32xf32, #tpu.memory_space<vmem>>, vector<512x32xf32>
    %cst = arith.constant dense<0.000000e+00> : vector<128x512xf32>
    %2 = tpu.matmul %0, %1, %cst {dimension_numbers = #tpu.dot_dimension_numbers<[1], [1], [0], [0], [0, 0, 1, 0], [], []>} : vector<128x32xf32>, vector<512x32xf32>, vector<128x512xf32> -> vector<128x512xf32>
    %cst_3 = arith.constant 1.000000e+00 : f32
    %3 = vector.broadcast %cst_3 : f32 to vector<128x512xf32>
    %4 = arith.mulf %2, %3 : vector<128x512xf32>
    %cst_4 = arith.constant dense<0xFF800000> : vector<128xf32>
    %5 = vector.multi_reduction <maximumf>, %4, %cst_4 [1] : vector<128x512xf32> to vector<128xf32>
    %6 = vector.shape_cast %5 : vector<128xf32> to vector<128x1xf32>
    %7 = vector.broadcast %6 : vector<128x1xf32> to vector<128x512xf32>
    %8 = arith.subf %4, %7 : vector<128x512xf32>
    %cst_5 = arith.constant 1.000000e+01 : f32
    %9 = vector.broadcast %cst_5 : f32 to vector<128x512xf32>
    %10 = arith.mulf %8, %9 : vector<128x512xf32>
    %c0_6 = arith.constant 0 : index
    %c0_7 = arith.constant 0 : index
    %11 = vector.load %arg7[%c0_6, %c0_7] : memref<128x512xf32, #tpu.memory_space<vmem>>, vector<128x512xf32>
    tpu.vector_store %arg7[%c0_6, %c0_7], %10 {strides = array<i32>} : memref<128x512xf32, #tpu.memory_space<vmem>>, vector<128x512xf32>,
    %c0_i32 = arith.constant 0 : i32
    %c4_i32 = arith.constant 4 : i32
    %12 = arith.addi %c0_i32, %c4_i32 : i32
    %c1_i32 = arith.constant 1 : i32
    scf.for %arg8 = %c0_i32 to %12 step %c1_i32  : i32 {
      %c1_i32_9 = arith.constant 1 : i32
      %13 = arith.muli %arg8, %c1_i32_9 : i32
      %c0_i32_10 = arith.constant 0 : i32
      %14 = arith.addi %c0_i32_10, %13 : i32
      %c32_i32 = arith.constant 32 : i32
      %15 = arith.muli %14, %c32_i32 : i32
      %16 = tpu.assume_multiple %15, 32 : i32
      %c128_i32 = arith.constant 128 : i32
      %17 = arith.muli %arg0, %c128_i32 : i32
      %18 = arith.addi %17, %16 : i32
      %19 = arith.index_cast %16 : i32 to index
      %c0_11 = arith.constant 0 : index
      %20 = vector.load %arg3[%19, %c0_11] : memref<128x1xi32, #tpu.memory_space<vmem>>, vector<32x1xi32>
      %c0_12 = arith.constant 0 : index
      %c0_13 = arith.constant 0 : index
      %21 = vector.load %arg4[%c0_12, %c0_13] : memref<1x512xi32, #tpu.memory_space<vmem>>, vector<1x512xi32>
      %22 = vector.broadcast %20 : vector<32x1xi32> to vector<32x512xi32>
      %23 = vector.broadcast %21 : vector<1x512xi32> to vector<32x512xi32>
      %24 = arith.cmpi eq, %22, %23 : vector<32x512xi32>
      %25 = tpu.iota {dimensions = array<i32: 1>} : vector<32x512xi32>
      %26 = tpu.iota {dimensions = array<i32: 0>} : vector<32x512xi32>
      %27 = vector.broadcast %18 : i32 to vector<32x512xi32>
      %28 = arith.addi %26, %27 : vector<32x512xi32>
      %29 = arith.cmpi ne, %28, %25 : vector<32x512xi32>
      %30 = arith.andi %24, %29 : vector<32x512xi1>
      %31 = arith.index_cast %16 : i32 to index
      %c0_14 = arith.constant 0 : index
      %32 = vector.load %arg7[%31, %c0_14] : memref<128x512xf32, #tpu.memory_space<vmem>>, vector<32x512xf32>
      %33 = math.exp %32 : vector<32x512xf32>
      %cst_15 = arith.constant 0.000000e+00 : f32
      %34 = vector.broadcast %cst_15 : f32 to vector<32x512xf32>
      %35 = arith.select %30, %33, %34 : vector<32x512xi1>, vector<32x512xf32>
      %cst_16 = arith.constant dense<0.000000e+00> : vector<32xf32>
      %36 = vector.multi_reduction <add>, %35, %cst_16 [1] : vector<32x512xf32> to vector<32xf32>
      %37 = vector.shape_cast %36 : vector<32xf32> to vector<32x1xf32>
      %cst_17 = arith.constant 0.000000e+00 : f32
      %38 = vector.broadcast %cst_17 : f32 to vector<32x512xf32>
      %39 = arith.select %24, %38, %33 : vector<32x512xi1>, vector<32x512xf32>
      %cst_18 = arith.constant dense<0xFF800000> : vector<32xf32>
      %40 = vector.multi_reduction <maximumf>, %39, %cst_18 [1] : vector<32x512xf32> to vector<32xf32>
      %41 = vector.shape_cast %40 : vector<32xf32> to vector<32x1xf32>
      %cst_19 = arith.constant 0.000000e+00 : f32
      %42 = vector.broadcast %cst_19 : f32 to vector<32x1xf32>
      %43 = arith.addf %42, %41 : vector<32x1xf32>
      %cst_20 = arith.constant 5.000000e-01 : f32
      %44 = vector.broadcast %cst_20 : f32 to vector<32x1xf32>
      %45 = arith.mulf %44, %43 : vector<32x1xf32>
      %46 = vector.broadcast %45 : vector<32x1xf32> to vector<32x512xf32>
      %47 = arith.cmpf ogt, %39, %46 : vector<32x512xf32>
      %cst_21 = arith.constant 1.000000e+00 : f32
      %cst_22 = arith.constant 0.000000e+00 : f32
      %48 = vector.broadcast %cst_21 : f32 to vector<32x512xf32>
      %49 = vector.broadcast %cst_22 : f32 to vector<32x512xf32>
      %50 = arith.select %47, %48, %49 : vector<32x512xi1>, vector<32x512xf32>
      %cst_23 = arith.constant dense<0.000000e+00> : vector<32xf32>
      %51 = vector.multi_reduction <add>, %50, %cst_23 [1] : vector<32x512xf32> to vector<32xf32>
      %52 = vector.shape_cast %51 : vector<32xf32> to vector<32x1xf32>
      %cst_24 = arith.constant 2.000000e+02 : f32
      %53 = vector.broadcast %cst_24 : f32 to vector<32x1xf32>
      %54 = arith.cmpf oge, %52, %53 : vector<32x1xf32>
      %55 = arith.select %54, %45, %42 : vector<32x1xi1>, vector<32x1xf32>
      %56 = arith.select %54, %41, %45 : vector<32x1xi1>, vector<32x1xf32>
      %57 = arith.addf %55, %56 : vector<32x1xf32>
      %cst_25 = arith.constant 5.000000e-01 : f32
      %58 = vector.broadcast %cst_25 : f32 to vector<32x1xf32>
      %59 = arith.mulf %58, %57 : vector<32x1xf32>
      %60 = vector.broadcast %59 : vector<32x1xf32> to vector<32x512xf32>
      %61 = arith.cmpf ogt, %39, %60 : vector<32x512xf32>
      %cst_26 = arith.constant 1.000000e+00 : f32
      %cst_27 = arith.constant 0.000000e+00 : f32
      %62 = vector.broadcast %cst_26 : f32 to vector<32x512xf32>
      %63 = vector.broadcast %cst_27 : f32 to vector<32x512xf32>
      %64 = arith.select %61, %62, %63 : vector<32x512xi1>, vector<32x512xf32>
      %cst_28 = arith.constant dense<0.000000e+00> : vector<32xf32>
      %65 = vector.multi_reduction <add>, %64, %cst_28 [1] : vector<32x512xf32> to vector<32xf32>
      %66 = vector.shape_cast %65 : vector<32xf32> to vector<32x1xf32>
      %cst_29 = arith.constant 2.000000e+02 : f32
      %67 = vector.broadcast %cst_29 : f32 to vector<32x1xf32>
      %68 = arith.cmpf oge, %66, %67 : vector<32x1xf32>
      %69 = arith.select %68, %59, %55 : vector<32x1xi1>, vector<32x1xf32>
      %70 = arith.select %68, %56, %59 : vector<32x1xi1>, vector<32x1xf32>
      %71 = arith.addf %69, %70 : vector<32x1xf32>
      %cst_30 = arith.constant 5.000000e-01 : f32
      %72 = vector.broadcast %cst_30 : f32 to vector<32x1xf32>
      %73 = arith.mulf %72, %71 : vector<32x1xf32>
      %74 = vector.broadcast %73 : vector<32x1xf32> to vector<32x512xf32>
      %75 = arith.cmpf ogt, %39, %74 : vector<32x512xf32>
      %cst_31 = arith.constant 1.000000e+00 : f32
      %cst_32 = arith.constant 0.000000e+00 : f32
      %76 = vector.broadcast %cst_31 : f32 to vector<32x512xf32>
      %77 = vector.broadcast %cst_32 : f32 to vector<32x512xf32>
      %78 = arith.select %75, %76, %77 : vector<32x512xi1>, vector<32x512xf32>
      %cst_33 = arith.constant dense<0.000000e+00> : vector<32xf32>
      %79 = vector.multi_reduction <add>, %78, %cst_33 [1] : vector<32x512xf32> to vector<32xf32>
      %80 = vector.shape_cast %79 : vector<32xf32> to vector<32x1xf32>
      %cst_34 = arith.constant 2.000000e+02 : f32
      %81 = vector.broadcast %cst_34 : f32 to vector<32x1xf32>
      %82 = arith.cmpf oge, %80, %81 : vector<32x1xf32>
      %83 = arith.select %82, %73, %69 : vector<32x1xi1>, vector<32x1xf32>
      %84 = arith.select %82, %70, %73 : vector<32x1xi1>, vector<32x1xf32>
      %85 = arith.addf %83, %84 : vector<32x1xf32>
      %cst_35 = arith.constant 5.000000e-01 : f32
      %86 = vector.broadcast %cst_35 : f32 to vector<32x1xf32>
      %87 = arith.mulf %86, %85 : vector<32x1xf32>
      %88 = vector.broadcast %87 : vector<32x1xf32> to vector<32x512xf32>
      %89 = arith.cmpf ogt, %39, %88 : vector<32x512xf32>
      %cst_36 = arith.constant 1.000000e+00 : f32
      %cst_37 = arith.constant 0.000000e+00 : f32
      %90 = vector.broadcast %cst_36 : f32 to vector<32x512xf32>
      %91 = vector.broadcast %cst_37 : f32 to vector<32x512xf32>
      %92 = arith.select %89, %90, %91 : vector<32x512xi1>, vector<32x512xf32>
      %cst_38 = arith.constant dense<0.000000e+00> : vector<32xf32>
      %93 = vector.multi_reduction <add>, %92, %cst_38 [1] : vector<32x512xf32> to vector<32xf32>
      %94 = vector.shape_cast %93 : vector<32xf32> to vector<32x1xf32>
      %cst_39 = arith.constant 2.000000e+02 : f32
      %95 = vector.broadcast %cst_39 : f32 to vector<32x1xf32>
      %96 = arith.cmpf oge, %94, %95 : vector<32x1xf32>
      %97 = arith.select %96, %87, %83 : vector<32x1xi1>, vector<32x1xf32>
      %98 = arith.select %96, %84, %87 : vector<32x1xi1>, vector<32x1xf32>
      %99 = arith.addf %97, %98 : vector<32x1xf32>
      %cst_40 = arith.constant 5.000000e-01 : f32
      %100 = vector.broadcast %cst_40 : f32 to vector<32x1xf32>
      %101 = arith.mulf %100, %99 : vector<32x1xf32>
      %102 = vector.broadcast %101 : vector<32x1xf32> to vector<32x512xf32>
      %103 = arith.cmpf ogt, %39, %102 : vector<32x512xf32>
      %cst_41 = arith.constant 1.000000e+00 : f32
      %cst_42 = arith.constant 0.000000e+00 : f32
      %104 = vector.broadcast %cst_41 : f32 to vector<32x512xf32>
      %105 = vector.broadcast %cst_42 : f32 to vector<32x512xf32>
      %106 = arith.select %103, %104, %105 : vector<32x512xi1>, vector<32x512xf32>
      %cst_43 = arith.constant dense<0.000000e+00> : vector<32xf32>
      %107 = vector.multi_reduction <add>, %106, %cst_43 [1] : vector<32x512xf32> to vector<32xf32>
      %108 = vector.shape_cast %107 : vector<32xf32> to vector<32x1xf32>
      %cst_44 = arith.constant 2.000000e+02 : f32
      %109 = vector.broadcast %cst_44 : f32 to vector<32x1xf32>
      %110 = arith.cmpf oge, %108, %109 : vector<32x1xf32>
      %111 = arith.select %110, %101, %97 : vector<32x1xi1>, vector<32x1xf32>
      %112 = arith.select %110, %98, %101 : vector<32x1xi1>, vector<32x1xf32>
      %113 = arith.addf %111, %112 : vector<32x1xf32>
      %cst_45 = arith.constant 5.000000e-01 : f32
      %114 = vector.broadcast %cst_45 : f32 to vector<32x1xf32>
      %115 = arith.mulf %114, %113 : vector<32x1xf32>
      %116 = vector.broadcast %115 : vector<32x1xf32> to vector<32x512xf32>
      %117 = arith.cmpf ogt, %39, %116 : vector<32x512xf32>
      %cst_46 = arith.constant 1.000000e+00 : f32
      %cst_47 = arith.constant 0.000000e+00 : f32
      %118 = vector.broadcast %cst_46 : f32 to vector<32x512xf32>
      %119 = vector.broadcast %cst_47 : f32 to vector<32x512xf32>
      %120 = arith.select %117, %118, %119 : vector<32x512xi1>, vector<32x512xf32>
      %cst_48 = arith.constant dense<0.000000e+00> : vector<32xf32>
      %121 = vector.multi_reduction <add>, %120, %cst_48 [1] : vector<32x512xf32> to vector<32xf32>
      %122 = vector.shape_cast %121 : vector<32xf32> to vector<32x1xf32>
      %cst_49 = arith.constant 2.000000e+02 : f32
      %123 = vector.broadcast %cst_49 : f32 to vector<32x1xf32>
      %124 = arith.cmpf oge, %122, %123 : vector<32x1xf32>
      %125 = arith.select %124, %115, %111 : vector<32x1xi1>, vector<32x1xf32>
      %126 = arith.select %124, %112, %115 : vector<32x1xi1>, vector<32x1xf32>
      %127 = arith.addf %125, %126 : vector<32x1xf32>
      %cst_50 = arith.constant 5.000000e-01 : f32
      %128 = vector.broadcast %cst_50 : f32 to vector<32x1xf32>
      %129 = arith.mulf %128, %127 : vector<32x1xf32>
      %130 = vector.broadcast %129 : vector<32x1xf32> to vector<32x512xf32>
      %131 = arith.cmpf ogt, %39, %130 : vector<32x512xf32>
      %cst_51 = arith.constant 1.000000e+00 : f32
      %cst_52 = arith.constant 0.000000e+00 : f32
      %132 = vector.broadcast %cst_51 : f32 to vector<32x512xf32>
      %133 = vector.broadcast %cst_52 : f32 to vector<32x512xf32>
      %134 = arith.select %131, %132, %133 : vector<32x512xi1>, vector<32x512xf32>
      %cst_53 = arith.constant dense<0.000000e+00> : vector<32xf32>
      %135 = vector.multi_reduction <add>, %134, %cst_53 [1] : vector<32x512xf32> to vector<32xf32>
      %136 = vector.shape_cast %135 : vector<32xf32> to vector<32x1xf32>
      %cst_54 = arith.constant 2.000000e+02 : f32
      %137 = vector.broadcast %cst_54 : f32 to vector<32x1xf32>
      %138 = arith.cmpf oge, %136, %137 : vector<32x1xf32>
      %139 = arith.select %138, %129, %125 : vector<32x1xi1>, vector<32x1xf32>
      %140 = arith.select %138, %126, %129 : vector<32x1xi1>, vector<32x1xf32>
      %141 = arith.addf %139, %140 : vector<32x1xf32>
      %cst_55 = arith.constant 5.000000e-01 : f32
      %142 = vector.broadcast %cst_55 : f32 to vector<32x1xf32>
      %143 = arith.mulf %142, %141 : vector<32x1xf32>
      %144 = vector.broadcast %143 : vector<32x1xf32> to vector<32x512xf32>
      %145 = arith.cmpf ogt, %39, %144 : vector<32x512xf32>
      %cst_56 = arith.constant 1.000000e+00 : f32
      %cst_57 = arith.constant 0.000000e+00 : f32
      %146 = vector.broadcast %cst_56 : f32 to vector<32x512xf32>
      %147 = vector.broadcast %cst_57 : f32 to vector<32x512xf32>
      %148 = arith.select %145, %146, %147 : vector<32x512xi1>, vector<32x512xf32>
      %cst_58 = arith.constant dense<0.000000e+00> : vector<32xf32>
      %149 = vector.multi_reduction <add>, %148, %cst_58 [1] : vector<32x512xf32> to vector<32xf32>
      %150 = vector.shape_cast %149 : vector<32xf32> to vector<32x1xf32>
      %cst_59 = arith.constant 2.000000e+02 : f32
      %151 = vector.broadcast %cst_59 : f32 to vector<32x1xf32>
      %152 = arith.cmpf oge, %150, %151 : vector<32x1xf32>
      %153 = arith.select %152, %143, %139 : vector<32x1xi1>, vector<32x1xf32>
      %154 = arith.select %152, %140, %143 : vector<32x1xi1>, vector<32x1xf32>
      %155 = arith.addf %153, %154 : vector<32x1xf32>
      %cst_60 = arith.constant 5.000000e-01 : f32
      %156 = vector.broadcast %cst_60 : f32 to vector<32x1xf32>
      %157 = arith.mulf %156, %155 : vector<32x1xf32>
      %158 = vector.broadcast %157 : vector<32x1xf32> to vector<32x512xf32>
      %159 = arith.cmpf ogt, %39, %158 : vector<32x512xf32>
      %cst_61 = arith.constant 1.000000e+00 : f32
      %cst_62 = arith.constant 0.000000e+00 : f32
      %160 = vector.broadcast %cst_61 : f32 to vector<32x512xf32>
      %161 = vector.broadcast %cst_62 : f32 to vector<32x512xf32>
      %162 = arith.select %159, %160, %161 : vector<32x512xi1>, vector<32x512xf32>
      %cst_63 = arith.constant dense<0.000000e+00> : vector<32xf32>
      %163 = vector.multi_reduction <add>, %162, %cst_63 [1] : vector<32x512xf32> to vector<32xf32>
      %164 = vector.shape_cast %163 : vector<32xf32> to vector<32x1xf32>
      %cst_64 = arith.constant 2.000000e+02 : f32
      %165 = vector.broadcast %cst_64 : f32 to vector<32x1xf32>
      %166 = arith.cmpf oge, %164, %165 : vector<32x1xf32>
      %167 = arith.select %166, %157, %153 : vector<32x1xi1>, vector<32x1xf32>
      %168 = arith.select %166, %154, %157 : vector<32x1xi1>, vector<32x1xf32>
      %169 = arith.addf %167, %168 : vector<32x1xf32>
      %cst_65 = arith.constant 5.000000e-01 : f32
      %170 = vector.broadcast %cst_65 : f32 to vector<32x1xf32>
      %171 = arith.mulf %170, %169 : vector<32x1xf32>
      %172 = vector.broadcast %171 : vector<32x1xf32> to vector<32x512xf32>
      %173 = arith.cmpf ogt, %39, %172 : vector<32x512xf32>
      %cst_66 = arith.constant 1.000000e+00 : f32
      %cst_67 = arith.constant 0.000000e+00 : f32
      %174 = vector.broadcast %cst_66 : f32 to vector<32x512xf32>
      %175 = vector.broadcast %cst_67 : f32 to vector<32x512xf32>
      %176 = arith.select %173, %174, %175 : vector<32x512xi1>, vector<32x512xf32>
      %cst_68 = arith.constant dense<0.000000e+00> : vector<32xf32>
      %177 = vector.multi_reduction <add>, %176, %cst_68 [1] : vector<32x512xf32> to vector<32xf32>
      %178 = vector.shape_cast %177 : vector<32xf32> to vector<32x1xf32>
      %cst_69 = arith.constant 2.000000e+02 : f32
      %179 = vector.broadcast %cst_69 : f32 to vector<32x1xf32>
      %180 = arith.cmpf oge, %178, %179 : vector<32x1xf32>
      %181 = arith.select %180, %171, %167 : vector<32x1xi1>, vector<32x1xf32>
      %182 = arith.select %180, %168, %171 : vector<32x1xi1>, vector<32x1xf32>
      %183 = arith.addf %181, %182 : vector<32x1xf32>
      %cst_70 = arith.constant 5.000000e-01 : f32
      %184 = vector.broadcast %cst_70 : f32 to vector<32x1xf32>
      %185 = arith.mulf %184, %183 : vector<32x1xf32>
      %186 = vector.broadcast %185 : vector<32x1xf32> to vector<32x512xf32>
      %187 = arith.cmpf ogt, %39, %186 : vector<32x512xf32>
      %cst_71 = arith.constant 1.000000e+00 : f32
      %cst_72 = arith.constant 0.000000e+00 : f32
      %188 = vector.broadcast %cst_71 : f32 to vector<32x512xf32>
      %189 = vector.broadcast %cst_72 : f32 to vector<32x512xf32>
      %190 = arith.select %187, %188, %189 : vector<32x512xi1>, vector<32x512xf32>
      %cst_73 = arith.constant dense<0.000000e+00> : vector<32xf32>
      %191 = vector.multi_reduction <add>, %190, %cst_73 [1] : vector<32x512xf32> to vector<32xf32>
      %192 = vector.shape_cast %191 : vector<32xf32> to vector<32x1xf32>
      %cst_74 = arith.constant 2.000000e+02 : f32
      %193 = vector.broadcast %cst_74 : f32 to vector<32x1xf32>
      %194 = arith.cmpf oge, %192, %193 : vector<32x1xf32>
      %195 = arith.select %194, %185, %181 : vector<32x1xi1>, vector<32x1xf32>
      %196 = arith.select %194, %182, %185 : vector<32x1xi1>, vector<32x1xf32>
      %197 = arith.addf %195, %196 : vector<32x1xf32>
      %cst_75 = arith.constant 5.000000e-01 : f32
      %198 = vector.broadcast %cst_75 : f32 to vector<32x1xf32>
      %199 = arith.mulf %198, %197 : vector<32x1xf32>
      %200 = vector.broadcast %199 : vector<32x1xf32> to vector<32x512xf32>
      %201 = arith.cmpf ogt, %39, %200 : vector<32x512xf32>
      %cst_76 = arith.constant 1.000000e+00 : f32
      %cst_77 = arith.constant 0.000000e+00 : f32
      %202 = vector.broadcast %cst_76 : f32 to vector<32x512xf32>
      %203 = vector.broadcast %cst_77 : f32 to vector<32x512xf32>
      %204 = arith.select %201, %202, %203 : vector<32x512xi1>, vector<32x512xf32>
      %cst_78 = arith.constant dense<0.000000e+00> : vector<32xf32>
      %205 = vector.multi_reduction <add>, %204, %cst_78 [1] : vector<32x512xf32> to vector<32xf32>
      %206 = vector.shape_cast %205 : vector<32xf32> to vector<32x1xf32>
      %cst_79 = arith.constant 2.000000e+02 : f32
      %207 = vector.broadcast %cst_79 : f32 to vector<32x1xf32>
      %208 = arith.cmpf oge, %206, %207 : vector<32x1xf32>
      %209 = arith.select %208, %199, %195 : vector<32x1xi1>, vector<32x1xf32>
      %210 = arith.select %208, %196, %199 : vector<32x1xi1>, vector<32x1xf32>
      %211 = arith.addf %209, %210 : vector<32x1xf32>
      %cst_80 = arith.constant 5.000000e-01 : f32
      %212 = vector.broadcast %cst_80 : f32 to vector<32x1xf32>
      %213 = arith.mulf %212, %211 : vector<32x1xf32>
      %214 = vector.broadcast %213 : vector<32x1xf32> to vector<32x512xf32>
      %215 = arith.cmpf ogt, %39, %214 : vector<32x512xf32>
      %cst_81 = arith.constant 1.000000e+00 : f32
      %cst_82 = arith.constant 0.000000e+00 : f32
      %216 = vector.broadcast %cst_81 : f32 to vector<32x512xf32>
      %217 = vector.broadcast %cst_82 : f32 to vector<32x512xf32>
      %218 = arith.select %215, %216, %217 : vector<32x512xi1>, vector<32x512xf32>
      %cst_83 = arith.constant dense<0.000000e+00> : vector<32xf32>
      %219 = vector.multi_reduction <add>, %218, %cst_83 [1] : vector<32x512xf32> to vector<32xf32>
      %220 = vector.shape_cast %219 : vector<32xf32> to vector<32x1xf32>
      %cst_84 = arith.constant 2.000000e+02 : f32
      %221 = vector.broadcast %cst_84 : f32 to vector<32x1xf32>
      %222 = arith.cmpf oge, %220, %221 : vector<32x1xf32>
      %223 = arith.select %222, %213, %209 : vector<32x1xi1>, vector<32x1xf32>
      %224 = arith.select %222, %210, %213 : vector<32x1xi1>, vector<32x1xf32>
      %225 = arith.addf %223, %224 : vector<32x1xf32>
      %cst_85 = arith.constant 5.000000e-01 : f32
      %226 = vector.broadcast %cst_85 : f32 to vector<32x1xf32>
      %227 = arith.mulf %226, %225 : vector<32x1xf32>
      %228 = vector.broadcast %227 : vector<32x1xf32> to vector<32x512xf32>
      %229 = arith.cmpf ogt, %39, %228 : vector<32x512xf32>
      %cst_86 = arith.constant 1.000000e+00 : f32
      %cst_87 = arith.constant 0.000000e+00 : f32
      %230 = vector.broadcast %cst_86 : f32 to vector<32x512xf32>
      %231 = vector.broadcast %cst_87 : f32 to vector<32x512xf32>
      %232 = arith.select %229, %230, %231 : vector<32x512xi1>, vector<32x512xf32>
      %cst_88 = arith.constant dense<0.000000e+00> : vector<32xf32>
      %233 = vector.multi_reduction <add>, %232, %cst_88 [1] : vector<32x512xf32> to vector<32xf32>
      %234 = vector.shape_cast %233 : vector<32xf32> to vector<32x1xf32>
      %cst_89 = arith.constant 2.000000e+02 : f32
      %235 = vector.broadcast %cst_89 : f32 to vector<32x1xf32>
      %236 = arith.cmpf oge, %234, %235 : vector<32x1xf32>
      %237 = arith.select %236, %227, %223 : vector<32x1xi1>, vector<32x1xf32>
      %238 = arith.select %236, %224, %227 : vector<32x1xi1>, vector<32x1xf32>
      %239 = arith.addf %237, %238 : vector<32x1xf32>
      %cst_90 = arith.constant 5.000000e-01 : f32
      %240 = vector.broadcast %cst_90 : f32 to vector<32x1xf32>
      %241 = arith.mulf %240, %239 : vector<32x1xf32>
      %242 = vector.broadcast %241 : vector<32x1xf32> to vector<32x512xf32>
      %243 = arith.cmpf ogt, %39, %242 : vector<32x512xf32>
      %cst_91 = arith.constant 1.000000e+00 : f32
      %cst_92 = arith.constant 0.000000e+00 : f32
      %244 = vector.broadcast %cst_91 : f32 to vector<32x512xf32>
      %245 = vector.broadcast %cst_92 : f32 to vector<32x512xf32>
      %246 = arith.select %243, %244, %245 : vector<32x512xi1>, vector<32x512xf32>
      %cst_93 = arith.constant dense<0.000000e+00> : vector<32xf32>
      %247 = vector.multi_reduction <add>, %246, %cst_93 [1] : vector<32x512xf32> to vector<32xf32>
      %248 = vector.shape_cast %247 : vector<32xf32> to vector<32x1xf32>
      %cst_94 = arith.constant 2.000000e+02 : f32
      %249 = vector.broadcast %cst_94 : f32 to vector<32x1xf32>
      %250 = arith.cmpf oge, %248, %249 : vector<32x1xf32>
      %251 = arith.select %250, %241, %237 : vector<32x1xi1>, vector<32x1xf32>
      %252 = arith.select %250, %238, %241 : vector<32x1xi1>, vector<32x1xf32>
      %253 = arith.addf %251, %252 : vector<32x1xf32>
      %cst_95 = arith.constant 5.000000e-01 : f32
      %254 = vector.broadcast %cst_95 : f32 to vector<32x1xf32>
      %255 = arith.mulf %254, %253 : vector<32x1xf32>
      %256 = vector.broadcast %255 : vector<32x1xf32> to vector<32x512xf32>
      %257 = arith.cmpf ogt, %39, %256 : vector<32x512xf32>
      %cst_96 = arith.constant 1.000000e+00 : f32
      %cst_97 = arith.constant 0.000000e+00 : f32
      %258 = vector.broadcast %cst_96 : f32 to vector<32x512xf32>
      %259 = vector.broadcast %cst_97 : f32 to vector<32x512xf32>
      %260 = arith.select %257, %258, %259 : vector<32x512xi1>, vector<32x512xf32>
      %cst_98 = arith.constant dense<0.000000e+00> : vector<32xf32>
      %261 = vector.multi_reduction <add>, %260, %cst_98 [1] : vector<32x512xf32> to vector<32xf32>
      %262 = vector.shape_cast %261 : vector<32xf32> to vector<32x1xf32>
      %cst_99 = arith.constant 2.000000e+02 : f32
      %263 = vector.broadcast %cst_99 : f32 to vector<32x1xf32>
      %264 = arith.cmpf oge, %262, %263 : vector<32x1xf32>
      %265 = arith.select %264, %255, %251 : vector<32x1xi1>, vector<32x1xf32>
      %266 = arith.select %264, %252, %255 : vector<32x1xi1>, vector<32x1xf32>
      %267 = arith.addf %265, %266 : vector<32x1xf32>
      %cst_100 = arith.constant 5.000000e-01 : f32
      %268 = vector.broadcast %cst_100 : f32 to vector<32x1xf32>
      %269 = arith.mulf %268, %267 : vector<32x1xf32>
      %270 = vector.broadcast %269 : vector<32x1xf32> to vector<32x512xf32>
      %271 = arith.cmpf ogt, %39, %270 : vector<32x512xf32>
      %cst_101 = arith.constant 1.000000e+00 : f32
      %cst_102 = arith.constant 0.000000e+00 : f32
      %272 = vector.broadcast %cst_101 : f32 to vector<32x512xf32>
      %273 = vector.broadcast %cst_102 : f32 to vector<32x512xf32>
      %274 = arith.select %271, %272, %273 : vector<32x512xi1>, vector<32x512xf32>
      %cst_103 = arith.constant dense<0.000000e+00> : vector<32xf32>
      %275 = vector.multi_reduction <add>, %274, %cst_103 [1] : vector<32x512xf32> to vector<32xf32>
      %276 = vector.shape_cast %275 : vector<32xf32> to vector<32x1xf32>
      %cst_104 = arith.constant 2.000000e+02 : f32
      %277 = vector.broadcast %cst_104 : f32 to vector<32x1xf32>
      %278 = arith.cmpf oge, %276, %277 : vector<32x1xf32>
      %279 = arith.select %278, %269, %265 : vector<32x1xi1>, vector<32x1xf32>
      %280 = arith.select %278, %266, %269 : vector<32x1xi1>, vector<32x1xf32>
      %281 = arith.addf %279, %280 : vector<32x1xf32>
      %cst_105 = arith.constant 5.000000e-01 : f32
      %282 = vector.broadcast %cst_105 : f32 to vector<32x1xf32>
      %283 = arith.mulf %282, %281 : vector<32x1xf32>
      %284 = vector.broadcast %283 : vector<32x1xf32> to vector<32x512xf32>
      %285 = arith.cmpf ogt, %39, %284 : vector<32x512xf32>
      %cst_106 = arith.constant 1.000000e+00 : f32
      %cst_107 = arith.constant 0.000000e+00 : f32
      %286 = vector.broadcast %cst_106 : f32 to vector<32x512xf32>
      %287 = vector.broadcast %cst_107 : f32 to vector<32x512xf32>
      %288 = arith.select %285, %286, %287 : vector<32x512xi1>, vector<32x512xf32>
      %cst_108 = arith.constant dense<0.000000e+00> : vector<32xf32>
      %289 = vector.multi_reduction <add>, %288, %cst_108 [1] : vector<32x512xf32> to vector<32xf32>
      %290 = vector.shape_cast %289 : vector<32xf32> to vector<32x1xf32>
      %cst_109 = arith.constant 2.000000e+02 : f32
      %291 = vector.broadcast %cst_109 : f32 to vector<32x1xf32>
      %292 = arith.cmpf oge, %290, %291 : vector<32x1xf32>
      %293 = arith.select %292, %283, %279 : vector<32x1xi1>, vector<32x1xf32>
      %294 = arith.select %292, %280, %283 : vector<32x1xi1>, vector<32x1xf32>
      %295 = arith.addf %293, %294 : vector<32x1xf32>
      %cst_110 = arith.constant 5.000000e-01 : f32
      %296 = vector.broadcast %cst_110 : f32 to vector<32x1xf32>
      %297 = arith.mulf %296, %295 : vector<32x1xf32>
      %298 = vector.broadcast %297 : vector<32x1xf32> to vector<32x512xf32>
      %299 = arith.cmpf ogt, %39, %298 : vector<32x512xf32>
      %cst_111 = arith.constant 1.000000e+00 : f32
      %cst_112 = arith.constant 0.000000e+00 : f32
      %300 = vector.broadcast %cst_111 : f32 to vector<32x512xf32>
      %301 = vector.broadcast %cst_112 : f32 to vector<32x512xf32>
      %302 = arith.select %299, %300, %301 : vector<32x512xi1>, vector<32x512xf32>
      %cst_113 = arith.constant dense<0.000000e+00> : vector<32xf32>
      %303 = vector.multi_reduction <add>, %302, %cst_113 [1] : vector<32x512xf32> to vector<32xf32>
      %304 = vector.shape_cast %303 : vector<32xf32> to vector<32x1xf32>
      %cst_114 = arith.constant 2.000000e+02 : f32
      %305 = vector.broadcast %cst_114 : f32 to vector<32x1xf32>
      %306 = arith.cmpf oge, %304, %305 : vector<32x1xf32>
      %307 = arith.select %306, %297, %293 : vector<32x1xi1>, vector<32x1xf32>
      %308 = arith.select %306, %294, %297 : vector<32x1xi1>, vector<32x1xf32>
      %309 = arith.addf %307, %308 : vector<32x1xf32>
      %cst_115 = arith.constant 5.000000e-01 : f32
      %310 = vector.broadcast %cst_115 : f32 to vector<32x1xf32>
      %311 = arith.mulf %310, %309 : vector<32x1xf32>
      %312 = vector.broadcast %311 : vector<32x1xf32> to vector<32x512xf32>
      %313 = arith.cmpf ogt, %39, %312 : vector<32x512xf32>
      %cst_116 = arith.constant 1.000000e+00 : f32
      %cst_117 = arith.constant 0.000000e+00 : f32
      %314 = vector.broadcast %cst_116 : f32 to vector<32x512xf32>
      %315 = vector.broadcast %cst_117 : f32 to vector<32x512xf32>
      %316 = arith.select %313, %314, %315 : vector<32x512xi1>, vector<32x512xf32>
      %cst_118 = arith.constant dense<0.000000e+00> : vector<32xf32>
      %317 = vector.multi_reduction <add>, %316, %cst_118 [1] : vector<32x512xf32> to vector<32xf32>
      %318 = vector.shape_cast %317 : vector<32xf32> to vector<32x1xf32>
      %cst_119 = arith.constant 2.000000e+02 : f32
      %319 = vector.broadcast %cst_119 : f32 to vector<32x1xf32>
      %320 = arith.cmpf oge, %318, %319 : vector<32x1xf32>
      %321 = arith.select %320, %311, %307 : vector<32x1xi1>, vector<32x1xf32>
      %322 = arith.select %320, %308, %311 : vector<32x1xi1>, vector<32x1xf32>
      %323 = arith.addf %321, %322 : vector<32x1xf32>
      %cst_120 = arith.constant 5.000000e-01 : f32
      %324 = vector.broadcast %cst_120 : f32 to vector<32x1xf32>
      %325 = arith.mulf %324, %323 : vector<32x1xf32>
      %326 = vector.broadcast %325 : vector<32x1xf32> to vector<32x512xf32>
      %327 = arith.cmpf ogt, %39, %326 : vector<32x512xf32>
      %cst_121 = arith.constant 1.000000e+00 : f32
      %cst_122 = arith.constant 0.000000e+00 : f32
      %328 = vector.broadcast %cst_121 : f32 to vector<32x512xf32>
      %329 = vector.broadcast %cst_122 : f32 to vector<32x512xf32>
      %330 = arith.select %327, %328, %329 : vector<32x512xi1>, vector<32x512xf32>
      %cst_123 = arith.constant dense<0.000000e+00> : vector<32xf32>
      %331 = vector.multi_reduction <add>, %330, %cst_123 [1] : vector<32x512xf32> to vector<32xf32>
      %332 = vector.shape_cast %331 : vector<32xf32> to vector<32x1xf32>
      %cst_124 = arith.constant 2.000000e+02 : f32
      %333 = vector.broadcast %cst_124 : f32 to vector<32x1xf32>
      %334 = arith.cmpf oge, %332, %333 : vector<32x1xf32>
      %335 = arith.select %334, %325, %321 : vector<32x1xi1>, vector<32x1xf32>
      %336 = arith.select %334, %322, %325 : vector<32x1xi1>, vector<32x1xf32>
      %337 = arith.addf %335, %336 : vector<32x1xf32>
      %cst_125 = arith.constant 5.000000e-01 : f32
      %338 = vector.broadcast %cst_125 : f32 to vector<32x1xf32>
      %339 = arith.mulf %338, %337 : vector<32x1xf32>
      %340 = vector.broadcast %339 : vector<32x1xf32> to vector<32x512xf32>
      %341 = arith.cmpf ogt, %39, %340 : vector<32x512xf32>
      %cst_126 = arith.constant 1.000000e+00 : f32
      %cst_127 = arith.constant 0.000000e+00 : f32
      %342 = vector.broadcast %cst_126 : f32 to vector<32x512xf32>
      %343 = vector.broadcast %cst_127 : f32 to vector<32x512xf32>
      %344 = arith.select %341, %342, %343 : vector<32x512xi1>, vector<32x512xf32>
      %cst_128 = arith.constant dense<0.000000e+00> : vector<32xf32>
      %345 = vector.multi_reduction <add>, %344, %cst_128 [1] : vector<32x512xf32> to vector<32xf32>
      %346 = vector.shape_cast %345 : vector<32xf32> to vector<32x1xf32>
      %cst_129 = arith.constant 2.000000e+02 : f32
      %347 = vector.broadcast %cst_129 : f32 to vector<32x1xf32>
      %348 = arith.cmpf oge, %346, %347 : vector<32x1xf32>
      %349 = arith.select %348, %339, %335 : vector<32x1xi1>, vector<32x1xf32>
      %350 = arith.select %348, %336, %339 : vector<32x1xi1>, vector<32x1xf32>
      %351 = arith.addf %349, %350 : vector<32x1xf32>
      %cst_130 = arith.constant 5.000000e-01 : f32
      %352 = vector.broadcast %cst_130 : f32 to vector<32x1xf32>
      %353 = arith.mulf %352, %351 : vector<32x1xf32>
      %354 = vector.broadcast %353 : vector<32x1xf32> to vector<32x512xf32>
      %355 = arith.cmpf ogt, %39, %354 : vector<32x512xf32>
      %cst_131 = arith.constant 1.000000e+00 : f32
      %cst_132 = arith.constant 0.000000e+00 : f32
      %356 = vector.broadcast %cst_131 : f32 to vector<32x512xf32>
      %357 = vector.broadcast %cst_132 : f32 to vector<32x512xf32>
      %358 = arith.select %355, %356, %357 : vector<32x512xi1>, vector<32x512xf32>
      %cst_133 = arith.constant dense<0.000000e+00> : vector<32xf32>
      %359 = vector.multi_reduction <add>, %358, %cst_133 [1] : vector<32x512xf32> to vector<32xf32>
      %360 = vector.shape_cast %359 : vector<32xf32> to vector<32x1xf32>
      %cst_134 = arith.constant 2.000000e+02 : f32
      %361 = vector.broadcast %cst_134 : f32 to vector<32x1xf32>
      %362 = arith.cmpf oge, %360, %361 : vector<32x1xf32>
      %363 = arith.select %362, %353, %349 : vector<32x1xi1>, vector<32x1xf32>
      %364 = arith.select %362, %350, %353 : vector<32x1xi1>, vector<32x1xf32>
      %365 = arith.addf %363, %364 : vector<32x1xf32>
      %cst_135 = arith.constant 5.000000e-01 : f32
      %366 = vector.broadcast %cst_135 : f32 to vector<32x1xf32>
      %367 = arith.mulf %366, %365 : vector<32x1xf32>
      %368 = vector.broadcast %367 : vector<32x1xf32> to vector<32x512xf32>
      %369 = arith.cmpf ogt, %39, %368 : vector<32x512xf32>
      %cst_136 = arith.constant 1.000000e+00 : f32
      %cst_137 = arith.constant 0.000000e+00 : f32
      %370 = vector.broadcast %cst_136 : f32 to vector<32x512xf32>
      %371 = vector.broadcast %cst_137 : f32 to vector<32x512xf32>
      %372 = arith.select %369, %370, %371 : vector<32x512xi1>, vector<32x512xf32>
      %cst_138 = arith.constant dense<0.000000e+00> : vector<32xf32>
      %373 = vector.multi_reduction <add>, %372, %cst_138 [1] : vector<32x512xf32> to vector<32xf32>
      %374 = vector.shape_cast %373 : vector<32xf32> to vector<32x1xf32>
      %cst_139 = arith.constant 2.000000e+02 : f32
      %375 = vector.broadcast %cst_139 : f32 to vector<32x1xf32>
      %376 = arith.cmpf oge, %374, %375 : vector<32x1xf32>
      %377 = arith.select %376, %367, %363 : vector<32x1xi1>, vector<32x1xf32>
      %378 = arith.select %376, %364, %367 : vector<32x1xi1>, vector<32x1xf32>
      %379 = arith.addf %377, %378 : vector<32x1xf32>
      %cst_140 = arith.constant 5.000000e-01 : f32
      %380 = vector.broadcast %cst_140 : f32 to vector<32x1xf32>
      %381 = arith.mulf %380, %379 : vector<32x1xf32>
      %382 = vector.broadcast %381 : vector<32x1xf32> to vector<32x512xf32>
      %383 = arith.cmpf ogt, %39, %382 : vector<32x512xf32>
      %cst_141 = arith.constant 1.000000e+00 : f32
      %cst_142 = arith.constant 0.000000e+00 : f32
      %384 = vector.broadcast %cst_141 : f32 to vector<32x512xf32>
      %385 = vector.broadcast %cst_142 : f32 to vector<32x512xf32>
      %386 = arith.select %383, %384, %385 : vector<32x512xi1>, vector<32x512xf32>
      %cst_143 = arith.constant dense<0.000000e+00> : vector<32xf32>
      %387 = vector.multi_reduction <add>, %386, %cst_143 [1] : vector<32x512xf32> to vector<32xf32>
      %388 = vector.shape_cast %387 : vector<32xf32> to vector<32x1xf32>
      %cst_144 = arith.constant 2.000000e+02 : f32
      %389 = vector.broadcast %cst_144 : f32 to vector<32x1xf32>
      %390 = arith.cmpf oge, %388, %389 : vector<32x1xf32>
      %391 = arith.select %390, %381, %377 : vector<32x1xi1>, vector<32x1xf32>
      %392 = arith.select %390, %378, %381 : vector<32x1xi1>, vector<32x1xf32>
      %393 = arith.addf %391, %392 : vector<32x1xf32>
      %cst_145 = arith.constant 5.000000e-01 : f32
      %394 = vector.broadcast %cst_145 : f32 to vector<32x1xf32>
      %395 = arith.mulf %394, %393 : vector<32x1xf32>
      %396 = vector.broadcast %395 : vector<32x1xf32> to vector<32x512xf32>
      %397 = arith.cmpf ogt, %39, %396 : vector<32x512xf32>
      %cst_146 = arith.constant 1.000000e+00 : f32
      %cst_147 = arith.constant 0.000000e+00 : f32
      %398 = vector.broadcast %cst_146 : f32 to vector<32x512xf32>
      %399 = vector.broadcast %cst_147 : f32 to vector<32x512xf32>
      %400 = arith.select %397, %398, %399 : vector<32x512xi1>, vector<32x512xf32>
      %cst_148 = arith.constant dense<0.000000e+00> : vector<32xf32>
      %401 = vector.multi_reduction <add>, %400, %cst_148 [1] : vector<32x512xf32> to vector<32xf32>
      %402 = vector.shape_cast %401 : vector<32xf32> to vector<32x1xf32>
      %cst_149 = arith.constant 2.000000e+02 : f32
      %403 = vector.broadcast %cst_149 : f32 to vector<32x1xf32>
      %404 = arith.cmpf oge, %402, %403 : vector<32x1xf32>
      %405 = arith.select %404, %395, %391 : vector<32x1xi1>, vector<32x1xf32>
      %406 = vector.broadcast %405 : vector<32x1xf32> to vector<32x512xf32>
      %407 = arith.cmpf ogt, %39, %406 : vector<32x512xf32>
      %cst_150 = arith.constant 1.000000e+00 : f32
      %cst_151 = arith.constant 0.000000e+00 : f32
      %408 = vector.broadcast %cst_150 : f32 to vector<32x512xf32>
      %409 = vector.broadcast %cst_151 : f32 to vector<32x512xf32>
      %410 = arith.select %407, %408, %409 : vector<32x512xi1>, vector<32x512xf32>
      %cst_152 = arith.constant dense<0.000000e+00> : vector<32xf32>
      %411 = vector.multi_reduction <add>, %410, %cst_152 [1] : vector<32x512xf32> to vector<32xf32>
      %412 = vector.shape_cast %411 : vector<32xf32> to vector<32x1xf32>
      %cst_153 = arith.constant 0.000000e+00 : f32
      %413 = vector.broadcast %cst_153 : f32 to vector<32x512xf32>
      %414 = arith.select %407, %39, %413 : vector<32x512xi1>, vector<32x512xf32>
      %cst_154 = arith.constant dense<0.000000e+00> : vector<32xf32>
      %415 = vector.multi_reduction <add>, %414, %cst_154 [1] : vector<32x512xf32> to vector<32xf32>
      %416 = vector.shape_cast %415 : vector<32xf32> to vector<32x1xf32>
      %cst_155 = arith.constant 2.000000e+02 : f32
      %417 = vector.broadcast %cst_155 : f32 to vector<32x1xf32>
      %418 = arith.subf %417, %412 : vector<32x1xf32>
      %419 = arith.mulf %418, %405 : vector<32x1xf32>
      %420 = arith.addf %416, %419 : vector<32x1xf32>
      %421 = arith.addf %37, %420 : vector<32x1xf32>
      %cst_156 = arith.constant 1.000000e+00 : f32
      %cst_157 = arith.constant 0.000000e+00 : f32
      %422 = vector.broadcast %cst_156 : f32 to vector<32x512xf32>
      %423 = vector.broadcast %cst_157 : f32 to vector<32x512xf32>
      %424 = arith.select %30, %422, %423 : vector<32x512xi1>, vector<32x512xf32>
      %cst_158 = arith.constant dense<0.000000e+00> : vector<32xf32>
      %425 = vector.multi_reduction <add>, %424, %cst_158 [1] : vector<32x512xf32> to vector<32xf32>
      %426 = vector.shape_cast %425 : vector<32xf32> to vector<32x1xf32>
      %cst_159 = arith.constant 0.000000e+00 : f32
      %427 = vector.broadcast %cst_159 : f32 to vector<32x512xf32>
      %428 = arith.select %30, %32, %427 : vector<32x512xi1>, vector<32x512xf32>
      %cst_160 = arith.constant dense<0.000000e+00> : vector<32xf32>
      %429 = vector.multi_reduction <add>, %428, %cst_160 [1] : vector<32x512xf32> to vector<32xf32>
      %430 = vector.shape_cast %429 : vector<32xf32> to vector<32x1xf32>
      %431 = math.log %421 : vector<32x1xf32>
      %432 = arith.mulf %426, %431 : vector<32x1xf32>
      %433 = arith.subf %430, %432 : vector<32x1xf32>
      %cst_161 = arith.constant 1.000000e+00 : f32
      %434 = vector.broadcast %cst_161 : f32 to vector<32x1xf32>
      %435 = arith.maximumf %426, %434 : vector<32x1xf32>
      %436 = arith.divf %433, %435 : vector<32x1xf32>
      %437 = arith.index_cast %16 : i32 to index
      %c0_162 = arith.constant 0 : index
      %438 = vector.load %arg5[%437, %c0_162] : memref<128x1xf32, #tpu.memory_space<vmem>>, vector<32x1xf32>
      tpu.vector_store %arg5[%437, %c0_162], %436 {strides = array<i32>} : memref<128x1xf32, #tpu.memory_space<vmem>>, vector<32x1xf32>,
      %439 = arith.index_cast %16 : i32 to index
      %c0_163 = arith.constant 0 : index
      %440 = vector.load %arg6[%439, %c0_163] : memref<128x1xf32, #tpu.memory_space<vmem>>, vector<32x1xf32>
      tpu.vector_store %arg6[%439, %c0_163], %426 {strides = array<i32>} : memref<128x1xf32, #tpu.memory_space<vmem>>, vector<32x1xf32>,
    }
    %c4_i32_8 = arith.constant 4 : i32
    return
  }
  func.func @transform_0(%arg0: i32) -> (i32, i32) {
    %c0_i32 = arith.constant 0 : i32
    %c0_i32_0 = arith.constant 0 : i32
    return %arg0, %c0_i32 : i32, i32
  }
  func.func @transform_1(%arg0: i32) -> (i32, i32) {
    %c0_i32 = arith.constant 0 : i32
    %c0_i32_0 = arith.constant 0 : i32
    %c0_i32_1 = arith.constant 0 : i32
    return %c0_i32, %c0_i32_0 : i32, i32
  }
  func.func @transform_2(%arg0: i32) -> (i32, i32) {
    %c0_i32 = arith.constant 0 : i32
    %c0_i32_0 = arith.constant 0 : i32
    return %arg0, %c0_i32 : i32, i32
  }
  func.func @transform_3(%arg0: i32) -> (i32, i32) {
    %c0_i32 = arith.constant 0 : i32
    %c0_i32_0 = arith.constant 0 : i32
    %c0_i32_1 = arith.constant 0 : i32
    return %c0_i32, %c0_i32_0 : i32, i32
  }
  func.func @transform_4(%arg0: i32) -> (i32, i32) {
    %c0_i32 = arith.constant 0 : i32
    %c0_i32_0 = arith.constant 0 : i32
    return %arg0, %c0_i32 : i32, i32
  }
  func.func @transform_5(%arg0: i32) -> (i32, i32) {
    %c0_i32 = arith.constant 0 : i32
    %c0_i32_0 = arith.constant 0 : i32
    return %arg0, %c0_i32 : i32, i32
  }
}

</mosaic_0001>

<llo_original>
// kernel: supcon_topk_loss.1
$region0: #{supcon_topk_loss.1}
  #allocation0 [shape = 'u32[]', space=smem, size = 0x4, offset = 0x4, fixed_abs, tag = 'smem constant byte address 0x4 - core index']
  #allocation1 [shape = 'u32[144,128]{1,0:T(1,128)}', space=vmem, size = 0x12000, scoped, tag = 'internal scratch']
  #allocation2 [shape = 'f32[128,512]{1,0:T(8,128)}', space=vmem, size = 0x40000, scoped, tag = 'scratch operand']
  %s0 = inlined_call_operand.vmem [shape: f32[512,32], index: 0, kind: input, shape index: {}, may-alias: {0,1}]
  %s1 = inlined_call_operand.vmem [shape: f32[512,32], index: 1, kind: input, shape index: {}, may-alias: {0,1}]
  %s2 = inlined_call_operand.vmem [shape: s32[512,1], index: 2, kind: input, shape index: {}]
  %s3 = inlined_call_operand.vmem [shape: s32[1,512], index: 3, kind: input, shape index: {}]
  %s4 = inlined_call_operand.vmem [shape: f32[512,1], index: 4, kind: output, shape index: {0}]
  %s5 = inlined_call_operand.vmem [shape: f32[512,1], index: 5, kind: output, shape index: {1}]
  %6 = xla_tuple %s4, %s5
  %s7 = sld [smem:[#allocation0]]
  $region64: #{supcon_topk_loss.1} parent=0
    _
  %s9 = ssub.s32 1, %s7
  %s10 = scalar_select 0, %s9, %s7
  loop: start=0, step=1, limit=6
  $region2: #{supcon_topk_loss.1} parent=0 // loop_pre_header
    _
  $region3: #{supcon_topk_loss.1} parent=0 // loop_header
    %s12 = sphi 0, %s16
    %p13 = scmp.ge.s32.totalorder %s12, 6
    %s22 = sphi 0, %s24
    %s25 = sphi 0, %s22
    %s26 = sphi 0, %s25
    %s42 = sphi 0, %s26
    %s46 = sphi 0, %s46
    %s48 = sphi 0, %s46
    %s49 = sphi 0, %s48
    %s63 = sphi 0, %s49
    %s69 = sphi 0, %s71
    %s72 = sphi 0, %s69
    %s73 = sphi 0, %s72
    %s89 = sphi 0, %s73
    %s93 = sphi 0, %s93
    %s95 = sphi 0, %s93
    %s96 = sphi 0, %s95
    %s110 = sphi 0, %s96
    %s116 = sphi 0, %s118
    %s119 = sphi 0, %s116
    %s120 = sphi 0, %s119
    %s136 = sphi 0, %s120
    %s142 = sphi 0, %s144
    %s145 = sphi 0, %s142
    %s146 = sphi 0, %s145
    %s162 = sphi 0, %s146
  $region4: #{supcon_topk_loss.1} parent=0 // loop_header_branch
    %15 = sbr.rel (%p13) target = $region8
  $region5: #{supcon_topk_loss.1} parent=0 // loop_body
    %s17 = ssub.s32 %s12, 1
    %s18 = ssub.s32 %s12, 2
    %s19 = sadd.s32 %s12, 1
    %s20 = ssub.s32 %s12, %s19
    %p21 = scmp.eq.s32.totalorder %s20, 0
    %s23 = sadd.s32 %s22, 1
    %s24 = scalar_select %p21, %s22, %s23
    %p27 = pneg %p21
    %p28 = scmp.eq.s32.totalorder %s12, 3
    %p29 = por %p27, %p28
    %p30 = scmp.ne.s32.totalorder %s22, %s25
    %p31 = scmp.eq.s32.totalorder %s12, 0
    %p32 = por %p30, %p31
    %p33 = scmp.ne.s32.totalorder %s22, %s25
    %p34 = scmp.eq.s32.totalorder %s17, 3
    %p35 = por %p33, %p34
    %p36 = scmp.ne.s32.totalorder %s25, %s26
    %p37 = scmp.eq.s32.totalorder %s17, 0
    %p38 = por %p36, %p37
    %p39 = scmp.ne.s32.totalorder %s25, %s26
    %p40 = scmp.eq.s32.totalorder %s18, 3
    %p41 = por %p39, %p40
    %p43 = scmp.ne.s32.totalorder %s26, %s42
    %p44 = scmp.eq.s32.totalorder %s18, 0
    %p45 = por %p43, %p44
    %s47 = sadd.s32 %s46, 1
    %p50 = scmp.eq.s32.totalorder %s12, 3
    %p51 = scmp.ne.s32.totalorder %s46, %s48
    %p52 = scmp.eq.s32.totalorder %s12, 0
    %p53 = por %p51, %p52
    %p54 = scmp.ne.s32.totalorder %s46, %s48
    %p55 = scmp.eq.s32.totalorder %s17, 3
    %p56 = por %p54, %p55
    %p57 = scmp.ne.s32.totalorder %s48, %s49
    %p58 = scmp.eq.s32.totalorder %s17, 0
    %p59 = por %p57, %p58
    %p60 = scmp.ne.s32.totalorder %s48, %s49
    %p61 = scmp.eq.s32.totalorder %s18, 3
    %p62 = por %p60, %p61
    %p64 = scmp.ne.s32.totalorder %s49, %s63
    %p65 = scmp.eq.s32.totalorder %s18, 0
    %p66 = por %p64, %p65
    %s67 = ssub.s32 %s12, %s19
    %p68 = scmp.eq.s32.totalorder %s67, 0
    %s70 = sadd.s32 %s69, 1
    %s71 = scalar_select %p68, %s69, %s70
    %p74 = pneg %p68
    %p75 = scmp.eq.s32.totalorder %s12, 3
    %p76 = por %p74, %p75
    %p77 = scmp.ne.s32.totalorder %s69, %s72
    %p78 = scmp.eq.s32.totalorder %s12, 0
    %p79 = por %p77, %p78
    %p80 = scmp.ne.s32.totalorder %s69, %s72
    %p81 = scmp.eq.s32.totalorder %s17, 3
    %p82 = por %p80, %p81
    %p83 = scmp.ne.s32.totalorder %s72, %s73
    %p84 = scmp.eq.s32.totalorder %s17, 0
    %p85 = por %p83, %p84
    %p86 = scmp.ne.s32.totalorder %s72, %s73
    %p87 = scmp.eq.s32.totalorder %s18, 3
    %p88 = por %p86, %p87
    %p90 = scmp.ne.s32.totalorder %s73, %s89
    %p91 = scmp.eq.s32.totalorder %s18, 0
    %p92 = por %p90, %p91
    %s94 = sadd.s32 %s93, 1
    %p97 = scmp.eq.s32.totalorder %s12, 3
    %p98 = scmp.ne.s32.totalorder %s93, %s95
    %p99 = scmp.eq.s32.totalorder %s12, 0
    %p100 = por %p98, %p99
    %p101 = scmp.ne.s32.totalorder %s93, %s95
    %p102 = scmp.eq.s32.totalorder %s17, 3
    %p103 = por %p101, %p102
    %p104 = scmp.ne.s32.totalorder %s95, %s96
    %p105 = scmp.eq.s32.totalorder %s17, 0
    %p106 = por %p104, %p105
    %p107 = scmp.ne.s32.totalorder %s95, %s96
    %p108 = scmp.eq.s32.totalorder %s18, 3
    %p109 = por %p107, %p108
    %p111 = scmp.ne.s32.totalorder %s96, %s110
    %p112 = scmp.eq.s32.totalorder %s18, 0
    %p113 = por %p111, %p112
    %s114 = ssub.s32 %s12, %s19
    %p115 = scmp.eq.s32.totalorder %s114, 0
    %s117 = sadd.s32 %s116, 1
    %s118 = scalar_select %p115, %s116, %s117
    %p121 = pneg %p115
    %p122 = scmp.eq.s32.totalorder %s12, 3
    %p123 = por %p121, %p122
    %p124 = scmp.ne.s32.totalorder %s116, %s119
    %p125 = scmp.eq.s32.totalorder %s12, 0
    %p126 = por %p124, %p125
    %p127 = scmp.ne.s32.totalorder %s116, %s119
    %p128 = scmp.eq.s32.totalorder %s17, 3
    %p129 = por %p127, %p128
    %p130 = scmp.ne.s32.totalorder %s119, %s120
    %p131 = scmp.eq.s32.totalorder %s17, 0
    %p132 = por %p130, %p131
    %p133 = scmp.ne.s32.totalorder %s119, %s120
    %p134 = scmp.eq.s32.totalorder %s18, 3
    %p135 = por %p133, %p134
    %p137 = scmp.ne.s32.totalorder %s120, %s136
    %p138 = scmp.eq.s32.totalorder %s18, 0
    %p139 = por %p137, %p138
    %s140 = ssub.s32 %s12, %s19
    %p141 = scmp.eq.s32.totalorder %s140, 0
    %s143 = sadd.s32 %s142, 1
    %s144 = scalar_select %p141, %s142, %s143
    %p147 = pneg %p141
    %p148 = scmp.eq.s32.totalorder %s12, 3
    %p149 = por %p147, %p148
    %p150 = scmp.ne.s32.totalorder %s142, %s145
    %p151 = scmp.eq.s32.totalorder %s12, 0
    %p152 = por %p150, %p151
    %p153 = scmp.ne.s32.totalorder %s142, %s145
    %p154 = scmp.eq.s32.totalorder %s17, 3
    %p155 = por %p153, %p154
    %p156 = scmp.ne.s32.totalorder %s145, %s146
    %p157 = scmp.eq.s32.totalorder %s17, 0
    %p158 = por %p156, %p157
    %p159 = scmp.ne.s32.totalorder %s145, %s146
    %p160 = scmp.eq.s32.totalorder %s18, 3
    %p161 = por %p159, %p160
    %p163 = scmp.ne.s32.totalorder %s146, %s162
    %p164 = scmp.eq.s32.totalorder %s18, 0
    %p165 = por %p163, %p164
    %p166 = scmp.le.s32.totalorder 1, %s12
    %p167 = scmp.lt.s32.totalorder %s12, 5
    %p168 = pnand %p166, %p167
    %p169 = pneg %p168
    // Predicated region
    $region9: #{supcon_topk_loss.1} parent=5 // pred_check
      _
    $region10: #{supcon_topk_loss.1} parent=5 // pred_check_branch
      %171 = sbr.rel (%p168) target = $region12
    $region11: #{supcon_topk_loss.1} parent=5 // pred_region
      %s172 = ssub.s32 %s12, 1
      // Predicated region
      $region13: #{supcon_topk_loss.1} parent=11 // pred_check
        %p173 = pneg %p59
      $region14: #{supcon_topk_loss.1} parent=11 // pred_check_branch
        %175 = sbr.rel (%p173) target = $region16
      $region15: #{supcon_topk_loss.1} parent=11 // pred_region
        _
      $region16: #{supcon_topk_loss.1} parent=11 // pred_fallthru
        _
      // Predicated region
      $region17: #{supcon_topk_loss.1} parent=11 // pred_check
        %p176 = pneg %p106
      $region18: #{supcon_topk_loss.1} parent=11 // pred_check_branch
        %178 = sbr.rel (%p176) target = $region20
      $region19: #{supcon_topk_loss.1} parent=11 // pred_region
        _
      $region20: #{supcon_topk_loss.1} parent=11 // pred_fallthru
        _
    $region12: #{supcon_topk_loss.1} parent=5 // pred_fallthru
      _
    %p179 = scmp.lt.s32.totalorder %s12, 4
    // Predicated region
    $region21: #{supcon_topk_loss.1} parent=5 // pred_check
      %p180 = pneg %p179
    $region22: #{supcon_topk_loss.1} parent=5 // pred_check_branch
      %182 = sbr.rel (%p180) target = $region24
    $region23: #{supcon_topk_loss.1} parent=5 // pred_region
      // Predicated region
      $region25: #{supcon_topk_loss.1} parent=23 // pred_check
        %p183 = pneg %p32
      $region26: #{supcon_topk_loss.1} parent=23 // pred_check_branch
        %185 = sbr.rel (%p183) target = $region28
      $region27: #{supcon_topk_loss.1} parent=23 // pred_region
        %s186 = smul.u32 16, %s12
        %p187 = scmp.lt.s32.totalorder %s186, 63
        %s188 = scalar_select %p187, %s186, 63
        %s189 = smul.addr %s188, 8
        %s190 = scalar_lea.vmem %s0, %s189
        %s191 = smul.u32 16, %s12
      $region28: #{supcon_topk_loss.1} parent=23 // pred_fallthru
        _
      // Predicated region
      $region29: #{supcon_topk_loss.1} parent=23 // pred_check
        %p192 = pneg %p79
      $region30: #{supcon_topk_loss.1} parent=23 // pred_check_branch
        %194 = sbr.rel (%p192) target = $region32
      $region31: #{supcon_topk_loss.1} parent=23 // pred_region
        %s195 = smul.u32 16, %s12
        %p196 = scmp.lt.s32.totalorder %s195, 63
        %s197 = scalar_select %p196, %s195, 63
        %s198 = smul.addr %s197, 8
        %s199 = scalar_lea.vmem %s2, %s198
        %s200 = smul.u32 16, %s12
      $region32: #{supcon_topk_loss.1} parent=23 // pred_fallthru
        _
    $region24: #{supcon_topk_loss.1} parent=5 // pred_fallthru
      _
    %p201 = scmp.le.s32.totalorder 1, %s12
    %p202 = scmp.lt.s32.totalorder %s12, 5
    %p203 = pnand %p201, %p202
    %p204 = pneg %p203
    // Predicated region
    $region33: #{supcon_topk_loss.1} parent=5 // pred_check
      _
    $region34: #{supcon_topk_loss.1} parent=5 // pred_check_branch
      %206 = sbr.rel (%p203) target = $region36
    $region35: #{supcon_topk_loss.1} parent=5 // pred_region
      %s207 = ssub.s32 %s12, 1
      %s208 = smul.u32 16, %s17
      %p209 = scmp.lt.s32.totalorder %s208, 63
      %s210 = scalar_select %p209, %s208, 63
      %s211 = smul.addr %s210, 8
      %s212 = scalar_lea.vmem %s0, %s211
      %p213 = pneg %p38
      %p214 = pneg %p35
      %p215 = pneg %p59
      %p216 = pneg %p56
      %s217 = smul.u32 16, %s17
      %p218 = scmp.lt.s32.totalorder %s217, 63
      %s219 = scalar_select %p218, %s217, 63
      %s220 = smul.addr %s219, 8
      %s221 = scalar_lea.vmem %s2, %s220
      %p222 = pneg %p85
      %p223 = pneg %p82
      %p224 = pneg %p106
      %p225 = pneg %p103
      %p226 = pneg %p132
      %p227 = pneg %p129
      %s228 = smul.u32 16, %s17
      %p229 = scmp.lt.s32.totalorder %s228, 63
      %s230 = scalar_select %p229, %s228, 63
      %s231 = smul.addr %s230, 8
      %s232 = scalar_lea.vmem %s4, %s231
      %p233 = pneg %p158
      %p234 = pneg %p155
      %s235 = smul.u32 16, %s17
      %p236 = scmp.lt.s32.totalorder %s235, 63
      %s237 = scalar_select %p236, %s235, 63
      %s238 = smul.addr %s237, 8
      %s239 = scalar_lea.vmem %s5, %s238
      %s240 = smul.u32 16, %s17
      %p241 = scmp.lt.s32.totalorder %s240, 63
      %s242 = scalar_select %p241, %s240, 63
      %s243 = smul.addr %s242, 8
      %s244 = scalar_lea.vmem %s0, %s243
      %s245 = smul.u32 16, %s17
      %s246 = smul.u32 16, %s17
      %p247 = scmp.lt.s32.totalorder %s246, 63
      %s248 = scalar_select %p247, %s246, 63
      %s249 = smul.addr %s248, 8
      %s250 = scalar_lea.vmem %s2, %s249
      %s251 = smul.u32 16, %s17
      %s252 = smul.u32 16, %s17
      %p253 = scmp.lt.s32.totalorder %s252, 63
      %s254 = scalar_select %p253, %s252, 63
      %s255 = smul.addr %s254, 8
      %s256 = scalar_lea.vmem %s4, %s255
      %s257 = smul.u32 16, %s17
      %s258 = smul.u32 16, %s17
      %p259 = scmp.lt.s32.totalorder %s258, 63
      %s260 = scalar_select %p259, %s258, 63
      %s261 = smul.addr %s260, 8
      %s262 = scalar_lea.vmem %s5, %s261
      %s263 = smul.u32 16, %s17
      %v264 = vld [vmem:[%s244] sm:$0xff]
      %v265 = vld [vmem:[%s244 + $0x8] sm:$0xff]
      %v266 = vld [vmem:[%s244 + $0x10] sm:$0xff]
      %v267 = vld [vmem:[%s244 + $0x18] sm:$0xff]
      %v268 = vld [vmem:[%s244 + $0x20] sm:$0xff]
      %v269 = vld [vmem:[%s244 + $0x28] sm:$0xff]
      %v270 = vld [vmem:[%s244 + $0x30] sm:$0xff]
      %v271 = vld [vmem:[%s244 + $0x38] sm:$0xff]
      %v272 = vld [vmem:[%s244 + $0x40] sm:$0xff]
      %v273 = vld [vmem:[%s244 + $0x48] sm:$0xff]
      %v274 = vld [vmem:[%s244 + $0x50] sm:$0xff]
      %v275 = vld [vmem:[%s244 + $0x58] sm:$0xff]
      %v276 = vld [vmem:[%s244 + $0x60] sm:$0xff]
      %v277 = vld [vmem:[%s244 + $0x68] sm:$0xff]
      %v278 = vld [vmem:[%s244 + $0x70] sm:$0xff]
      %v279 = vld [vmem:[%s244 + $0x78] sm:$0xff]
      %v280 = vld [vmem:[%s1] sm:$0xff]
      %v281 = vld [vmem:[%s1 + $0x8] sm:$0xff]
      %v282 = vld [vmem:[%s1 + $0x10] sm:$0xff]
      %v283 = vld [vmem:[%s1 + $0x18] sm:$0xff]
      %v284 = vld [vmem:[%s1 + $0x20] sm:$0xff]
      %v285 = vld [vmem:[%s1 + $0x28] sm:$0xff]
      %v286 = vld [vmem:[%s1 + $0x30] sm:$0xff]
      %v287 = vld [vmem:[%s1 + $0x38] sm:$0xff]
      %v288 = vld [vmem:[%s1 + $0x40] sm:$0xff]
      %v289 = vld [vmem:[%s1 + $0x48] sm:$0xff]
      %v290 = vld [vmem:[%s1 + $0x50] sm:$0xff]
      %v291 = vld [vmem:[%s1 + $0x58] sm:$0xff]
      %v292 = vld [vmem:[%s1 + $0x60] sm:$0xff]
      %v293 = vld [vmem:[%s1 + $0x68] sm:$0xff]
      %v294 = vld [vmem:[%s1 + $0x70] sm:$0xff]
      %v295 = vld [vmem:[%s1 + $0x78] sm:$0xff]
      %v296 = vld [vmem:[%s1 + $0x80] sm:$0xff]
      %v297 = vld [vmem:[%s1 + $0x88] sm:$0xff]
      %v298 = vld [vmem:[%s1 + $0x90] sm:$0xff]
      %v299 = vld [vmem:[%s1 + $0x98] sm:$0xff]
      %v300 = vld [vmem:[%s1 + $0xa0] sm:$0xff]
      %v301 = vld [vmem:[%s1 + $0xa8] sm:$0xff]
      %v302 = vld [vmem:[%s1 + $0xb0] sm:$0xff]
      %v303 = vld [vmem:[%s1 + $0xb8] sm:$0xff]
      %v304 = vld [vmem:[%s1 + $0xc0] sm:$0xff]
      %v305 = vld [vmem:[%s1 + $0xc8] sm:$0xff]
      %v306 = vld [vmem:[%s1 + $0xd0] sm:$0xff]
      %v307 = vld [vmem:[%s1 + $0xd8] sm:$0xff]
      %v308 = vld [vmem:[%s1 + $0xe0] sm:$0xff]
      %v309 = vld [vmem:[%s1 + $0xe8] sm:$0xff]
      %v310 = vld [vmem:[%s1 + $0xf0] sm:$0xff]
      %v311 = vld [vmem:[%s1 + $0xf8] sm:$0xff]
      %v312 = vld [vmem:[%s1 + $0x100] sm:$0xff]
      %v313 = vld [vmem:[%s1 + $0x108] sm:$0xff]
      %v314 = vld [vmem:[%s1 + $0x110] sm:$0xff]
      %v315 = vld [vmem:[%s1 + $0x118] sm:$0xff]
      %v316 = vld [vmem:[%s1 + $0x120] sm:$0xff]
      %v317 = vld [vmem:[%s1 + $0x128] sm:$0xff]
      %v318 = vld [vmem:[%s1 + $0x130] sm:$0xff]
      %v319 = vld [vmem:[%s1 + $0x138] sm:$0xff]
      %v320 = vld [vmem:[%s1 + $0x140] sm:$0xff]
      %v321 = vld [vmem:[%s1 + $0x148] sm:$0xff]
      %v322 = vld [vmem:[%s1 + $0x150] sm:$0xff]
      %v323 = vld [vmem:[%s1 + $0x158] sm:$0xff]
      %v324 = vld [vmem:[%s1 + $0x160] sm:$0xff]
      %v325 = vld [vmem:[%s1 + $0x168] sm:$0xff]
      %v326 = vld [vmem:[%s1 + $0x170] sm:$0xff]
      %v327 = vld [vmem:[%s1 + $0x178] sm:$0xff]
      %v328 = vld [vmem:[%s1 + $0x180] sm:$0xff]
      %v329 = vld [vmem:[%s1 + $0x188] sm:$0xff]
      %v330 = vld [vmem:[%s1 + $0x190] sm:$0xff]
      %v331 = vld [vmem:[%s1 + $0x198] sm:$0xff]
      %v332 = vld [vmem:[%s1 + $0x1a0] sm:$0xff]
      %v333 = vld [vmem:[%s1 + $0x1a8] sm:$0xff]
      %v334 = vld [vmem:[%s1 + $0x1b0] sm:$0xff]
      %v335 = vld [vmem:[%s1 + $0x1b8] sm:$0xff]
      %v336 = vld [vmem:[%s1 + $0x1c0] sm:$0xff]
      %v337 = vld [vmem:[%s1 + $0x1c8] sm:$0xff]
      %v338 = vld [vmem:[%s1 + $0x1d0] sm:$0xff]
      %v339 = vld [vmem:[%s1 + $0x1d8] sm:$0xff]
      %v340 = vld [vmem:[%s1 + $0x1e0] sm:$0xff]
      %v341 = vld [vmem:[%s1 + $0x1e8] sm:$0xff]
      %v342 = vld [vmem:[%s1 + $0x1f0] sm:$0xff]
      %v343 = vld [vmem:[%s1 + $0x1f8] sm:$0xff]
      %vm344 = vcmask 261120
      %v346 = vsel %vm344, %v264, 0
      %v349 = vsel %vm344, %v265, 0
      %v352 = vsel %vm344, %v266, 0
      %v355 = vsel %vm344, %v267, 0
      %v358 = vsel %vm344, %v268, 0
      %v361 = vsel %vm344, %v269, 0
      %v364 = vsel %vm344, %v270, 0
      %v367 = vsel %vm344, %v271, 0
      %v370 = vsel %vm344, %v272, 0
      %v373 = vsel %vm344, %v273, 0
      %v376 = vsel %vm344, %v274, 0
      %v379 = vsel %vm344, %v275, 0
      %v382 = vsel %vm344, %v276, 0
      %v385 = vsel %vm344, %v277, 0
      %v388 = vsel %vm344, %v278, 0
      %v391 = vsel %vm344, %v279, 0
      %v394 = vsel %vm344, %v280, 0
      %v397 = vsel %vm344, %v281, 0
      %v400 = vsel %vm344, %v282, 0
      %v403 = vsel %vm344, %v283, 0
      %v406 = vsel %vm344, %v284, 0
      %v409 = vsel %vm344, %v285, 0
      %v412 = vsel %vm344, %v286, 0
      %v415 = vsel %vm344, %v287, 0
      %v418 = vsel %vm344, %v288, 0
      %v421 = vsel %vm344, %v289, 0
      %v424 = vsel %vm344, %v290, 0
      %v427 = vsel %vm344, %v291, 0
      %v430 = vsel %vm344, %v292, 0
      %v433 = vsel %vm344, %v293, 0
      %v436 = vsel %vm344, %v294, 0
      %v439 = vsel %vm344, %v295, 0
      %v442 = vsel %vm344, %v296, 0
      %v445 = vsel %vm344, %v297, 0
      %v448 = vsel %vm344, %v298, 0
      %v451 = vsel %vm344, %v299, 0
      %v454 = vsel %vm344, %v300, 0
      %v457 = vsel %vm344, %v301, 0
      %v460 = vsel %vm344, %v302, 0
      %v463 = vsel %vm344, %v303, 0
      %v466 = vsel %vm344, %v304, 0
      %v469 = vsel %vm344, %v305, 0
      %v472 = vsel %vm344, %v306, 0
      %v475 = vsel %vm344, %v307, 0
      %v478 = vsel %vm344, %v308, 0
      %v481 = vsel %vm344, %v309, 0
      %v484 = vsel %vm344, %v310, 0
      %v487 = vsel %vm344, %v311, 0
      %v490 = vsel %vm344, %v312, 0
      %v493 = vsel %vm344, %v313, 0
      %v496 = vsel %vm344, %v314, 0
      %v499 = vsel %vm344, %v315, 0
      %v502 = vsel %vm344, %v316, 0
      %v505 = vsel %vm344, %v317, 0
      %v508 = vsel %vm344, %v318, 0
      %v511 = vsel %vm344, %v319, 0
      %v514 = vsel %vm344, %v320, 0
      %v517 = vsel %vm344, %v321, 0
      %v520 = vsel %vm344, %v322, 0
      %v523 = vsel %vm344, %v323, 0
      %v526 = vsel %vm344, %v324, 0
      %v529 = vsel %vm344, %v325, 0
      %v532 = vsel %vm344, %v326, 0
      %v535 = vsel %vm344, %v327, 0
      %v538 = vsel %vm344, %v328, 0
      %v541 = vsel %vm344, %v329, 0
      %v544 = vsel %vm344, %v330, 0
      %v547 = vsel %vm344, %v331, 0
      %v550 = vsel %vm344, %v332, 0
      %v553 = vsel %vm344, %v333, 0
      %v556 = vsel %vm344, %v334, 0
      %v559 = vsel %vm344, %v335, 0
      %v562 = vsel %vm344, %v336, 0
      %v565 = vsel %vm344, %v337, 0
      %v568 = vsel %vm344, %v338, 0
      %v571 = vsel %vm344, %v339, 0
      %v574 = vsel %vm344, %v340, 0
      %v577 = vsel %vm344, %v341, 0
      %v580 = vsel %vm344, %v342, 0
      %v583 = vsel %vm344, %v343, 0
      %585 = vmatprep.subr.mxu0 0.0
      %586 = vmatpush1.xpose.msra.mxu0 %v394
      %587 = vmatprep.subr.mxu0 0.0
      %588 = vmatpush1.xpose.msra.mxu0 %v397
      %589 = vmatprep.subr.mxu0 0.0
      %590 = vmatpush1.xpose.msra.mxu0 %v400
      %591 = vmatprep.subr.mxu0 0.0
      %592 = vmatpush1.xpose.msra.mxu0 %v403
      %593 = vmatprep.subr.mxu0 0.0
      %594 = vmatpush1.xpose.msra.mxu0 %v406
      %595 = vmatprep.subr.mxu0 0.0
      %596 = vmatpush1.xpose.msra.mxu0 %v409
      %597 = vmatprep.subr.mxu0 0.0
      %598 = vmatpush1.xpose.msra.mxu0 %v412
      %599 = vmatprep.subr.mxu0 0.0
      %600 = vmatpush1.xpose.msra.mxu0 %v415
      %601 = vmatprep.subr.mxu0 0.0
      %602 = vmatpush1.xpose.msra.mxu0 %v418
      %603 = vmatprep.subr.mxu0 0.0
      %604 = vmatpush1.xpose.msra.mxu0 %v421
      %605 = vmatprep.subr.mxu0 0.0
      %606 = vmatpush1.xpose.msra.mxu0 %v424
      %607 = vmatprep.subr.mxu0 0.0
      %608 = vmatpush1.xpose.msra.mxu0 %v427
      %609 = vmatprep.subr.mxu0 0.0
      %610 = vmatpush1.xpose.msra.mxu0 %v430
      %611 = vmatprep.subr.mxu0 0.0
      %612 = vmatpush1.xpose.msra.mxu0 %v433
      %613 = vmatprep.subr.mxu0 0.0
      %614 = vmatpush1.xpose.msra.mxu0 %v436
      %615 = vmatprep.subr.mxu0 0.0
      %616 = vmatpush1.xpose.msra.mxu0 %v439
      %617 = vmatprep.subr.mxu0 0.0
      %618 = vmatpush1.xpose.msra.mxu0 %v442
      %619 = vmatprep.subr.mxu0 0.0
      %620 = vmatpush1.xpose.msra.mxu0 %v445
      %621 = vmatprep.subr.mxu0 0.0
      %622 = vmatpush1.xpose.msra.mxu0 %v448
      %623 = vmatprep.subr.mxu0 0.0
      %624 = vmatpush1.xpose.msra.mxu0 %v451
      %625 = vmatprep.subr.mxu0 0.0
      %626 = vmatpush1.xpose.msra.mxu0 %v454
      %627 = vmatprep.subr.mxu0 0.0
      %628 = vmatpush1.xpose.msra.mxu0 %v457
      %629 = vmatprep.subr.mxu0 0.0
      %630 = vmatpush1.xpose.msra.mxu0 %v460
      %631 = vmatprep.subr.mxu0 0.0
      %632 = vmatpush1.xpose.msra.mxu0 %v463
      %633 = vmatprep.subr.mxu0 0.0
      %634 = vmatpush1.xpose.msra.mxu0 %v466
      %635 = vmatprep.subr.mxu0 0.0
      %636 = vmatpush1.xpose.msra.mxu0 %v469
      %637 = vmatprep.subr.mxu0 0.0
      %638 = vmatpush1.xpose.msra.mxu0 %v472
      %639 = vmatprep.subr.mxu0 0.0
      %640 = vmatpush1.xpose.msra.mxu0 %v475
      %641 = vmatprep.subr.mxu0 0.0
      %642 = vmatpush1.xpose.msra.mxu0 %v478
      %643 = vmatprep.subr.mxu0 0.0
      %644 = vmatpush1.xpose.msra.mxu0 %v481
      %645 = vmatprep.subr.mxu0 0.0
      %646 = vmatpush1.xpose.msra.mxu0 %v484
      %647 = vmatprep.subr.mxu0 0.0
      %648 = vmatpush1.xpose.msra.mxu0 %v487
      %649 = vmatprep.mubr.f32.mxu0 0.0
      %650 = vmatmul.mubr.f32.gmra.mrb[0].mxu0 %v346
      %v651 = vpop.f32.mrb[0].mxu0
      %v652 = vadd.f32 0.0, %v651
      %v653 = vpop.f32.mrb[0].mxu0
      %v654 = vadd.f32 0.0, %v653
      %655 = vmatprep.mubr.f32.mxu0 0.0
      %656 = vmatmul.mubr.f32.gmra.mrb[0].mxu0 %v349
      %v657 = vpop.f32.mrb[0].mxu0
      %v658 = vadd.f32 0.0, %v657
      %v659 = vpop.f32.mrb[0].mxu0
      %v660 = vadd.f32 0.0, %v659
      %661 = vmatprep.mubr.f32.mxu0 0.0
      %662 = vmatmul.mubr.f32.gmra.mrb[0].mxu0 %v352
      %v663 = vpop.f32.mrb[0].mxu0
      %v664 = vadd.f32 0.0, %v663
      %v665 = vpop.f32.mrb[0].mxu0
      %v666 = vadd.f32 0.0, %v665
      %667 = vmatprep.mubr.f32.mxu0 0.0
      %668 = vmatmul.mubr.f32.gmra.mrb[0].mxu0 %v355
      %v669 = vpop.f32.mrb[0].mxu0
      %v670 = vadd.f32 0.0, %v669
      %v671 = vpop.f32.mrb[0].mxu0
      %v672 = vadd.f32 0.0, %v671
      %673 = vmatprep.mubr.f32.mxu0 0.0
      %674 = vmatmul.mubr.f32.gmra.mrb[0].mxu0 %v358
      %v675 = vpop.f32.mrb[0].mxu0
      %v676 = vadd.f32 0.0, %v675
      %v677 = vpop.f32.mrb[0].mxu0
      %v678 = vadd.f32 0.0, %v677
      %679 = vmatprep.mubr.f32.mxu0 0.0
      %680 = vmatmul.mubr.f32.gmra.mrb[0].mxu0 %v361
      %v681 = vpop.f32.mrb[0].mxu0
      %v682 = vadd.f32 0.0, %v681
      %v683 = vpop.f32.mrb[0].mxu0
      %v684 = vadd.f32 0.0, %v683
      %685 = vmatprep.mubr.f32.mxu0 0.0
      %686 = vmatmul.mubr.f32.gmra.mrb[0].mxu0 %v364
      %v687 = vpop.f32.mrb[0].mxu0
      %v688 = vadd.f32 0.0, %v687
      %v689 = vpop.f32.mrb[0].mxu0
      %v690 = vadd.f32 0.0, %v689
      %691 = vmatprep.mubr.f32.mxu0 0.0
      %692 = vmatmul.mubr.f32.gmra.mrb[0].mxu0 %v367
      %v693 = vpop.f32.mrb[0].mxu0
      %v694 = vadd.f32 0.0, %v693
      %v695 = vpop.f32.mrb[0].mxu0
      %v696 = vadd.f32 0.0, %v695
      %697 = vmatprep.mubr.f32.mxu0 0.0
      %698 = vmatmul.mubr.f32.gmra.mrb[0].mxu0 %v370
      %v699 = vpop.f32.mrb[0].mxu0
      %v700 = vadd.f32 0.0, %v699
      %v701 = vpop.f32.mrb[0].mxu0
      %v702 = vadd.f32 0.0, %v701
      %703 = vmatprep.mubr.f32.mxu0 0.0
      %704 = vmatmul.mubr.f32.gmra.mrb[0].mxu0 %v373
      %v705 = vpop.f32.mrb[0].mxu0
      %v706 = vadd.f32 0.0, %v705
      %v707 = vpop.f32.mrb[0].mxu0
      %v708 = vadd.f32 0.0, %v707
      %709 = vmatprep.mubr.f32.mxu0 0.0
      %710 = vmatmul.mubr.f32.gmra.mrb[0].mxu0 %v376
      %v711 = vpop.f32.mrb[0].mxu0
      %v712 = vadd.f32 0.0, %v711
      %v713 = vpop.f32.mrb[0].mxu0
      %v714 = vadd.f32 0.0, %v713
      %715 = vmatprep.mubr.f32.mxu0 0.0
      %716 = vmatmul.mubr.f32.gmra.mrb[0].mxu0 %v379
      %v717 = vpop.f32.mrb[0].mxu0
      %v718 = vadd.f32 0.0, %v717
      %v719 = vpop.f32.mrb[0].mxu0
      %v720 = vadd.f32 0.0, %v719
      %721 = vmatprep.mubr.f32.mxu0 0.0
      %722 = vmatmul.mubr.f32.gmra.mrb[0].mxu0 %v382
      %v723 = vpop.f32.mrb[0].mxu0
      %v724 = vadd.f32 0.0, %v723
      %v725 = vpop.f32.mrb[0].mxu0
      %v726 = vadd.f32 0.0, %v725
      %727 = vmatprep.mubr.f32.mxu0 0.0
      %728 = vmatmul.mubr.f32.gmra.mrb[0].mxu0 %v385
      %v729 = vpop.f32.mrb[0].mxu0
      %v730 = vadd.f32 0.0, %v729
      %v731 = vpop.f32.mrb[0].mxu0
      %v732 = vadd.f32 0.0, %v731
      %733 = vmatprep.mubr.f32.mxu0 0.0
      %734 = vmatmul.mubr.f32.gmra.mrb[0].mxu0 %v388
      %v735 = vpop.f32.mrb[0].mxu0
      %v736 = vadd.f32 0.0, %v735
      %v737 = vpop.f32.mrb[0].mxu0
      %v738 = vadd.f32 0.0, %v737
      %739 = vmatprep.mubr.f32.mxu0 0.0
      %740 = vmatmul.mubr.f32.gmra.mrb[0].mxu0 %v391
      %v741 = vpop.f32.mrb[0].mxu0
      %v742 = vadd.f32 0.0, %v741
      %v743 = vpop.f32.mrb[0].mxu0
      %v744 = vadd.f32 0.0, %v743
      %745 = vdwg.mxu0
      %746 = vmatprep.subr.mxu0 0.0
      %747 = vmatpush1.xpose.msra.mxu0 %v490
      %748 = vmatprep.subr.mxu0 0.0
      %749 = vmatpush1.xpose.msra.mxu0 %v493
      %750 = vmatprep.subr.mxu0 0.0
      %751 = vmatpush1.xpose.msra.mxu0 %v496
      %752 = vmatprep.subr.mxu0 0.0
      %753 = vmatpush1.xpose.msra.mxu0 %v499
      %754 = vmatprep.subr.mxu0 0.0
      %755 = vmatpush1.xpose.msra.mxu0 %v502
      %756 = vmatprep.subr.mxu0 0.0
      %757 = vmatpush1.xpose.msra.mxu0 %v505
      %758 = vmatprep.subr.mxu0 0.0
      %759 = vmatpush1.xpose.msra.mxu0 %v508
      %760 = vmatprep.subr.mxu0 0.0
      %761 = vmatpush1.xpose.msra.mxu0 %v511
      %762 = vmatprep.subr.mxu0 0.0
      %763 = vmatpush1.xpose.msra.mxu0 %v514
      %764 = vmatprep.subr.mxu0 0.0
      %765 = vmatpush1.xpose.msra.mxu0 %v517
      %766 = vmatprep.subr.mxu0 0.0
      %767 = vmatpush1.xpose.msra.mxu0 %v520
      %768 = vmatprep.subr.mxu0 0.0
      %769 = vmatpush1.xpose.msra.mxu0 %v523
      %770 = vmatprep.subr.mxu0 0.0
      %771 = vmatpush1.xpose.msra.mxu0 %v526
      %772 = vmatprep.subr.mxu0 0.0
      %773 = vmatpush1.xpose.msra.mxu0 %v529
      %774 = vmatprep.subr.mxu0 0.0
      %775 = vmatpush1.xpose.msra.mxu0 %v532
      %776 = vmatprep.subr.mxu0 0.0
      %777 = vmatpush1.xpose.msra.mxu0 %v535
      %778 = vmatprep.subr.mxu0 0.0
      %779 = vmatpush1.xpose.msra.mxu0 %v538
      %780 = vmatprep.subr.mxu0 0.0
      %781 = vmatpush1.xpose.msra.mxu0 %v541
      %782 = vmatprep.subr.mxu0 0.0
      %783 = vmatpush1.xpose.msra.mxu0 %v544
      %784 = vmatprep.subr.mxu0 0.0
      %785 = vmatpush1.xpose.msra.mxu0 %v547
      %786 = vmatprep.subr.mxu0 0.0
      %787 = vmatpush1.xpose.msra.mxu0 %v550
      %788 = vmatprep.subr.mxu0 0.0
      %789 = vmatpush1.xpose.msra.mxu0 %v553
      %790 = vmatprep.subr.mxu0 0.0
      %791 = vmatpush1.xpose.msra.mxu0 %v556
      %792 = vmatprep.subr.mxu0 0.0
      %793 = vmatpush1.xpose.msra.mxu0 %v559
      %794 = vmatprep.subr.mxu0 0.0
      %795 = vmatpush1.xpose.msra.mxu0 %v562
      %796 = vmatprep.subr.mxu0 0.0
      %797 = vmatpush1.xpose.msra.mxu0 %v565
      %798 = vmatprep.subr.mxu0 0.0
      %799 = vmatpush1.xpose.msra.mxu0 %v568
      %800 = vmatprep.subr.mxu0 0.0
      %801 = vmatpush1.xpose.msra.mxu0 %v571
      %802 = vmatprep.subr.mxu0 0.0
      %803 = vmatpush1.xpose.msra.mxu0 %v574
      %804 = vmatprep.subr.mxu0 0.0
      %805 = vmatpush1.xpose.msra.mxu0 %v577
      %806 = vmatprep.subr.mxu0 0.0
      %807 = vmatpush1.xpose.msra.mxu0 %v580
      %808 = vmatprep.subr.mxu0 0.0
      %809 = vmatpush1.xpose.msra.mxu0 %v583
      %810 = vmatprep.mubr.f32.mxu0 0.0
      %811 = vmatmul.mubr.f32.gmra.mrb[0].mxu0 %v346
      %v812 = vpop.f32.mrb[0].mxu0
      %v813 = vadd.f32 0.0, %v812
      %v814 = vpop.f32.mrb[0].mxu0
      %v815 = vadd.f32 0.0, %v814
      %816 = vmatprep.mubr.f32.mxu0 0.0
      %817 = vmatmul.mubr.f32.gmra.mrb[0].mxu0 %v349
      %v818 = vpop.f32.mrb[0].mxu0
      %v819 = vadd.f32 0.0, %v818
      %v820 = vpop.f32.mrb[0].mxu0
      %v821 = vadd.f32 0.0, %v820
      %822 = vmatprep.mubr.f32.mxu0 0.0
      %823 = vmatmul.mubr.f32.gmra.mrb[0].mxu0 %v352
      %v824 = vpop.f32.mrb[0].mxu0
      %v825 = vadd.f32 0.0, %v824
      %v826 = vpop.f32.mrb[0].mxu0
      %v827 = vadd.f32 0.0, %v826
      %828 = vmatprep.mubr.f32.mxu0 0.0
      %829 = vmatmul.mubr.f32.gmra.mrb[0].mxu0 %v355
      %v830 = vpop.f32.mrb[0].mxu0
      %v831 = vadd.f32 0.0, %v830
      %v832 = vpop.f32.mrb[0].mxu0
      %v833 = vadd.f32 0.0, %v832
      %834 = vmatprep.mubr.f32.mxu0 0.0
      %835 = vmatmul.mubr.f32.gmra.mrb[0].mxu0 %v358
      %v836 = vpop.f32.mrb[0].mxu0
      %v837 = vadd.f32 0.0, %v836
      %v838 = vpop.f32.mrb[0].mxu0
      %v839 = vadd.f32 0.0, %v838
      %840 = vmatprep.mubr.f32.mxu0 0.0
      %841 = vmatmul.mubr.f32.gmra.mrb[0].mxu0 %v361
      %v842 = vpop.f32.mrb[0].mxu0
      %v843 = vadd.f32 0.0, %v842
      %v844 = vpop.f32.mrb[0].mxu0
      %v845 = vadd.f32 0.0, %v844
      %846 = vmatprep.mubr.f32.mxu0 0.0
      %847 = vmatmul.mubr.f32.gmra.mrb[0].mxu0 %v364
      %v848 = vpop.f32.mrb[0].mxu0
      %v849 = vadd.f32 0.0, %v848
      %v850 = vpop.f32.mrb[0].mxu0
      %v851 = vadd.f32 0.0, %v850
      %852 = vmatprep.mubr.f32.mxu0 0.0
      %853 = vmatmul.mubr.f32.gmra.mrb[0].mxu0 %v367
      %v854 = vpop.f32.mrb[0].mxu0
      %v855 = vadd.f32 0.0, %v854
      %v856 = vpop.f32.mrb[0].mxu0
      %v857 = vadd.f32 0.0, %v856
      %858 = vmatprep.mubr.f32.mxu0 0.0
      %859 = vmatmul.mubr.f32.gmra.mrb[0].mxu0 %v370
      %v860 = vpop.f32.mrb[0].mxu0
      %v861 = vadd.f32 0.0, %v860
      %v862 = vpop.f32.mrb[0].mxu0
      %v863 = vadd.f32 0.0, %v862
      %864 = vmatprep.mubr.f32.mxu0 0.0
      %865 = vmatmul.mubr.f32.gmra.mrb[0].mxu0 %v373
      %v866 = vpop.f32.mrb[0].mxu0
      %v867 = vadd.f32 0.0, %v866
      %v868 = vpop.f32.mrb[0].mxu0
      %v869 = vadd.f32 0.0, %v868
      %870 = vmatprep.mubr.f32.mxu0 0.0
      %871 = vmatmul.mubr.f32.gmra.mrb[0].mxu0 %v376
      %v872 = vpop.f32.mrb[0].mxu0
      %v873 = vadd.f32 0.0, %v872
      %v874 = vpop.f32.mrb[0].mxu0
      %v875 = vadd.f32 0.0, %v874
      %876 = vmatprep.mubr.f32.mxu0 0.0
      %877 = vmatmul.mubr.f32.gmra.mrb[0].mxu0 %v379
      %v878 = vpop.f32.mrb[0].mxu0
      %v879 = vadd.f32 0.0, %v878
      %v880 = vpop.f32.mrb[0].mxu0
      %v881 = vadd.f32 0.0, %v880
      %882 = vmatprep.mubr.f32.mxu0 0.0
      %883 = vmatmul.mubr.f32.gmra.mrb[0].mxu0 %v382
      %v884 = vpop.f32.mrb[0].mxu0
      %v885 = vadd.f32 0.0, %v884
      %v886 = vpop.f32.mrb[0].mxu0
      %v887 = vadd.f32 0.0, %v886
      %888 = vmatprep.mubr.f32.mxu0 0.0
      %889 = vmatmul.mubr.f32.gmra.mrb[0].mxu0 %v385
      %v890 = vpop.f32.mrb[0].mxu0
      %v891 = vadd.f32 0.0, %v890
      %v892 = vpop.f32.mrb[0].mxu0
      %v893 = vadd.f32 0.0, %v892
      %894 = vmatprep.mubr.f32.mxu0 0.0
      %895 = vmatmul.mubr.f32.gmra.mrb[0].mxu0 %v388
      %v896 = vpop.f32.mrb[0].mxu0
      %v897 = vadd.f32 0.0, %v896
      %v898 = vpop.f32.mrb[0].mxu0
      %v899 = vadd.f32 0.0, %v898
      %900 = vmatprep.mubr.f32.mxu0 0.0
      %901 = vmatmul.mubr.f32.gmra.mrb[0].mxu0 %v391
      %v902 = vpop.f32.mrb[0].mxu0
      %v903 = vadd.f32 0.0, %v902
      %v904 = vpop.f32.mrb[0].mxu0
      %v905 = vadd.f32 0.0, %v904
      %906 = vdwg.mxu0
      %v907 = vmax.f32 %v652, %v654
      %v908 = vmax.f32 %v907, %v813
      %v909 = vmax.f32 %v908, %v815
      %910 = vmax.xlane.f32.xlu0 %v909
      %v911 = vpop.xlane.xlu0 %910
      %v912 = vmax.f32 %v658, %v660
      %v913 = vmax.f32 %v912, %v819
      %v914 = vmax.f32 %v913, %v821
      %915 = vmax.xlane.f32.xlu0 %v914
      %v916 = vpop.xlane.xlu0 %915
      %v917 = vmax.f32 %v664, %v666
      %v918 = vmax.f32 %v917, %v825
      %v919 = vmax.f32 %v918, %v827
      %920 = vmax.xlane.f32.xlu0 %v919
      %v921 = vpop.xlane.xlu0 %920
      %v922 = vmax.f32 %v670, %v672
      %v923 = vmax.f32 %v922, %v831
      %v924 = vmax.f32 %v923, %v833
      %925 = vmax.xlane.f32.xlu0 %v924
      %v926 = vpop.xlane.xlu0 %925
      %v927 = vmax.f32 %v676, %v678
      %v928 = vmax.f32 %v927, %v837
      %v929 = vmax.f32 %v928, %v839
      %930 = vmax.xlane.f32.xlu0 %v929
      %v931 = vpop.xlane.xlu0 %930
      %v932 = vmax.f32 %v682, %v684
      %v933 = vmax.f32 %v932, %v843
      %v934 = vmax.f32 %v933, %v845
      %935 = vmax.xlane.f32.xlu0 %v934
      %v936 = vpop.xlane.xlu0 %935
      %v937 = vmax.f32 %v688, %v690
      %v938 = vmax.f32 %v937, %v849
      %v939 = vmax.f32 %v938, %v851
      %940 = vmax.xlane.f32.xlu0 %v939
      %v941 = vpop.xlane.xlu0 %940
      %v942 = vmax.f32 %v694, %v696
      %v943 = vmax.f32 %v942, %v855
      %v944 = vmax.f32 %v943, %v857
      %945 = vmax.xlane.f32.xlu0 %v944
      %v946 = vpop.xlane.xlu0 %945
      %v947 = vmax.f32 %v700, %v702
      %v948 = vmax.f32 %v947, %v861
      %v949 = vmax.f32 %v948, %v863
      %950 = vmax.xlane.f32.xlu0 %v949
      %v951 = vpop.xlane.xlu0 %950
      %v952 = vmax.f32 %v706, %v708
      %v953 = vmax.f32 %v952, %v867
      %v954 = vmax.f32 %v953, %v869
      %955 = vmax.xlane.f32.xlu0 %v954
      %v956 = vpop.xlane.xlu0 %955
      %v957 = vmax.f32 %v712, %v714
      %v958 = vmax.f32 %v957, %v873
      %v959 = vmax.f32 %v958, %v875
      %960 = vmax.xlane.f32.xlu0 %v959
      %v961 = vpop.xlane.xlu0 %960
      %v962 = vmax.f32 %v718, %v720
      %v963 = vmax.f32 %v962, %v879
      %v964 = vmax.f32 %v963, %v881
      %965 = vmax.xlane.f32.xlu0 %v964
      %v966 = vpop.xlane.xlu0 %965
      %v967 = vmax.f32 %v724, %v726
      %v968 = vmax.f32 %v967, %v885
      %v969 = vmax.f32 %v968, %v887
      %970 = vmax.xlane.f32.xlu0 %v969
      %v971 = vpop.xlane.xlu0 %970
      %v972 = vmax.f32 %v730, %v732
      %v973 = vmax.f32 %v972, %v891
      %v974 = vmax.f32 %v973, %v893
      %975 = vmax.xlane.f32.xlu0 %v974
      %v976 = vpop.xlane.xlu0 %975
      %v977 = vmax.f32 %v736, %v738
      %v978 = vmax.f32 %v977, %v897
      %v979 = vmax.f32 %v978, %v899
      %980 = vmax.xlane.f32.xlu0 %v979
      %v981 = vpop.xlane.xlu0 %980
      %v982 = vmax.f32 %v742, %v744
      %v983 = vmax.f32 %v982, %v903
      %v984 = vmax.f32 %v983, %v905
      %985 = vmax.xlane.f32.xlu0 %v984
      %v986 = vpop.xlane.xlu0 %985
      %v987 = vsub.f32 %v652, %v911
      %v988 = vsub.f32 %v654, %v911
      %v989 = vsub.f32 %v813, %v911
      %v990 = vsub.f32 %v815, %v911
      %v991 = vsub.f32 %v658, %v916
      %v992 = vsub.f32 %v660, %v916
      %v993 = vsub.f32 %v819, %v916
      %v994 = vsub.f32 %v821, %v916
      %v995 = vsub.f32 %v664, %v921
      %v996 = vsub.f32 %v666, %v921
      %v997 = vsub.f32 %v825, %v921
      %v998 = vsub.f32 %v827, %v921
      %v999 = vsub.f32 %v670, %v926
      %v1000 = vsub.f32 %v672, %v926
      %v1001 = vsub.f32 %v831, %v926
      %v1002 = vsub.f32 %v833, %v926
      %v1003 = vsub.f32 %v676, %v931
      %v1004 = vsub.f32 %v678, %v931
      %v1005 = vsub.f32 %v837, %v931
      %v1006 = vsub.f32 %v839, %v931
      %v1007 = vsub.f32 %v682, %v936
      %v1008 = vsub.f32 %v684, %v936
      %v1009 = vsub.f32 %v843, %v936
      %v1010 = vsub.f32 %v845, %v936
      %v1011 = vsub.f32 %v688, %v941
      %v1012 = vsub.f32 %v690, %v941
      %v1013 = vsub.f32 %v849, %v941
      %v1014 = vsub.f32 %v851, %v941
      %v1015 = vsub.f32 %v694, %v946
      %v1016 = vsub.f32 %v696, %v946
      %v1017 = vsub.f32 %v855, %v946
      %v1018 = vsub.f32 %v857, %v946
      %v1019 = vsub.f32 %v700, %v951
      %v1020 = vsub.f32 %v702, %v951
      %v1021 = vsub.f32 %v861, %v951
      %v1022 = vsub.f32 %v863, %v951
      %v1023 = vsub.f32 %v706, %v956
      %v1024 = vsub.f32 %v708, %v956
      %v1025 = vsub.f32 %v867, %v956
      %v1026 = vsub.f32 %v869, %v956
      %v1027 = vsub.f32 %v712, %v961
      %v1028 = vsub.f32 %v714, %v961
      %v1029 = vsub.f32 %v873, %v961
      %v1030 = vsub.f32 %v875, %v961
      %v1031 = vsub.f32 %v718, %v966
      %v1032 = vsub.f32 %v720, %v966
      %v1033 = vsub.f32 %v879, %v966
      %v1034 = vsub.f32 %v881, %v966
      %v1035 = vsub.f32 %v724, %v971
      %v1036 = vsub.f32 %v726, %v971
      %v1037 = vsub.f32 %v885, %v971
      %v1038 = vsub.f32 %v887, %v971
      %v1039 = vsub.f32 %v730, %v976
      %v1040 = vsub.f32 %v732, %v976
      %v1041 = vsub.f32 %v891, %v976
      %v1042 = vsub.f32 %v893, %v976
      %v1043 = vsub.f32 %v736, %v981
      %v1044 = vsub.f32 %v738, %v981
      %v1045 = vsub.f32 %v897, %v981
      %v1046 = vsub.f32 %v899, %v981
      %v1047 = vsub.f32 %v742, %v986
      %v1048 = vsub.f32 %v744, %v986
      %v1049 = vsub.f32 %v903, %v986
      %v1050 = vsub.f32 %v905, %v986
      %v1051 = vmul.f32 %v987, 10.0
      %v1052 = vmul.f32 %v988, 10.0
      %v1053 = vmul.f32 %v989, 10.0
      %v1054 = vmul.f32 %v990, 10.0
      %v1055 = vmul.f32 %v991, 10.0
      %v1056 = vmul.f32 %v992, 10.0
      %v1057 = vmul.f32 %v993, 10.0
      %v1058 = vmul.f32 %v994, 10.0
      %v1059 = vmul.f32 %v995, 10.0
      %v1060 = vmul.f32 %v996, 10.0
      %v1061 = vmul.f32 %v997, 10.0
      %v1062 = vmul.f32 %v998, 10.0
      %v1063 = vmul.f32 %v999, 10.0
      %v1064 = vmul.f32 %v1000, 10.0
      %v1065 = vmul.f32 %v1001, 10.0
      %v1066 = vmul.f32 %v1002, 10.0
      %v1067 = vmul.f32 %v1003, 10.0
      %v1068 = vmul.f32 %v1004, 10.0
      %v1069 = vmul.f32 %v1005, 10.0
      %v1070 = vmul.f32 %v1006, 10.0
      %v1071 = vmul.f32 %v1007, 10.0
      %v1072 = vmul.f32 %v1008, 10.0
      %v1073 = vmul.f32 %v1009, 10.0
      %v1074 = vmul.f32 %v1010, 10.0
      %v1075 = vmul.f32 %v1011, 10.0
      %v1076 = vmul.f32 %v1012, 10.0
      %v1077 = vmul.f32 %v1013, 10.0
      %v1078 = vmul.f32 %v1014, 10.0
      %v1079 = vmul.f32 %v1015, 10.0
      %v1080 = vmul.f32 %v1016, 10.0
      %v1081 = vmul.f32 %v1017, 10.0
      %v1082 = vmul.f32 %v1018, 10.0
      %v1083 = vmul.f32 %v1019, 10.0
      %v1084 = vmul.f32 %v1020, 10.0
      %v1085 = vmul.f32 %v1021, 10.0
      %v1086 = vmul.f32 %v1022, 10.0
      %v1087 = vmul.f32 %v1023, 10.0
      %v1088 = vmul.f32 %v1024, 10.0
      %v1089 = vmul.f32 %v1025, 10.0
      %v1090 = vmul.f32 %v1026, 10.0
      %v1091 = vmul.f32 %v1027, 10.0
      %v1092 = vmul.f32 %v1028, 10.0
      %v1093 = vmul.f32 %v1029, 10.0
      %v1094 = vmul.f32 %v1030, 10.0
      %v1095 = vmul.f32 %v1031, 10.0
      %v1096 = vmul.f32 %v1032, 10.0
      %v1097 = vmul.f32 %v1033, 10.0
      %v1098 = vmul.f32 %v1034, 10.0
      %v1099 = vmul.f32 %v1035, 10.0
      %v1100 = vmul.f32 %v1036, 10.0
      %v1101 = vmul.f32 %v1037, 10.0
      %v1102 = vmul.f32 %v1038, 10.0
      %v1103 = vmul.f32 %v1039, 10.0
      %v1104 = vmul.f32 %v1040, 10.0
      %v1105 = vmul.f32 %v1041, 10.0
      %v1106 = vmul.f32 %v1042, 10.0
      %v1107 = vmul.f32 %v1043, 10.0
      %v1108 = vmul.f32 %v1044, 10.0
      %v1109 = vmul.f32 %v1045, 10.0
      %v1110 = vmul.f32 %v1046, 10.0
      %v1111 = vmul.f32 %v1047, 10.0
      %v1112 = vmul.f32 %v1048, 10.0
      %v1113 = vmul.f32 %v1049, 10.0
      %v1114 = vmul.f32 %v1050, 10.0
      %1115 = vst [vmem:[#allocation2] sm:$0xff] %v1051
      %1116 = vst [vmem:[#allocation2 + $0x8] sm:$0xff] %v1052
      %1117 = vst [vmem:[#allocation2 + $0x10] sm:$0xff] %v1053
      %1118 = vst [vmem:[#allocation2 + $0x18] sm:$0xff] %v1054
      %1119 = vst [vmem:[#allocation2 + $0x20] sm:$0xff] %v1055
      %1120 = vst [vmem:[#allocation2 + $0x28] sm:$0xff] %v1056
      %1121 = vst [vmem:[#allocation2 + $0x30] sm:$0xff] %v1057
      %1122 = vst [vmem:[#allocation2 + $0x38] sm:$0xff] %v1058
      %1123 = vst [vmem:[#allocation2 + $0x40] sm:$0xff] %v1059
      %1124 = vst [vmem:[#allocation2 + $0x48] sm:$0xff] %v1060
      %1125 = vst [vmem:[#allocation2 + $0x50] sm:$0xff] %v1061
      %1126 = vst [vmem:[#allocation2 + $0x58] sm:$0xff] %v1062
      %1127 = vst [vmem:[#allocation2 + $0x60] sm:$0xff] %v1063
      %1128 = vst [vmem:[#allocation2 + $0x68] sm:$0xff] %v1064
      %1129 = vst [vmem:[#allocation2 + $0x70] sm:$0xff] %v1065
      %1130 = vst [vmem:[#allocation2 + $0x78] sm:$0xff] %v1066
      %1131 = vst [vmem:[#allocation2 + $0x80] sm:$0xff] %v1067
      %1132 = vst [vmem:[#allocation2 + $0x88] sm:$0xff] %v1068
      %1133 = vst [vmem:[#allocation2 + $0x90] sm:$0xff] %v1069
      %1134 = vst [vmem:[#allocation2 + $0x98] sm:$0xff] %v1070
      %1135 = vst [vmem:[#allocation2 + $0xa0] sm:$0xff] %v1071
      %1136 = vst [vmem:[#allocation2 + $0xa8] sm:$0xff] %v1072
      %1137 = vst [vmem:[#allocation2 + $0xb0] sm:$0xff] %v1073
      %1138 = vst [vmem:[#allocation2 + $0xb8] sm:$0xff] %v1074
      %1139 = vst [vmem:[#allocation2 + $0xc0] sm:$0xff] %v1075
      %1140 = vst [vmem:[#allocation2 + $0xc8] sm:$0xff] %v1076
      %1141 = vst [vmem:[#allocation2 + $0xd0] sm:$0xff] %v1077
      %1142 = vst [vmem:[#allocation2 + $0xd8] sm:$0xff] %v1078
      %1143 = vst [vmem:[#allocation2 + $0xe0] sm:$0xff] %v1079
      %1144 = vst [vmem:[#allocation2 + $0xe8] sm:$0xff] %v1080
      %1145 = vst [vmem:[#allocation2 + $0xf0] sm:$0xff] %v1081
      %1146 = vst [vmem:[#allocation2 + $0xf8] sm:$0xff] %v1082
      %1147 = vst [vmem:[#allocation2 + $0x100] sm:$0xff] %v1083
      %1148 = vst [vmem:[#allocation2 + $0x108] sm:$0xff] %v1084
      %1149 = vst [vmem:[#allocation2 + $0x110] sm:$0xff] %v1085
      %1150 = vst [vmem:[#allocation2 + $0x118] sm:$0xff] %v1086
      %1151 = vst [vmem:[#allocation2 + $0x120] sm:$0xff] %v1087
      %1152 = vst [vmem:[#allocation2 + $0x128] sm:$0xff] %v1088
      %1153 = vst [vmem:[#allocation2 + $0x130] sm:$0xff] %v1089
      %1154 = vst [vmem:[#allocation2 + $0x138] sm:$0xff] %v1090
      %1155 = vst [vmem:[#allocation2 + $0x140] sm:$0xff] %v1091
      %1156 = vst [vmem:[#allocation2 + $0x148] sm:$0xff] %v1092
      %1157 = vst [vmem:[#allocation2 + $0x150] sm:$0xff] %v1093
      %1158 = vst [vmem:[#allocation2 + $0x158] sm:$0xff] %v1094
      %1159 = vst [vmem:[#allocation2 + $0x160] sm:$0xff] %v1095
      %1160 = vst [vmem:[#allocation2 + $0x168] sm:$0xff] %v1096
      %1161 = vst [vmem:[#allocation2 + $0x170] sm:$0xff] %v1097
      %1162 = vst [vmem:[#allocation2 + $0x178] sm:$0xff] %v1098
      %1163 = vst [vmem:[#allocation2 + $0x180] sm:$0xff] %v1099
      %1164 = vst [vmem:[#allocation2 + $0x188] sm:$0xff] %v1100
      %1165 = vst [vmem:[#allocation2 + $0x190] sm:$0xff] %v1101
      %1166 = vst [vmem:[#allocation2 + $0x198] sm:$0xff] %v1102
      %1167 = vst [vmem:[#allocation2 + $0x1a0] sm:$0xff] %v1103
      %1168 = vst [vmem:[#allocation2 + $0x1a8] sm:$0xff] %v1104
      %1169 = vst [vmem:[#allocation2 + $0x1b0] sm:$0xff] %v1105
      %1170 = vst [vmem:[#allocation2 + $0x1b8] sm:$0xff] %v1106
      %1171 = vst [vmem:[#allocation2 + $0x1c0] sm:$0xff] %v1107
      %1172 = vst [vmem:[#allocation2 + $0x1c8] sm:$0xff] %v1108
      %1173 = vst [vmem:[#allocation2 + $0x1d0] sm:$0xff] %v1109
      %1174 = vst [vmem:[#allocation2 + $0x1d8] sm:$0xff] %v1110
      %1175 = vst [vmem:[#allocation2 + $0x1e0] sm:$0xff] %v1111
      %1176 = vst [vmem:[#allocation2 + $0x1e8] sm:$0xff] %v1112
      %1177 = vst [vmem:[#allocation2 + $0x1f0] sm:$0xff] %v1113
      %1178 = vst [vmem:[#allocation2 + $0x1f8] sm:$0xff] %v1114
      loop: start=0, step=1, limit=4
      $region37: #{supcon_topk_loss.1} parent=35 // loop_pre_header
        _
      $region38: #{supcon_topk_loss.1} parent=35 // loop_header
        %s1180 = sphi 0, %s1184
        %p1181 = scmp.ge.s32.totalorder %s1180, 4
      $region39: #{supcon_topk_loss.1} parent=35 // loop_header_branch
        %1183 = sbr.rel (%p1181) target = $region43
      $region40: #{supcon_topk_loss.1} parent=35 // loop_body
        %s1185 = smul.u32 %s1180, 32
        %s1186 = smul.u32 %s17, 128
        %s1187 = sadd.s32 %s1186, %s1185
        %s1188 = scalar_lea.vmem %s250, %s1185
        %v1189 = vld [vmem:[%s1188] sm:$0xff]
        %v1190 = vld [vmem:[%s1188 + $0x8] sm:$0xff]
        %v1191 = vld [vmem:[%s1188 + $0x10] sm:$0xff]
        %v1192 = vld [vmem:[%s1188 + $0x18] sm:$0xff]
        %v1193 = vld [vmem:[%s3] sm:$0xf]
        %1194 = vset.pattern.permute.xlu0 0
        %1195 = vperm.xlu0 %1194, %v1189
        %v1196 = vpop.permute.xlu0 %1195
        %1197 = vset.pattern.permute.xlu0 0
        %1198 = vperm.xlu0 %1197, %v1190
        %v1199 = vpop.permute.xlu0 %1198
        %1200 = vset.pattern.permute.xlu0 0
        %1201 = vperm.xlu0 %1200, %v1191
        %v1202 = vpop.permute.xlu0 %1201
        %1203 = vset.pattern.permute.xlu0 0
        %1204 = vperm.xlu0 %1203, %v1192
        %v1205 = vpop.permute.xlu0 %1204
        %v1206 = vlaneseq
        %v1207 = vshrl.u32 %v1206, 7
        %v1208 = vsub.s32 0, %v1207
        %v1209 = vrot.slane %v1193, %v1208
        %v1210 = vlaneseq
        %v1211 = vshrl.u32 %v1210, 7
        %v1212 = vsub.s32 1, %v1211
        %v1213 = vrot.slane %v1193, %v1212
        %v1214 = vlaneseq
        %v1215 = vshrl.u32 %v1214, 7
        %v1216 = vsub.s32 2, %v1215
        %v1217 = vrot.slane %v1193, %v1216
        %v1218 = vlaneseq
        %v1219 = vshrl.u32 %v1218, 7
        %v1220 = vsub.s32 3, %v1219
        %v1221 = vrot.slane %v1193, %v1220
        %vm1222 = vcmp.eq.s32.totalorder %v1196, %v1209
        %vm1223 = vcmp.eq.s32.totalorder %v1196, %v1213
        %vm1224 = vcmp.eq.s32.totalorder %v1196, %v1217
        %vm1225 = vcmp.eq.s32.totalorder %v1196, %v1221
        %vm1226 = vcmp.eq.s32.totalorder %v1199, %v1209
        %vm1227 = vcmp.eq.s32.totalorder %v1199, %v1213
        %vm1228 = vcmp.eq.s32.totalorder %v1199, %v1217
        %vm1229 = vcmp.eq.s32.totalorder %v1199, %v1221
        %vm1230 = vcmp.eq.s32.totalorder %v1202, %v1209
        %vm1231 = vcmp.eq.s32.totalorder %v1202, %v1213
        %vm1232 = vcmp.eq.s32.totalorder %v1202, %v1217
        %vm1233 = vcmp.eq.s32.totalorder %v1202, %v1221
        %vm1234 = vcmp.eq.s32.totalorder %v1205, %v1209
        %vm1235 = vcmp.eq.s32.totalorder %v1205, %v1213
        %vm1236 = vcmp.eq.s32.totalorder %v1205, %v1217
        %vm1237 = vcmp.eq.s32.totalorder %v1205, %v1221
        %v1238 = vlaneseq
        %v1239 = vand.u32 %v1238, 127
        %v1240 = vadd.s32 %v1239, 128
        %v1241 = vadd.s32 %v1239, 256
        %v1242 = vadd.s32 %v1239, 384
        %v1243 = vlaneseq
        %v1244 = vshrl.u32 %v1243, 7
        %v1245 = vadd.s32 %v1244, 8
        %v1246 = vadd.s32 %v1244, 16
        %v1247 = vadd.s32 %v1244, 24
        %v1248 = vstv %s1187
        %v1249 = vadd.s32 %v1244, %v1248
        %v1250 = vadd.s32 %v1245, %v1248
        %v1251 = vadd.s32 %v1246, %v1248
        %v1252 = vadd.s32 %v1247, %v1248
        %vm1253 = vcmp.ne.s32.totalorder %v1249, %v1239
        %vm1254 = vcmp.ne.s32.totalorder %v1249, %v1240
        %vm1255 = vcmp.ne.s32.totalorder %v1249, %v1241
        %vm1256 = vcmp.ne.s32.totalorder %v1249, %v1242
        %vm1257 = vcmp.ne.s32.totalorder %v1250, %v1239
        %vm1258 = vcmp.ne.s32.totalorder %v1250, %v1240
        %vm1259 = vcmp.ne.s32.totalorder %v1250, %v1241
        %vm1260 = vcmp.ne.s32.totalorder %v1250, %v1242
        %vm1261 = vcmp.ne.s32.totalorder %v1251, %v1239
        %vm1262 = vcmp.ne.s32.totalorder %v1251, %v1240
        %vm1263 = vcmp.ne.s32.totalorder %v1251, %v1241
        %vm1264 = vcmp.ne.s32.totalorder %v1251, %v1242
        %vm1265 = vcmp.ne.s32.totalorder %v1252, %v1239
        %vm1266 = vcmp.ne.s32.totalorder %v1252, %v1240
        %vm1267 = vcmp.ne.s32.totalorder %v1252, %v1241
        %vm1268 = vcmp.ne.s32.totalorder %v1252, %v1242
        %vm1269 = vmand %vm1222, %vm1253
        %vm1270 = vmand %vm1223, %vm1254
        %vm1271 = vmand %vm1224, %vm1255
        %vm1272 = vmand %vm1225, %vm1256
        %vm1273 = vmand %vm1226, %vm1257
        %vm1274 = vmand %vm1227, %vm1258
        %vm1275 = vmand %vm1228, %vm1259
        %vm1276 = vmand %vm1229, %vm1260
        %vm1277 = vmand %vm1230, %vm1261
        %vm1278 = vmand %vm1231, %vm1262
        %vm1279 = vmand %vm1232, %vm1263
        %vm1280 = vmand %vm1233, %vm1264
        %vm1281 = vmand %vm1234, %vm1265
        %vm1282 = vmand %vm1235, %vm1266
        %vm1283 = vmand %vm1236, %vm1267
        %vm1284 = vmand %vm1237, %vm1268
        %s1285 = sshra.s32 %s1185, 3
        %s1286 = sand.u32 %s1185, 7
        %s1287 = smul.u32 %s1285, 4
        %s1288 = smul.addr %s1287, 8
        %s1289 = scalar_lea.vmem [#allocation2], %s1288
        %v1290 = vld [vmem:[%s1289] sm:$0xff]
        %v1291 = vld [vmem:[%s1289 + $0x8] sm:$0xff]
        %v1292 = vld [vmem:[%s1289 + $0x10] sm:$0xff]
        %v1293 = vld [vmem:[%s1289 + $0x18] sm:$0xff]
        %v1294 = vld [vmem:[%s1289 + $0x20] sm:$0xff]
        %v1295 = vld [vmem:[%s1289 + $0x28] sm:$0xff]
        %v1296 = vld [vmem:[%s1289 + $0x30] sm:$0xff]
        %v1297 = vld [vmem:[%s1289 + $0x38] sm:$0xff]
        %v1298 = vld [vmem:[%s1289 + $0x40] sm:$0xff]
        %v1299 = vld [vmem:[%s1289 + $0x48] sm:$0xff]
        %v1300 = vld [vmem:[%s1289 + $0x50] sm:$0xff]
        %v1301 = vld [vmem:[%s1289 + $0x58] sm:$0xff]
        %v1302 = vld [vmem:[%s1289 + $0x60] sm:$0xff]
        %v1303 = vld [vmem:[%s1289 + $0x68] sm:$0xff]
        %v1304 = vld [vmem:[%s1289 + $0x70] sm:$0xff]
        %v1305 = vld [vmem:[%s1289 + $0x78] sm:$0xff]
        %v1306 = vmul.f32 %v1290, 1.442695
        %v1307 = vpow.pop %v1306
        %v1308 = vmul.f32 %v1291, 1.442695
        %v1309 = vpow.pop %v1308
        %v1310 = vmul.f32 %v1292, 1.442695
        %v1311 = vpow.pop %v1310
        %v1312 = vmul.f32 %v1293, 1.442695
        %v1313 = vpow.pop %v1312
        %v1314 = vmul.f32 %v1294, 1.442695
        %v1315 = vpow.pop %v1314
        %v1316 = vmul.f32 %v1295, 1.442695
        %v1317 = vpow.pop %v1316
        %v1318 = vmul.f32 %v1296, 1.442695
        %v1319 = vpow.pop %v1318
        %v1320 = vmul.f32 %v1297, 1.442695
        %v1321 = vpow.pop %v1320
        %v1322 = vmul.f32 %v1298, 1.442695
        %v1323 = vpow.pop %v1322
        %v1324 = vmul.f32 %v1299, 1.442695
        %v1325 = vpow.pop %v1324
        %v1326 = vmul.f32 %v1300, 1.442695
        %v1327 = vpow.pop %v1326
        %v1328 = vmul.f32 %v1301, 1.442695
        %v1329 = vpow.pop %v1328
        %v1330 = vmul.f32 %v1302, 1.442695
        %v1331 = vpow.pop %v1330
        %v1332 = vmul.f32 %v1303, 1.442695
        %v1333 = vpow.pop %v1332
        %v1334 = vmul.f32 %v1304, 1.442695
        %v1335 = vpow.pop %v1334
        %v1336 = vmul.f32 %v1305, 1.442695
        %v1337 = vpow.pop %v1336
        %v1338 = vsel %vm1269, %v1307, 0.0
        %v1339 = vsel %vm1270, %v1309, 0.0
        %v1340 = vsel %vm1271, %v1311, 0.0
        %v1341 = vsel %vm1272, %v1313, 0.0
        %v1342 = vsel %vm1273, %v1315, 0.0
        %v1343 = vsel %vm1274, %v1317, 0.0
        %v1344 = vsel %vm1275, %v1319, 0.0
        %v1345 = vsel %vm1276, %v1321, 0.0
        %v1346 = vsel %vm1277, %v1323, 0.0
        %v1347 = vsel %vm1278, %v1325, 0.0
        %v1348 = vsel %vm1279, %v1327, 0.0
        %v1349 = vsel %vm1280, %v1329, 0.0
        %v1350 = vsel %vm1281, %v1331, 0.0
        %v1351 = vsel %vm1282, %v1333, 0.0
        %v1352 = vsel %vm1283, %v1335, 0.0
        %v1353 = vsel %vm1284, %v1337, 0.0
        %v1354 = vadd.f32 %v1338, %v1339
        %v1355 = vadd.f32 %v1354, %v1340
        %v1356 = vadd.f32 %v1355, %v1341
        %1357 = vadd.xlane.f32.xlu0 %v1356
        %v1358 = vpop.xlane.xlu0 %1357
        %v1359 = vadd.f32 %v1342, %v1343
        %v1360 = vadd.f32 %v1359, %v1344
        %v1361 = vadd.f32 %v1360, %v1345
        %1362 = vadd.xlane.f32.xlu0 %v1361
        %v1363 = vpop.xlane.xlu0 %1362
        %v1364 = vadd.f32 %v1346, %v1347
        %v1365 = vadd.f32 %v1364, %v1348
        %v1366 = vadd.f32 %v1365, %v1349
        %1367 = vadd.xlane.f32.xlu0 %v1366
        %v1368 = vpop.xlane.xlu0 %1367
        %v1369 = vadd.f32 %v1350, %v1351
        %v1370 = vadd.f32 %v1369, %v1352
        %v1371 = vadd.f32 %v1370, %v1353
        %1372 = vadd.xlane.f32.xlu0 %v1371
        %v1373 = vpop.xlane.xlu0 %1372
        %v1374 = vsel %vm1222, 0.0, %v1307
        %v1375 = vsel %vm1223, 0.0, %v1309
        %v1376 = vsel %vm1224, 0.0, %v1311
        %v1377 = vsel %vm1225, 0.0, %v1313
        %v1378 = vsel %vm1226, 0.0, %v1315
        %v1379 = vsel %vm1227, 0.0, %v1317
        %v1380 = vsel %vm1228, 0.0, %v1319
        %v1381 = vsel %vm1229, 0.0, %v1321
        %v1382 = vsel %vm1230, 0.0, %v1323
        %v1383 = vsel %vm1231, 0.0, %v1325
        %v1384 = vsel %vm1232, 0.0, %v1327
        %v1385 = vsel %vm1233, 0.0, %v1329
        %v1386 = vsel %vm1234, 0.0, %v1331
        %v1387 = vsel %vm1235, 0.0, %v1333
        %v1388 = vsel %vm1236, 0.0, %v1335
        %v1389 = vsel %vm1237, 0.0, %v1337
        %v1390 = vmax.f32 %v1374, %v1375
        %v1391 = vmax.f32 %v1390, %v1376
        %v1392 = vmax.f32 %v1391, %v1377
        %1393 = vmax.xlane.f32.xlu0 %v1392
        %v1394 = vpop.xlane.xlu0 %1393
        %v1395 = vmax.f32 %v1378, %v1379
        %v1396 = vmax.f32 %v1395, %v1380
        %v1397 = vmax.f32 %v1396, %v1381
        %1398 = vmax.xlane.f32.xlu0 %v1397
        %v1399 = vpop.xlane.xlu0 %1398
        %v1400 = vmax.f32 %v1382, %v1383
        %v1401 = vmax.f32 %v1400, %v1384
        %v1402 = vmax.f32 %v1401, %v1385
        %1403 = vmax.xlane.f32.xlu0 %v1402
        %v1404 = vpop.xlane.xlu0 %1403
        %v1405 = vmax.f32 %v1386, %v1387
        %v1406 = vmax.f32 %v1405, %v1388
        %v1407 = vmax.f32 %v1406, %v1389
        %1408 = vmax.xlane.f32.xlu0 %v1407
        %v1409 = vpop.xlane.xlu0 %1408
        %v1410 = vadd.f32 %v1394, 0.0
        %v1411 = vadd.f32 %v1399, 0.0
        %v1412 = vadd.f32 %v1404, 0.0
        %v1413 = vadd.f32 %v1409, 0.0
        %v1414 = vmul.f32 %v1410, 0.5
        %v1415 = vmul.f32 %v1411, 0.5
        %v1416 = vmul.f32 %v1412, 0.5
        %v1417 = vmul.f32 %v1413, 0.5
        %vm1418 = vcmp.gt.f32.partialorder %v1374, %v1414
        %vm1419 = vcmp.gt.f32.partialorder %v1375, %v1414
        %vm1420 = vcmp.gt.f32.partialorder %v1376, %v1414
        %vm1421 = vcmp.gt.f32.partialorder %v1377, %v1414
        %vm1422 = vcmp.gt.f32.partialorder %v1378, %v1415
        %vm1423 = vcmp.gt.f32.partialorder %v1379, %v1415
        %vm1424 = vcmp.gt.f32.partialorder %v1380, %v1415
        %vm1425 = vcmp.gt.f32.partialorder %v1381, %v1415
        %vm1426 = vcmp.gt.f32.partialorder %v1382, %v1416
        %vm1427 = vcmp.gt.f32.partialorder %v1383, %v1416
        %vm1428 = vcmp.gt.f32.partialorder %v1384, %v1416
        %vm1429 = vcmp.gt.f32.partialorder %v1385, %v1416
        %vm1430 = vcmp.gt.f32.partialorder %v1386, %v1417
        %vm1431 = vcmp.gt.f32.partialorder %v1387, %v1417
        %vm1432 = vcmp.gt.f32.partialorder %v1388, %v1417
        %vm1433 = vcmp.gt.f32.partialorder %v1389, %v1417
        %v1434 = vsel %vm1418, 1.0, 0.0
        %v1435 = vsel %vm1419, 1.0, 0.0
        %v1436 = vsel %vm1420, 1.0, 0.0
        %v1437 = vsel %vm1421, 1.0, 0.0
        %v1438 = vsel %vm1422, 1.0, 0.0
        %v1439 = vsel %vm1423, 1.0, 0.0
        %v1440 = vsel %vm1424, 1.0, 0.0
        %v1441 = vsel %vm1425, 1.0, 0.0
        %v1442 = vsel %vm1426, 1.0, 0.0
        %v1443 = vsel %vm1427, 1.0, 0.0
        %v1444 = vsel %vm1428, 1.0, 0.0
        %v1445 = vsel %vm1429, 1.0, 0.0
        %v1446 = vsel %vm1430, 1.0, 0.0
        %v1447 = vsel %vm1431, 1.0, 0.0
        %v1448 = vsel %vm1432, 1.0, 0.0
        %v1449 = vsel %vm1433, 1.0, 0.0
        %v1450 = vadd.f32 %v1434, %v1435
        %v1451 = vadd.f32 %v1450, %v1436
        %v1452 = vadd.f32 %v1451, %v1437
        %1453 = vadd.xlane.f32.xlu0 %v1452
        %v1454 = vpop.xlane.xlu0 %1453
        %v1455 = vadd.f32 %v1438, %v1439
        %v1456 = vadd.f32 %v1455, %v1440
        %v1457 = vadd.f32 %v1456, %v1441
        %1458 = vadd.xlane.f32.xlu0 %v1457
        %v1459 = vpop.xlane.xlu0 %1458
        %v1460 = vadd.f32 %v1442, %v1443
        %v1461 = vadd.f32 %v1460, %v1444
        %v1462 = vadd.f32 %v1461, %v1445
        %1463 = vadd.xlane.f32.xlu0 %v1462
        %v1464 = vpop.xlane.xlu0 %1463
        %v1465 = vadd.f32 %v1446, %v1447
        %v1466 = vadd.f32 %v1465, %v1448
        %v1467 = vadd.f32 %v1466, %v1449
        %1468 = vadd.xlane.f32.xlu0 %v1467
        %v1469 = vpop.xlane.xlu0 %1468
        %vm1470 = vcmp.ge.f32.partialorder %v1454, 200.0
        %vm1471 = vcmp.ge.f32.partialorder %v1459, 200.0
        %vm1472 = vcmp.ge.f32.partialorder %v1464, 200.0
        %vm1473 = vcmp.ge.f32.partialorder %v1469, 200.0
        %v1474 = vsel %vm1470, %v1414, 0.0
        %v1475 = vsel %vm1471, %v1415, 0.0
        %v1476 = vsel %vm1472, %v1416, 0.0
        %v1477 = vsel %vm1473, %v1417, 0.0
        %v1478 = vsel %vm1470, %v1394, %v1414
        %v1479 = vsel %vm1471, %v1399, %v1415
        %v1480 = vsel %vm1472, %v1404, %v1416
        %v1481 = vsel %vm1473, %v1409, %v1417
        %v1482 = vadd.f32 %v1474, %v1478
        %v1483 = vadd.f32 %v1475, %v1479
        %v1484 = vadd.f32 %v1476, %v1480
        %v1485 = vadd.f32 %v1477, %v1481
        %v1486 = vmul.f32 %v1482, 0.5
        %v1487 = vmul.f32 %v1483, 0.5
        %v1488 = vmul.f32 %v1484, 0.5
        %v1489 = vmul.f32 %v1485, 0.5
        %vm1490 = vcmp.gt.f32.partialorder %v1374, %v1486
        %vm1491 = vcmp.gt.f32.partialorder %v1375, %v1486
        %vm1492 = vcmp.gt.f32.partialorder %v1376, %v1486
        %vm1493 = vcmp.gt.f32.partialorder %v1377, %v1486
        %vm1494 = vcmp.gt.f32.partialorder %v1378, %v1487
        %vm1495 = vcmp.gt.f32.partialorder %v1379, %v1487
        %vm1496 = vcmp.gt.f32.partialorder %v1380, %v1487
        %vm1497 = vcmp.gt.f32.partialorder %v1381, %v1487
        %vm1498 = vcmp.gt.f32.partialorder %v1382, %v1488
        %vm1499 = vcmp.gt.f32.partialorder %v1383, %v1488
        %vm1500 = vcmp.gt.f32.partialorder %v1384, %v1488
        %vm1501 = vcmp.gt.f32.partialorder %v1385, %v1488
        %vm1502 = vcmp.gt.f32.partialorder %v1386, %v1489
        %vm1503 = vcmp.gt.f32.partialorder %v1387, %v1489
        %vm1504 = vcmp.gt.f32.partialorder %v1388, %v1489
        %vm1505 = vcmp.gt.f32.partialorder %v1389, %v1489
        %v1506 = vsel %vm1490, 1.0, 0.0
        %v1507 = vsel %vm1491, 1.0, 0.0
        %v1508 = vsel %vm1492, 1.0, 0.0
        %v1509 = vsel %vm1493, 1.0, 0.0
        %v1510 = vsel %vm1494, 1.0, 0.0
        %v1511 = vsel %vm1495, 1.0, 0.0
        %v1512 = vsel %vm1496, 1.0, 0.0
        %v1513 = vsel %vm1497, 1.0, 0.0
        %v1514 = vsel %vm1498, 1.0, 0.0
        %v1515 = vsel %vm1499, 1.0, 0.0
        %v1516 = vsel %vm1500, 1.0, 0.0
        %v1517 = vsel %vm1501, 1.0, 0.0
        %v1518 = vsel %vm1502, 1.0, 0.0
        %v1519 = vsel %vm1503, 1.0, 0.0
        %v1520 = vsel %vm1504, 1.0, 0.0
        %v1521 = vsel %vm1505, 1.0, 0.0
        %v1522 = vadd.f32 %v1506, %v1507
        %v1523 = vadd.f32 %v1522, %v1508
        %v1524 = vadd.f32 %v1523, %v1509
        %1525 = vadd.xlane.f32.xlu0 %v1524
        %v1526 = vpop.xlane.xlu0 %1525
        %v1527 = vadd.f32 %v1510, %v1511
        %v1528 = vadd.f32 %v1527, %v1512
        %v1529 = vadd.f32 %v1528, %v1513
        %1530 = vadd.xlane.f32.xlu0 %v1529
        %v1531 = vpop.xlane.xlu0 %1530
        %v1532 = vadd.f32 %v1514, %v1515
        %v1533 = vadd.f32 %v1532, %v1516
        %v1534 = vadd.f32 %v1533, %v1517
        %1535 = vadd.xlane.f32.xlu0 %v1534
        %v1536 = vpop.xlane.xlu0 %1535
        %v1537 = vadd.f32 %v1518, %v1519
        %v1538 = vadd.f32 %v1537, %v1520
        %v1539 = vadd.f32 %v1538, %v1521
        %1540 = vadd.xlane.f32.xlu0 %v1539
        %v1541 = vpop.xlane.xlu0 %1540
        %vm1542 = vcmp.ge.f32.partialorder %v1526, 200.0
        %vm1543 = vcmp.ge.f32.partialorder %v1531, 200.0
        %vm1544 = vcmp.ge.f32.partialorder %v1536, 200.0
        %vm1545 = vcmp.ge.f32.partialorder %v1541, 200.0
        %v1546 = vsel %vm1542, %v1486, %v1474
        %v1547 = vsel %vm1543, %v1487, %v1475
        %v1548 = vsel %vm1544, %v1488, %v1476
        %v1549 = vsel %vm1545, %v1489, %v1477
        %v1550 = vsel %vm1542, %v1478, %v1486
        %v1551 = vsel %vm1543, %v1479, %v1487
        %v1552 = vsel %vm1544, %v1480, %v1488
        %v1553 = vsel %vm1545, %v1481, %v1489
        %v1554 = vadd.f32 %v1546, %v1550
        %v1555 = vadd.f32 %v1547, %v1551
        %v1556 = vadd.f32 %v1548, %v1552
        %v1557 = vadd.f32 %v1549, %v1553
        %v1558 = vmul.f32 %v1554, 0.5
        %v1559 = vmul.f32 %v1555, 0.5
        %v1560 = vmul.f32 %v1556, 0.5
        %v1561 = vmul.f32 %v1557, 0.5
        %vm1562 = vcmp.gt.f32.partialorder %v1374, %v1558
        %vm1563 = vcmp.gt.f32.partialorder %v1375, %v1558
        %vm1564 = vcmp.gt.f32.partialorder %v1376, %v1558
        %vm1565 = vcmp.gt.f32.partialorder %v1377, %v1558
        %vm1566 = vcmp.gt.f32.partialorder %v1378, %v1559
        %vm1567 = vcmp.gt.f32.partialorder %v1379, %v1559
        %vm1568 = vcmp.gt.f32.partialorder %v1380, %v1559
        %vm1569 = vcmp.gt.f32.partialorder %v1381, %v1559
        %vm1570 = vcmp.gt.f32.partialorder %v1382, %v1560
        %vm1571 = vcmp.gt.f32.partialorder %v1383, %v1560
        %vm1572 = vcmp.gt.f32.partialorder %v1384, %v1560
        %vm1573 = vcmp.gt.f32.partialorder %v1385, %v1560
        %vm1574 = vcmp.gt.f32.partialorder %v1386, %v1561
        %vm1575 = vcmp.gt.f32.partialorder %v1387, %v1561
        %vm1576 = vcmp.gt.f32.partialorder %v1388, %v1561
        %vm1577 = vcmp.gt.f32.partialorder %v1389, %v1561
        %v1578 = vsel %vm1562, 1.0, 0.0
        %v1579 = vsel %vm1563, 1.0, 0.0
        %v1580 = vsel %vm1564, 1.0, 0.0
        %v1581 = vsel %vm1565, 1.0, 0.0
        %v1582 = vsel %vm1566, 1.0, 0.0
        %v1583 = vsel %vm1567, 1.0, 0.0
        %v1584 = vsel %vm1568, 1.0, 0.0
        %v1585 = vsel %vm1569, 1.0, 0.0
        %v1586 = vsel %vm1570, 1.0, 0.0
        %v1587 = vsel %vm1571, 1.0, 0.0
        %v1588 = vsel %vm1572, 1.0, 0.0
        %v1589 = vsel %vm1573, 1.0, 0.0
        %v1590 = vsel %vm1574, 1.0, 0.0
        %v1591 = vsel %vm1575, 1.0, 0.0
        %v1592 = vsel %vm1576, 1.0, 0.0
        %v1593 = vsel %vm1577, 1.0, 0.0
        %v1594 = vadd.f32 %v1578, %v1579
        %v1595 = vadd.f32 %v1594, %v1580
        %v1596 = vadd.f32 %v1595, %v1581
        %1597 = vadd.xlane.f32.xlu0 %v1596
        %v1598 = vpop.xlane.xlu0 %1597
        %v1599 = vadd.f32 %v1582, %v1583
        %v1600 = vadd.f32 %v1599, %v1584
        %v1601 = vadd.f32 %v1600, %v1585
        %1602 = vadd.xlane.f32.xlu0 %v1601
        %v1603 = vpop.xlane.xlu0 %1602
        %v1604 = vadd.f32 %v1586, %v1587
        %v1605 = vadd.f32 %v1604, %v1588
        %v1606 = vadd.f32 %v1605, %v1589
        %1607 = vadd.xlane.f32.xlu0 %v1606
        %v1608 = vpop.xlane.xlu0 %1607
        %v1609 = vadd.f32 %v1590, %v1591
        %v1610 = vadd.f32 %v1609, %v1592
        %v1611 = vadd.f32 %v1610, %v1593
        %1612 = vadd.xlane.f32.xlu0 %v1611
        %v1613 = vpop.xlane.xlu0 %1612
        %vm1614 = vcmp.ge.f32.partialorder %v1598, 200.0
        %vm1615 = vcmp.ge.f32.partialorder %v1603, 200.0
        %vm1616 = vcmp.ge.f32.partialorder %v1608, 200.0
        %vm1617 = vcmp.ge.f32.partialorder %v1613, 200.0
        %v1618 = vsel %vm1614, %v1558, %v1546
        %v1619 = vsel %vm1615, %v1559, %v1547
        %v1620 = vsel %vm1616, %v1560, %v1548
        %v1621 = vsel %vm1617, %v1561, %v1549
        %v1622 = vsel %vm1614, %v1550, %v1558
        %v1623 = vsel %vm1615, %v1551, %v1559
        %v1624 = vsel %vm1616, %v1552, %v1560
        %v1625 = vsel %vm1617, %v1553, %v1561
        %v1626 = vadd.f32 %v1618, %v1622
        %v1627 = vadd.f32 %v1619, %v1623
        %v1628 = vadd.f32 %v1620, %v1624
        %v1629 = vadd.f32 %v1621, %v1625
        %v1630 = vmul.f32 %v1626, 0.5
        %v1631 = vmul.f32 %v1627, 0.5
        %v1632 = vmul.f32 %v1628, 0.5
        %v1633 = vmul.f32 %v1629, 0.5
        %vm1634 = vcmp.gt.f32.partialorder %v1374, %v1630
        %vm1635 = vcmp.gt.f32.partialorder %v1375, %v1630
        %vm1636 = vcmp.gt.f32.partialorder %v1376, %v1630
        %vm1637 = vcmp.gt.f32.partialorder %v1377, %v1630
        %vm1638 = vcmp.gt.f32.partialorder %v1378, %v1631
        %vm1639 = vcmp.gt.f32.partialorder %v1379, %v1631
        %vm1640 = vcmp.gt.f32.partialorder %v1380, %v1631
        %vm1641 = vcmp.gt.f32.partialorder %v1381, %v1631
        %vm1642 = vcmp.gt.f32.partialorder %v1382, %v1632
        %vm1643 = vcmp.gt.f32.partialorder %v1383, %v1632
        %vm1644 = vcmp.gt.f32.partialorder %v1384, %v1632
        %vm1645 = vcmp.gt.f32.partialorder %v1385, %v1632
        %vm1646 = vcmp.gt.f32.partialorder %v1386, %v1633
        %vm1647 = vcmp.gt.f32.partialorder %v1387, %v1633
        %vm1648 = vcmp.gt.f32.partialorder %v1388, %v1633
        %vm1649 = vcmp.gt.f32.partialorder %v1389, %v1633
        %v1650 = vsel %vm1634, 1.0, 0.0
        %v1651 = vsel %vm1635, 1.0, 0.0
        %v1652 = vsel %vm1636, 1.0, 0.0
        %v1653 = vsel %vm1637, 1.0, 0.0
        %v1654 = vsel %vm1638, 1.0, 0.0
        %v1655 = vsel %vm1639, 1.0, 0.0
        %v1656 = vsel %vm1640, 1.0, 0.0
        %v1657 = vsel %vm1641, 1.0, 0.0
        %v1658 = vsel %vm1642, 1.0, 0.0
        %v1659 = vsel %vm1643, 1.0, 0.0
        %v1660 = vsel %vm1644, 1.0, 0.0
        %v1661 = vsel %vm1645, 1.0, 0.0
        %v1662 = vsel %vm1646, 1.0, 0.0
        %v1663 = vsel %vm1647, 1.0, 0.0
        %v1664 = vsel %vm1648, 1.0, 0.0
        %v1665 = vsel %vm1649, 1.0, 0.0
        %v1666 = vadd.f32 %v1650, %v1651
        %v1667 = vadd.f32 %v1666, %v1652
        %v1668 = vadd.f32 %v1667, %v1653
        %1669 = vadd.xlane.f32.xlu0 %v1668
        %v1670 = vpop.xlane.xlu0 %1669
        %v1671 = vadd.f32 %v1654, %v1655
        %v1672 = vadd.f32 %v1671, %v1656
        %v1673 = vadd.f32 %v1672, %v1657
        %1674 = vadd.xlane.f32.xlu0 %v1673
        %v1675 = vpop.xlane.xlu0 %1674
        %v1676 = vadd.f32 %v1658, %v1659
        %v1677 = vadd.f32 %v1676, %v1660
        %v1678 = vadd.f32 %v1677, %v1661
        %1679 = vadd.xlane.f32.xlu0 %v1678
        %v1680 = vpop.xlane.xlu0 %1679
        %v1681 = vadd.f32 %v1662, %v1663
        %v1682 = vadd.f32 %v1681, %v1664
        %v1683 = vadd.f32 %v1682, %v1665
        %1684 = vadd.xlane.f32.xlu0 %v1683
        %v1685 = vpop.xlane.xlu0 %1684
        %vm1686 = vcmp.ge.f32.partialorder %v1670, 200.0
        %vm1687 = vcmp.ge.f32.partialorder %v1675, 200.0
        %vm1688 = vcmp.ge.f32.partialorder %v1680, 200.0
        %vm1689 = vcmp.ge.f32.partialorder %v1685, 200.0
        %v1690 = vsel %vm1686, %v1630, %v1618
        %v1691 = vsel %vm1687, %v1631, %v1619
        %v1692 = vsel %vm1688, %v1632, %v1620
        %v1693 = vsel %vm1689, %v1633, %v1621
        %v1694 = vsel %vm1686, %v1622, %v1630
        %v1695 = vsel %vm1687, %v1623, %v1631
        %v1696 = vsel %vm1688, %v1624, %v1632
        %v1697 = vsel %vm1689, %v1625, %v1633
        %v1698 = vadd.f32 %v1690, %v1694
        %v1699 = vadd.f32 %v1691, %v1695
        %v1700 = vadd.f32 %v1692, %v1696
        %v1701 = vadd.f32 %v1693, %v1697
        %v1702 = vmul.f32 %v1698, 0.5
        %v1703 = vmul.f32 %v1699, 0.5
        %v1704 = vmul.f32 %v1700, 0.5
        %v1705 = vmul.f32 %v1701, 0.5
        %vm1706 = vcmp.gt.f32.partialorder %v1374, %v1702
        %vm1707 = vcmp.gt.f32.partialorder %v1375, %v1702
        %vm1708 = vcmp.gt.f32.partialorder %v1376, %v1702
        %vm1709 = vcmp.gt.f32.partialorder %v1377, %v1702
        %vm1710 = vcmp.gt.f32.partialorder %v1378, %v1703
        %vm1711 = vcmp.gt.f32.partialorder %v1379, %v1703
        %vm1712 = vcmp.gt.f32.partialorder %v1380, %v1703
        %vm1713 = vcmp.gt.f32.partialorder %v1381, %v1703
        %vm1714 = vcmp.gt.f32.partialorder %v1382, %v1704
        %vm1715 = vcmp.gt.f32.partialorder %v1383, %v1704
        %vm1716 = vcmp.gt.f32.partialorder %v1384, %v1704
        %vm1717 = vcmp.gt.f32.partialorder %v1385, %v1704
        %vm1718 = vcmp.gt.f32.partialorder %v1386, %v1705
        %vm1719 = vcmp.gt.f32.partialorder %v1387, %v1705
        %vm1720 = vcmp.gt.f32.partialorder %v1388, %v1705
        %vm1721 = vcmp.gt.f32.partialorder %v1389, %v1705
        %v1722 = vsel %vm1706, 1.0, 0.0
        %v1723 = vsel %vm1707, 1.0, 0.0
        %v1724 = vsel %vm1708, 1.0, 0.0
        %v1725 = vsel %vm1709, 1.0, 0.0
        %v1726 = vsel %vm1710, 1.0, 0.0
        %v1727 = vsel %vm1711, 1.0, 0.0
        %v1728 = vsel %vm1712, 1.0, 0.0
        %v1729 = vsel %vm1713, 1.0, 0.0
        %v1730 = vsel %vm1714, 1.0, 0.0
        %v1731 = vsel %vm1715, 1.0, 0.0
        %v1732 = vsel %vm1716, 1.0, 0.0
        %v1733 = vsel %vm1717, 1.0, 0.0
        %v1734 = vsel %vm1718, 1.0, 0.0
        %v1735 = vsel %vm1719, 1.0, 0.0
        %v1736 = vsel %vm1720, 1.0, 0.0
        %v1737 = vsel %vm1721, 1.0, 0.0
        %v1738 = vadd.f32 %v1722, %v1723
        %v1739 = vadd.f32 %v1738, %v1724
        %v1740 = vadd.f32 %v1739, %v1725
        %1741 = vadd.xlane.f32.xlu0 %v1740
        %v1742 = vpop.xlane.xlu0 %1741
        %v1743 = vadd.f32 %v1726, %v1727
        %v1744 = vadd.f32 %v1743, %v1728
        %v1745 = vadd.f32 %v1744, %v1729
        %1746 = vadd.xlane.f32.xlu0 %v1745
        %v1747 = vpop.xlane.xlu0 %1746
        %v1748 = vadd.f32 %v1730, %v1731
        %v1749 = vadd.f32 %v1748, %v1732
        %v1750 = vadd.f32 %v1749, %v1733
        %1751 = vadd.xlane.f32.xlu0 %v1750
        %v1752 = vpop.xlane.xlu0 %1751
        %v1753 = vadd.f32 %v1734, %v1735
        %v1754 = vadd.f32 %v1753, %v1736
        %v1755 = vadd.f32 %v1754, %v1737
        %1756 = vadd.xlane.f32.xlu0 %v1755
        %v1757 = vpop.xlane.xlu0 %1756
        %vm1758 = vcmp.ge.f32.partialorder %v1742, 200.0
        %vm1759 = vcmp.ge.f32.partialorder %v1747, 200.0
        %vm1760 = vcmp.ge.f32.partialorder %v1752, 200.0
        %vm1761 = vcmp.ge.f32.partialorder %v1757, 200.0
        %v1762 = vsel %vm1758, %v1702, %v1690
        %v1763 = vsel %vm1759, %v1703, %v1691
        %v1764 = vsel %vm1760, %v1704, %v1692
        %v1765 = vsel %vm1761, %v1705, %v1693
        %v1766 = vsel %vm1758, %v1694, %v1702
        %v1767 = vsel %vm1759, %v1695, %v1703
        %v1768 = vsel %vm1760, %v1696, %v1704
        %v1769 = vsel %vm1761, %v1697, %v1705
        %v1770 = vadd.f32 %v1762, %v1766
        %v1771 = vadd.f32 %v1763, %v1767
        %v1772 = vadd.f32 %v1764, %v1768
        %v1773 = vadd.f32 %v1765, %v1769
        %v1774 = vmul.f32 %v1770, 0.5
        %v1775 = vmul.f32 %v1771, 0.5
        %v1776 = vmul.f32 %v1772, 0.5
        %v1777 = vmul.f32 %v1773, 0.5
        %vm1778 = vcmp.gt.f32.partialorder %v1374, %v1774
        %vm1779 = vcmp.gt.f32.partialorder %v1375, %v1774
        %vm1780 = vcmp.gt.f32.partialorder %v1376, %v1774
        %vm1781 = vcmp.gt.f32.partialorder %v1377, %v1774
        %vm1782 = vcmp.gt.f32.partialorder %v1378, %v1775
        %vm1783 = vcmp.gt.f32.partialorder %v1379, %v1775
        %vm1784 = vcmp.gt.f32.partialorder %v1380, %v1775
        %vm1785 = vcmp.gt.f32.partialorder %v1381, %v1775
        %vm1786 = vcmp.gt.f32.partialorder %v1382, %v1776
        %vm1787 = vcmp.gt.f32.partialorder %v1383, %v1776
        %vm1788 = vcmp.gt.f32.partialorder %v1384, %v1776
        %vm1789 = vcmp.gt.f32.partialorder %v1385, %v1776
        %vm1790 = vcmp.gt.f32.partialorder %v1386, %v1777
        %vm1791 = vcmp.gt.f32.partialorder %v1387, %v1777
        %vm1792 = vcmp.gt.f32.partialorder %v1388, %v1777
        %vm1793 = vcmp.gt.f32.partialorder %v1389, %v1777
        %v1794 = vsel %vm1778, 1.0, 0.0
        %v1795 = vsel %vm1779, 1.0, 0.0
        %v1796 = vsel %vm1780, 1.0, 0.0
        %v1797 = vsel %vm1781, 1.0, 0.0
        %v1798 = vsel %vm1782, 1.0, 0.0
        %v1799 = vsel %vm1783, 1.0, 0.0
        %v1800 = vsel %vm1784, 1.0, 0.0
        %v1801 = vsel %vm1785, 1.0, 0.0
        %v1802 = vsel %vm1786, 1.0, 0.0
        %v1803 = vsel %vm1787, 1.0, 0.0
        %v1804 = vsel %vm1788, 1.0, 0.0
        %v1805 = vsel %vm1789, 1.0, 0.0
        %v1806 = vsel %vm1790, 1.0, 0.0
        %v1807 = vsel %vm1791, 1.0, 0.0
        %v1808 = vsel %vm1792, 1.0, 0.0
        %v1809 = vsel %vm1793, 1.0, 0.0
        %v1810 = vadd.f32 %v1794, %v1795
        %v1811 = vadd.f32 %v1810, %v1796
        %v1812 = vadd.f32 %v1811, %v1797
        %1813 = vadd.xlane.f32.xlu0 %v1812
        %v1814 = vpop.xlane.xlu0 %1813
        %v1815 = vadd.f32 %v1798, %v1799
        %v1816 = vadd.f32 %v1815, %v1800
        %v1817 = vadd.f32 %v1816, %v1801
        %1818 = vadd.xlane.f32.xlu0 %v1817
        %v1819 = vpop.xlane.xlu0 %1818
        %v1820 = vadd.f32 %v1802, %v1803
        %v1821 = vadd.f32 %v1820, %v1804
        %v1822 = vadd.f32 %v1821, %v1805
        %1823 = vadd.xlane.f32.xlu0 %v1822
        %v1824 = vpop.xlane.xlu0 %1823
        %v1825 = vadd.f32 %v1806, %v1807
        %v1826 = vadd.f32 %v1825, %v1808
        %v1827 = vadd.f32 %v1826, %v1809
        %1828 = vadd.xlane.f32.xlu0 %v1827
        %v1829 = vpop.xlane.xlu0 %1828
        %vm1830 = vcmp.ge.f32.partialorder %v1814, 200.0
        %vm1831 = vcmp.ge.f32.partialorder %v1819, 200.0
        %vm1832 = vcmp.ge.f32.partialorder %v1824, 200.0
        %vm1833 = vcmp.ge.f32.partialorder %v1829, 200.0
        %v1834 = vsel %vm1830, %v1774, %v1762
        %v1835 = vsel %vm1831, %v1775, %v1763
        %v1836 = vsel %vm1832, %v1776, %v1764
        %v1837 = vsel %vm1833, %v1777, %v1765
        %v1838 = vsel %vm1830, %v1766, %v1774
        %v1839 = vsel %vm1831, %v1767, %v1775
        %v1840 = vsel %vm1832, %v1768, %v1776
        %v1841 = vsel %vm1833, %v1769, %v1777
        %v1842 = vadd.f32 %v1834, %v1838
        %v1843 = vadd.f32 %v1835, %v1839
        %v1844 = vadd.f32 %v1836, %v1840
        %v1845 = vadd.f32 %v1837, %v1841
        %v1846 = vmul.f32 %v1842, 0.5
        %v1847 = vmul.f32 %v1843, 0.5
        %v1848 = vmul.f32 %v1844, 0.5
        %v1849 = vmul.f32 %v1845, 0.5
        %vm1850 = vcmp.gt.f32.partialorder %v1374, %v1846
        %vm1851 = vcmp.gt.f32.partialorder %v1375, %v1846
        %vm1852 = vcmp.gt.f32.partialorder %v1376, %v1846
        %vm1853 = vcmp.gt.f32.partialorder %v1377, %v1846
        %vm1854 = vcmp.gt.f32.partialorder %v1378, %v1847
        %vm1855 = vcmp.gt.f32.partialorder %v1379, %v1847
        %vm1856 = vcmp.gt.f32.partialorder %v1380, %v1847
        %vm1857 = vcmp.gt.f32.partialorder %v1381, %v1847
        %vm1858 = vcmp.gt.f32.partialorder %v1382, %v1848
        %vm1859 = vcmp.gt.f32.partialorder %v1383, %v1848
        %vm1860 = vcmp.gt.f32.partialorder %v1384, %v1848
        %vm1861 = vcmp.gt.f32.partialorder %v1385, %v1848
        %vm1862 = vcmp.gt.f32.partialorder %v1386, %v1849
        %vm1863 = vcmp.gt.f32.partialorder %v1387, %v1849
        %vm1864 = vcmp.gt.f32.partialorder %v1388, %v1849
        %vm1865 = vcmp.gt.f32.partialorder %v1389, %v1849
        %v1866 = vsel %vm1850, 1.0, 0.0
        %v1867 = vsel %vm1851, 1.0, 0.0
        %v1868 = vsel %vm1852, 1.0, 0.0
        %v1869 = vsel %vm1853, 1.0, 0.0
        %v1870 = vsel %vm1854, 1.0, 0.0
        %v1871 = vsel %vm1855, 1.0, 0.0
        %v1872 = vsel %vm1856, 1.0, 0.0
        %v1873 = vsel %vm1857, 1.0, 0.0
        %v1874 = vsel %vm1858, 1.0, 0.0
        %v1875 = vsel %vm1859, 1.0, 0.0
        %v1876 = vsel %vm1860, 1.0, 0.0
        %v1877 = vsel %vm1861, 1.0, 0.0
        %v1878 = vsel %vm1862, 1.0, 0.0
        %v1879 = vsel %vm1863, 1.0, 0.0
        %v1880 = vsel %vm1864, 1.0, 0.0
        %v1881 = vsel %vm1865, 1.0, 0.0
        %v1882 = vadd.f32 %v1866, %v1867
        %v1883 = vadd.f32 %v1882, %v1868
        %v1884 = vadd.f32 %v1883, %v1869
        %1885 = vadd.xlane.f32.xlu0 %v1884
        %v1886 = vpop.xlane.xlu0 %1885
        %v1887 = vadd.f32 %v1870, %v1871
        %v1888 = vadd.f32 %v1887, %v1872
        %v1889 = vadd.f32 %v1888, %v1873
        %1890 = vadd.xlane.f32.xlu0 %v1889
        %v1891 = vpop.xlane.xlu0 %1890
        %v1892 = vadd.f32 %v1874, %v1875
        %v1893 = vadd.f32 %v1892, %v1876
        %v1894 = vadd.f32 %v1893, %v1877
        %1895 = vadd.xlane.f32.xlu0 %v1894
        %v1896 = vpop.xlane.xlu0 %1895
        %v1897 = vadd.f32 %v1878, %v1879
        %v1898 = vadd.f32 %v1897, %v1880
        %v1899 = vadd.f32 %v1898, %v1881
        %1900 = vadd.xlane.f32.xlu0 %v1899
        %v1901 = vpop.xlane.xlu0 %1900
        %vm1902 = vcmp.ge.f32.partialorder %v1886, 200.0
        %vm1903 = vcmp.ge.f32.partialorder %v1891, 200.0
        %vm1904 = vcmp.ge.f32.partialorder %v1896, 200.0
        %vm1905 = vcmp.ge.f32.partialorder %v1901, 200.0
        %v1906 = vsel %vm1902, %v1846, %v1834
        %v1907 = vsel %vm1903, %v1847, %v1835
        %v1908 = vsel %vm1904, %v1848, %v1836
        %v1909 = vsel %vm1905, %v1849, %v1837
        %v1910 = vsel %vm1902, %v1838, %v1846
        %v1911 = vsel %vm1903, %v1839, %v1847
        %v1912 = vsel %vm1904, %v1840, %v1848
        %v1913 = vsel %vm1905, %v1841, %v1849
        %v1914 = vadd.f32 %v1906, %v1910
        %v1915 = vadd.f32 %v1907, %v1911
        %v1916 = vadd.f32 %v1908, %v1912
        %v1917 = vadd.f32 %v1909, %v1913
        %v1918 = vmul.f32 %v1914, 0.5
        %v1919 = vmul.f32 %v1915, 0.5
        %v1920 = vmul.f32 %v1916, 0.5
        %v1921 = vmul.f32 %v1917, 0.5
        %vm1922 = vcmp.gt.f32.partialorder %v1374, %v1918
        %vm1923 = vcmp.gt.f32.partialorder %v1375, %v1918
        %vm1924 = vcmp.gt.f32.partialorder %v1376, %v1918
        %vm1925 = vcmp.gt.f32.partialorder %v1377, %v1918
        %vm1926 = vcmp.gt.f32.partialorder %v1378, %v1919
        %vm1927 = vcmp.gt.f32.partialorder %v1379, %v1919
        %vm1928 = vcmp.gt.f32.partialorder %v1380, %v1919
        %vm1929 = vcmp.gt.f32.partialorder %v1381, %v1919
        %vm1930 = vcmp.gt.f32.partialorder %v1382, %v1920
        %vm1931 = vcmp.gt.f32.partialorder %v1383, %v1920
        %vm1932 = vcmp.gt.f32.partialorder %v1384, %v1920
        %vm1933 = vcmp.gt.f32.partialorder %v1385, %v1920
        %vm1934 = vcmp.gt.f32.partialorder %v1386, %v1921
        %vm1935 = vcmp.gt.f32.partialorder %v1387, %v1921
        %vm1936 = vcmp.gt.f32.partialorder %v1388, %v1921
        %vm1937 = vcmp.gt.f32.partialorder %v1389, %v1921
        %v1938 = vsel %vm1922, 1.0, 0.0
        %v1939 = vsel %vm1923, 1.0, 0.0
        %v1940 = vsel %vm1924, 1.0, 0.0
        %v1941 = vsel %vm1925, 1.0, 0.0
        %v1942 = vsel %vm1926, 1.0, 0.0
        %v1943 = vsel %vm1927, 1.0, 0.0
        %v1944 = vsel %vm1928, 1.0, 0.0
        %v1945 = vsel %vm1929, 1.0, 0.0
        %v1946 = vsel %vm1930, 1.0, 0.0
        %v1947 = vsel %vm1931, 1.0, 0.0
        %v1948 = vsel %vm1932, 1.0, 0.0
        %v1949 = vsel %vm1933, 1.0, 0.0
        %v1950 = vsel %vm1934, 1.0, 0.0
        %v1951 = vsel %vm1935, 1.0, 0.0
        %v1952 = vsel %vm1936, 1.0, 0.0
        %v1953 = vsel %vm1937, 1.0, 0.0
        %v1954 = vadd.f32 %v1938, %v1939
        %v1955 = vadd.f32 %v1954, %v1940
        %v1956 = vadd.f32 %v1955, %v1941
        %1957 = vadd.xlane.f32.xlu0 %v1956
        %v1958 = vpop.xlane.xlu0 %1957
        %v1959 = vadd.f32 %v1942, %v1943
        %v1960 = vadd.f32 %v1959, %v1944
        %v1961 = vadd.f32 %v1960, %v1945
        %1962 = vadd.xlane.f32.xlu0 %v1961
        %v1963 = vpop.xlane.xlu0 %1962
        %v1964 = vadd.f32 %v1946, %v1947
        %v1965 = vadd.f32 %v1964, %v1948
        %v1966 = vadd.f32 %v1965, %v1949
        %1967 = vadd.xlane.f32.xlu0 %v1966
        %v1968 = vpop.xlane.xlu0 %1967
        %v1969 = vadd.f32 %v1950, %v1951
        %v1970 = vadd.f32 %v1969, %v1952
        %v1971 = vadd.f32 %v1970, %v1953
        %1972 = vadd.xlane.f32.xlu0 %v1971
        %v1973 = vpop.xlane.xlu0 %1972
        %vm1974 = vcmp.ge.f32.partialorder %v1958, 200.0
        %vm1975 = vcmp.ge.f32.partialorder %v1963, 200.0
        %vm1976 = vcmp.ge.f32.partialorder %v1968, 200.0
        %vm1977 = vcmp.ge.f32.partialorder %v1973, 200.0
        %v1978 = vsel %vm1974, %v1918, %v1906
        %v1979 = vsel %vm1975, %v1919, %v1907
        %v1980 = vsel %vm1976, %v1920, %v1908
        %v1981 = vsel %vm1977, %v1921, %v1909
        %v1982 = vsel %vm1974, %v1910, %v1918
        %v1983 = vsel %vm1975, %v1911, %v1919
        %v1984 = vsel %vm1976, %v1912, %v1920
        %v1985 = vsel %vm1977, %v1913, %v1921
        %v1986 = vadd.f32 %v1978, %v1982
        %v1987 = vadd.f32 %v1979, %v1983
        %v1988 = vadd.f32 %v1980, %v1984
        %v1989 = vadd.f32 %v1981, %v1985
        %v1990 = vmul.f32 %v1986, 0.5
        %v1991 = vmul.f32 %v1987, 0.5
        %v1992 = vmul.f32 %v1988, 0.5
        %v1993 = vmul.f32 %v1989, 0.5
        %vm1994 = vcmp.gt.f32.partialorder %v1374, %v1990
        %vm1995 = vcmp.gt.f32.partialorder %v1375, %v1990
        %vm1996 = vcmp.gt.f32.partialorder %v1376, %v1990
        %vm1997 = vcmp.gt.f32.partialorder %v1377, %v1990
        %vm1998 = vcmp.gt.f32.partialorder %v1378, %v1991
        %vm1999 = vcmp.gt.f32.partialorder %v1379, %v1991
        %vm2000 = vcmp.gt.f32.partialorder %v1380, %v1991
        %vm2001 = vcmp.gt.f32.partialorder %v1381, %v1991
        %vm2002 = vcmp.gt.f32.partialorder %v1382, %v1992
        %vm2003 = vcmp.gt.f32.partialorder %v1383, %v1992
        %vm2004 = vcmp.gt.f32.partialorder %v1384, %v1992
        %vm2005 = vcmp.gt.f32.partialorder %v1385, %v1992
        %vm2006 = vcmp.gt.f32.partialorder %v1386, %v1993
        %vm2007 = vcmp.gt.f32.partialorder %v1387, %v1993
        %vm2008 = vcmp.gt.f32.partialorder %v1388, %v1993
        %vm2009 = vcmp.gt.f32.partialorder %v1389, %v1993
        %v2010 = vsel %vm1994, 1.0, 0.0
        %v2011 = vsel %vm1995, 1.0, 0.0
        %v2012 = vsel %vm1996, 1.0, 0.0
        %v2013 = vsel %vm1997, 1.0, 0.0
        %v2014 = vsel %vm1998, 1.0, 0.0
        %v2015 = vsel %vm1999, 1.0, 0.0
        %v2016 = vsel %vm2000, 1.0, 0.0
        %v2017 = vsel %vm2001, 1.0, 0.0
        %v2018 = vsel %vm2002, 1.0, 0.0
        %v2019 = vsel %vm2003, 1.0, 0.0
        %v2020 = vsel %vm2004, 1.0, 0.0
        %v2021 = vsel %vm2005, 1.0, 0.0
        %v2022 = vsel %vm2006, 1.0, 0.0
        %v2023 = vsel %vm2007, 1.0, 0.0
        %v2024 = vsel %vm2008, 1.0, 0.0
        %v2025 = vsel %vm2009, 1.0, 0.0
        %v2026 = vadd.f32 %v2010, %v2011
        %v2027 = vadd.f32 %v2026, %v2012
        %v2028 = vadd.f32 %v2027, %v2013
        %2029 = vadd.xlane.f32.xlu0 %v2028
        %v2030 = vpop.xlane.xlu0 %2029
        %v2031 = vadd.f32 %v2014, %v2015
        %v2032 = vadd.f32 %v2031, %v2016
        %v2033 = vadd.f32 %v2032, %v2017
        %2034 = vadd.xlane.f32.xlu0 %v2033
        %v2035 = vpop.xlane.xlu0 %2034
        %v2036 = vadd.f32 %v2018, %v2019
        %v2037 = vadd.f32 %v2036, %v2020
        %v2038 = vadd.f32 %v2037, %v2021
        %2039 = vadd.xlane.f32.xlu0 %v2038
        %v2040 = vpop.xlane.xlu0 %2039
        %v2041 = vadd.f32 %v2022, %v2023
        %v2042 = vadd.f32 %v2041, %v2024
        %v2043 = vadd.f32 %v2042, %v2025
        %2044 = vadd.xlane.f32.xlu0 %v2043
        %v2045 = vpop.xlane.xlu0 %2044
        %vm2046 = vcmp.ge.f32.partialorder %v2030, 200.0
        %vm2047 = vcmp.ge.f32.partialorder %v2035, 200.0
        %vm2048 = vcmp.ge.f32.partialorder %v2040, 200.0
        %vm2049 = vcmp.ge.f32.partialorder %v2045, 200.0
        %v2050 = vsel %vm2046, %v1990, %v1978
        %v2051 = vsel %vm2047, %v1991, %v1979
        %v2052 = vsel %vm2048, %v1992, %v1980
        %v2053 = vsel %vm2049, %v1993, %v1981
        %v2054 = vsel %vm2046, %v1982, %v1990
        %v2055 = vsel %vm2047, %v1983, %v1991
        %v2056 = vsel %vm2048, %v1984, %v1992
        %v2057 = vsel %vm2049, %v1985, %v1993
        %v2058 = vadd.f32 %v2050, %v2054
        %v2059 = vadd.f32 %v2051, %v2055
        %v2060 = vadd.f32 %v2052, %v2056
        %v2061 = vadd.f32 %v2053, %v2057
        %v2062 = vmul.f32 %v2058, 0.5
        %v2063 = vmul.f32 %v2059, 0.5
        %v2064 = vmul.f32 %v2060, 0.5
        %v2065 = vmul.f32 %v2061, 0.5
        %vm2066 = vcmp.gt.f32.partialorder %v1374, %v2062
        %vm2067 = vcmp.gt.f32.partialorder %v1375, %v2062
        %vm2068 = vcmp.gt.f32.partialorder %v1376, %v2062
        %vm2069 = vcmp.gt.f32.partialorder %v1377, %v2062
        %vm2070 = vcmp.gt.f32.partialorder %v1378, %v2063
        %vm2071 = vcmp.gt.f32.partialorder %v1379, %v2063
        %vm2072 = vcmp.gt.f32.partialorder %v1380, %v2063
        %vm2073 = vcmp.gt.f32.partialorder %v1381, %v2063
        %vm2074 = vcmp.gt.f32.partialorder %v1382, %v2064
        %vm2075 = vcmp.gt.f32.partialorder %v1383, %v2064
        %vm2076 = vcmp.gt.f32.partialorder %v1384, %v2064
        %vm2077 = vcmp.gt.f32.partialorder %v1385, %v2064
        %vm2078 = vcmp.gt.f32.partialorder %v1386, %v2065
        %vm2079 = vcmp.gt.f32.partialorder %v1387, %v2065
        %vm2080 = vcmp.gt.f32.partialorder %v1388, %v2065
        %vm2081 = vcmp.gt.f32.partialorder %v1389, %v2065
        %v2082 = vsel %vm2066, 1.0, 0.0
        %v2083 = vsel %vm2067, 1.0, 0.0
        %v2084 = vsel %vm2068, 1.0, 0.0
        %v2085 = vsel %vm2069, 1.0, 0.0
        %v2086 = vsel %vm2070, 1.0, 0.0
        %v2087 = vsel %vm2071, 1.0, 0.0
        %v2088 = vsel %vm2072, 1.0, 0.0
        %v2089 = vsel %vm2073, 1.0, 0.0
        %v2090 = vsel %vm2074, 1.0, 0.0
        %v2091 = vsel %vm2075, 1.0, 0.0
        %v2092 = vsel %vm2076, 1.0, 0.0
        %v2093 = vsel %vm2077, 1.0, 0.0
        %v2094 = vsel %vm2078, 1.0, 0.0
        %v2095 = vsel %vm2079, 1.0, 0.0
        %v2096 = vsel %vm2080, 1.0, 0.0
        %v2097 = vsel %vm2081, 1.0, 0.0
        %v2098 = vadd.f32 %v2082, %v2083
        %v2099 = vadd.f32 %v2098, %v2084
        %v2100 = vadd.f32 %v2099, %v2085
        %2101 = vadd.xlane.f32.xlu0 %v2100
        %v2102 = vpop.xlane.xlu0 %2101
        %v2103 = vadd.f32 %v2086, %v2087
        %v2104 = vadd.f32 %v2103, %v2088
        %v2105 = vadd.f32 %v2104, %v2089
        %2106 = vadd.xlane.f32.xlu0 %v2105
        %v2107 = vpop.xlane.xlu0 %2106
        %v2108 = vadd.f32 %v2090, %v2091
        %v2109 = vadd.f32 %v2108, %v2092
        %v2110 = vadd.f32 %v2109, %v2093
        %2111 = vadd.xlane.f32.xlu0 %v2110
        %v2112 = vpop.xlane.xlu0 %2111
        %v2113 = vadd.f32 %v2094, %v2095
        %v2114 = vadd.f32 %v2113, %v2096
        %v2115 = vadd.f32 %v2114, %v2097
        %2116 = vadd.xlane.f32.xlu0 %v2115
        %v2117 = vpop.xlane.xlu0 %2116
        %vm2118 = vcmp.ge.f32.partialorder %v2102, 200.0
        %vm2119 = vcmp.ge.f32.partialorder %v2107, 200.0
        %vm2120 = vcmp.ge.f32.partialorder %v2112, 200.0
        %vm2121 = vcmp.ge.f32.partialorder %v2117, 200.0
        %v2122 = vsel %vm2118, %v2062, %v2050
        %v2123 = vsel %vm2119, %v2063, %v2051
        %v2124 = vsel %vm2120, %v2064, %v2052
        %v2125 = vsel %vm2121, %v2065, %v2053
        %v2126 = vsel %vm2118, %v2054, %v2062
        %v2127 = vsel %vm2119, %v2055, %v2063
        %v2128 = vsel %vm2120, %v2056, %v2064
        %v2129 = vsel %vm2121, %v2057, %v2065
        %v2130 = vadd.f32 %v2122, %v2126
        %v2131 = vadd.f32 %v2123, %v2127
        %v2132 = vadd.f32 %v2124, %v2128
        %v2133 = vadd.f32 %v2125, %v2129
        %v2134 = vmul.f32 %v2130, 0.5
        %v2135 = vmul.f32 %v2131, 0.5
        %v2136 = vmul.f32 %v2132, 0.5
        %v2137 = vmul.f32 %v2133, 0.5
        %vm2138 = vcmp.gt.f32.partialorder %v1374, %v2134
        %vm2139 = vcmp.gt.f32.partialorder %v1375, %v2134
        %vm2140 = vcmp.gt.f32.partialorder %v1376, %v2134
        %vm2141 = vcmp.gt.f32.partialorder %v1377, %v2134
        %vm2142 = vcmp.gt.f32.partialorder %v1378, %v2135
        %vm2143 = vcmp.gt.f32.partialorder %v1379, %v2135
        %vm2144 = vcmp.gt.f32.partialorder %v1380, %v2135
        %vm2145 = vcmp.gt.f32.partialorder %v1381, %v2135
        %vm2146 = vcmp.gt.f32.partialorder %v1382, %v2136
        %vm2147 = vcmp.gt.f32.partialorder %v1383, %v2136
        %vm2148 = vcmp.gt.f32.partialorder %v1384, %v2136
        %vm2149 = vcmp.gt.f32.partialorder %v1385, %v2136
        %vm2150 = vcmp.gt.f32.partialorder %v1386, %v2137
        %vm2151 = vcmp.gt.f32.partialorder %v1387, %v2137
        %vm2152 = vcmp.gt.f32.partialorder %v1388, %v2137
        %vm2153 = vcmp.gt.f32.partialorder %v1389, %v2137
        %v2154 = vsel %vm2138, 1.0, 0.0
        %v2155 = vsel %vm2139, 1.0, 0.0
        %v2156 = vsel %vm2140, 1.0, 0.0
        %v2157 = vsel %vm2141, 1.0, 0.0
        %v2158 = vsel %vm2142, 1.0, 0.0
        %v2159 = vsel %vm2143, 1.0, 0.0
        %v2160 = vsel %vm2144, 1.0, 0.0
        %v2161 = vsel %vm2145, 1.0, 0.0
        %v2162 = vsel %vm2146, 1.0, 0.0
        %v2163 = vsel %vm2147, 1.0, 0.0
        %v2164 = vsel %vm2148, 1.0, 0.0
        %v2165 = vsel %vm2149, 1.0, 0.0
        %v2166 = vsel %vm2150, 1.0, 0.0
        %v2167 = vsel %vm2151, 1.0, 0.0
        %v2168 = vsel %vm2152, 1.0, 0.0
        %v2169 = vsel %vm2153, 1.0, 0.0
        %v2170 = vadd.f32 %v2154, %v2155
        %v2171 = vadd.f32 %v2170, %v2156
        %v2172 = vadd.f32 %v2171, %v2157
        %2173 = vadd.xlane.f32.xlu0 %v2172
        %v2174 = vpop.xlane.xlu0 %2173
        %v2175 = vadd.f32 %v2158, %v2159
        %v2176 = vadd.f32 %v2175, %v2160
        %v2177 = vadd.f32 %v2176, %v2161
        %2178 = vadd.xlane.f32.xlu0 %v2177
        %v2179 = vpop.xlane.xlu0 %2178
        %v2180 = vadd.f32 %v2162, %v2163
        %v2181 = vadd.f32 %v2180, %v2164
        %v2182 = vadd.f32 %v2181, %v2165
        %2183 = vadd.xlane.f32.xlu0 %v2182
        %v2184 = vpop.xlane.xlu0 %2183
        %v2185 = vadd.f32 %v2166, %v2167
        %v2186 = vadd.f32 %v2185, %v2168
        %v2187 = vadd.f32 %v2186, %v2169
        %2188 = vadd.xlane.f32.xlu0 %v2187
        %v2189 = vpop.xlane.xlu0 %2188
        %vm2190 = vcmp.ge.f32.partialorder %v2174, 200.0
        %vm2191 = vcmp.ge.f32.partialorder %v2179, 200.0
        %vm2192 = vcmp.ge.f32.partialorder %v2184, 200.0
        %vm2193 = vcmp.ge.f32.partialorder %v2189, 200.0
        %v2194 = vsel %vm2190, %v2134, %v2122
        %v2195 = vsel %vm2191, %v2135, %v2123
        %v2196 = vsel %vm2192, %v2136, %v2124
        %v2197 = vsel %vm2193, %v2137, %v2125
        %v2198 = vsel %vm2190, %v2126, %v2134
        %v2199 = vsel %vm2191, %v2127, %v2135
        %v2200 = vsel %vm2192, %v2128, %v2136
        %v2201 = vsel %vm2193, %v2129, %v2137
        %v2202 = vadd.f32 %v2194, %v2198
        %v2203 = vadd.f32 %v2195, %v2199
        %v2204 = vadd.f32 %v2196, %v2200
        %v2205 = vadd.f32 %v2197, %v2201
        %v2206 = vmul.f32 %v2202, 0.5
        %v2207 = vmul.f32 %v2203, 0.5
        %v2208 = vmul.f32 %v2204, 0.5
        %v2209 = vmul.f32 %v2205, 0.5
        %vm2210 = vcmp.gt.f32.partialorder %v1374, %v2206
        %vm2211 = vcmp.gt.f32.partialorder %v1375, %v2206
        %vm2212 = vcmp.gt.f32.partialorder %v1376, %v2206
        %vm2213 = vcmp.gt.f32.partialorder %v1377, %v2206
        %vm2214 = vcmp.gt.f32.partialorder %v1378, %v2207
        %vm2215 = vcmp.gt.f32.partialorder %v1379, %v2207
        %vm2216 = vcmp.gt.f32.partialorder %v1380, %v2207
        %vm2217 = vcmp.gt.f32.partialorder %v1381, %v2207
        %vm2218 = vcmp.gt.f32.partialorder %v1382, %v2208
        %vm2219 = vcmp.gt.f32.partialorder %v1383, %v2208
        %vm2220 = vcmp.gt.f32.partialorder %v1384, %v2208
        %vm2221 = vcmp.gt.f32.partialorder %v1385, %v2208
        %vm2222 = vcmp.gt.f32.partialorder %v1386, %v2209
        %vm2223 = vcmp.gt.f32.partialorder %v1387, %v2209
        %vm2224 = vcmp.gt.f32.partialorder %v1388, %v2209
        %vm2225 = vcmp.gt.f32.partialorder %v1389, %v2209
        %v2226 = vsel %vm2210, 1.0, 0.0
        %v2227 = vsel %vm2211, 1.0, 0.0
        %v2228 = vsel %vm2212, 1.0, 0.0
        %v2229 = vsel %vm2213, 1.0, 0.0
        %v2230 = vsel %vm2214, 1.0, 0.0
        %v2231 = vsel %vm2215, 1.0, 0.0
        %v2232 = vsel %vm2216, 1.0, 0.0
        %v2233 = vsel %vm2217, 1.0, 0.0
        %v2234 = vsel %vm2218, 1.0, 0.0
        %v2235 = vsel %vm2219, 1.0, 0.0
        %v2236 = vsel %vm2220, 1.0, 0.0
        %v2237 = vsel %vm2221, 1.0, 0.0
        %v2238 = vsel %vm2222, 1.0, 0.0
        %v2239 = vsel %vm2223, 1.0, 0.0
        %v2240 = vsel %vm2224, 1.0, 0.0
        %v2241 = vsel %vm2225, 1.0, 0.0
        %v2242 = vadd.f32 %v2226, %v2227
        %v2243 = vadd.f32 %v2242, %v2228
        %v2244 = vadd.f32 %v2243, %v2229
        %2245 = vadd.xlane.f32.xlu0 %v2244
        %v2246 = vpop.xlane.xlu0 %2245
        %v2247 = vadd.f32 %v2230, %v2231
        %v2248 = vadd.f32 %v2247, %v2232
        %v2249 = vadd.f32 %v2248, %v2233
        %2250 = vadd.xlane.f32.xlu0 %v2249
        %v2251 = vpop.xlane.xlu0 %2250
        %v2252 = vadd.f32 %v2234, %v2235
        %v2253 = vadd.f32 %v2252, %v2236
        %v2254 = vadd.f32 %v2253, %v2237
        %2255 = vadd.xlane.f32.xlu0 %v2254
        %v2256 = vpop.xlane.xlu0 %2255
        %v2257 = vadd.f32 %v2238, %v2239
        %v2258 = vadd.f32 %v2257, %v2240
        %v2259 = vadd.f32 %v2258, %v2241
        %2260 = vadd.xlane.f32.xlu0 %v2259
        %v2261 = vpop.xlane.xlu0 %2260
        %vm2262 = vcmp.ge.f32.partialorder %v2246, 200.0
        %vm2263 = vcmp.ge.f32.partialorder %v2251, 200.0
        %vm2264 = vcmp.ge.f32.partialorder %v2256, 200.0
        %vm2265 = vcmp.ge.f32.partialorder %v2261, 200.0
        %v2266 = vsel %vm2262, %v2206, %v2194
        %v2267 = vsel %vm2263, %v2207, %v2195
        %v2268 = vsel %vm2264, %v2208, %v2196
        %v2269 = vsel %vm2265, %v2209, %v2197
        %v2270 = vsel %vm2262, %v2198, %v2206
        %v2271 = vsel %vm2263, %v2199, %v2207
        %v2272 = vsel %vm2264, %v2200, %v2208
        %v2273 = vsel %vm2265, %v2201, %v2209
        %v2274 = vadd.f32 %v2266, %v2270
        %v2275 = vadd.f32 %v2267, %v2271
        %v2276 = vadd.f32 %v2268, %v2272
        %v2277 = vadd.f32 %v2269, %v2273
        %v2278 = vmul.f32 %v2274, 0.5
        %v2279 = vmul.f32 %v2275, 0.5
        %v2280 = vmul.f32 %v2276, 0.5
        %v2281 = vmul.f32 %v2277, 0.5
        %vm2282 = vcmp.gt.f32.partialorder %v1374, %v2278
        %vm2283 = vcmp.gt.f32.partialorder %v1375, %v2278
        %vm2284 = vcmp.gt.f32.partialorder %v1376, %v2278
        %vm2285 = vcmp.gt.f32.partialorder %v1377, %v2278
        %vm2286 = vcmp.gt.f32.partialorder %v1378, %v2279
        %vm2287 = vcmp.gt.f32.partialorder %v1379, %v2279
        %vm2288 = vcmp.gt.f32.partialorder %v1380, %v2279
        %vm2289 = vcmp.gt.f32.partialorder %v1381, %v2279
        %vm2290 = vcmp.gt.f32.partialorder %v1382, %v2280
        %vm2291 = vcmp.gt.f32.partialorder %v1383, %v2280
        %vm2292 = vcmp.gt.f32.partialorder %v1384, %v2280
        %vm2293 = vcmp.gt.f32.partialorder %v1385, %v2280
        %vm2294 = vcmp.gt.f32.partialorder %v1386, %v2281
        %vm2295 = vcmp.gt.f32.partialorder %v1387, %v2281
        %vm2296 = vcmp.gt.f32.partialorder %v1388, %v2281
        %vm2297 = vcmp.gt.f32.partialorder %v1389, %v2281
        %v2298 = vsel %vm2282, 1.0, 0.0
        %v2299 = vsel %vm2283, 1.0, 0.0
        %v2300 = vsel %vm2284, 1.0, 0.0
        %v2301 = vsel %vm2285, 1.0, 0.0
        %v2302 = vsel %vm2286, 1.0, 0.0
        %v2303 = vsel %vm2287, 1.0, 0.0
        %v2304 = vsel %vm2288, 1.0, 0.0
        %v2305 = vsel %vm2289, 1.0, 0.0
        %v2306 = vsel %vm2290, 1.0, 0.0
        %v2307 = vsel %vm2291, 1.0, 0.0
        %v2308 = vsel %vm2292, 1.0, 0.0
        %v2309 = vsel %vm2293, 1.0, 0.0
        %v2310 = vsel %vm2294, 1.0, 0.0
        %v2311 = vsel %vm2295, 1.0, 0.0
        %v2312 = vsel %vm2296, 1.0, 0.0
        %v2313 = vsel %vm2297, 1.0, 0.0
        %v2314 = vadd.f32 %v2298, %v2299
        %v2315 = vadd.f32 %v2314, %v2300
        %v2316 = vadd.f32 %v2315, %v2301
        %2317 = vadd.xlane.f32.xlu0 %v2316
        %v2318 = vpop.xlane.xlu0 %2317
        %v2319 = vadd.f32 %v2302, %v2303
        %v2320 = vadd.f32 %v2319, %v2304
        %v2321 = vadd.f32 %v2320, %v2305
        %2322 = vadd.xlane.f32.xlu0 %v2321
        %v2323 = vpop.xlane.xlu0 %2322
        %v2324 = vadd.f32 %v2306, %v2307
        %v2325 = vadd.f32 %v2324, %v2308
        %v2326 = vadd.f32 %v2325, %v2309
        %2327 = vadd.xlane.f32.xlu0 %v2326
        %v2328 = vpop.xlane.xlu0 %2327
        %v2329 = vadd.f32 %v2310, %v2311
        %v2330 = vadd.f32 %v2329, %v2312
        %v2331 = vadd.f32 %v2330, %v2313
        %2332 = vadd.xlane.f32.xlu0 %v2331
        %v2333 = vpop.xlane.xlu0 %2332
        %vm2334 = vcmp.ge.f32.partialorder %v2318, 200.0
        %vm2335 = vcmp.ge.f32.partialorder %v2323, 200.0
        %vm2336 = vcmp.ge.f32.partialorder %v2328, 200.0
        %vm2337 = vcmp.ge.f32.partialorder %v2333, 200.0
        %v2338 = vsel %vm2334, %v2278, %v2266
        %v2339 = vsel %vm2335, %v2279, %v2267
        %v2340 = vsel %vm2336, %v2280, %v2268
        %v2341 = vsel %vm2337, %v2281, %v2269
        %v2342 = vsel %vm2334, %v2270, %v2278
        %v2343 = vsel %vm2335, %v2271, %v2279
        %v2344 = vsel %vm2336, %v2272, %v2280
        %v2345 = vsel %vm2337, %v2273, %v2281
        %v2346 = vadd.f32 %v2338, %v2342
        %v2347 = vadd.f32 %v2339, %v2343
        %v2348 = vadd.f32 %v2340, %v2344
        %v2349 = vadd.f32 %v2341, %v2345
        %v2350 = vmul.f32 %v2346, 0.5
        %v2351 = vmul.f32 %v2347, 0.5
        %v2352 = vmul.f32 %v2348, 0.5
        %v2353 = vmul.f32 %v2349, 0.5
        %vm2354 = vcmp.gt.f32.partialorder %v1374, %v2350
        %vm2355 = vcmp.gt.f32.partialorder %v1375, %v2350
        %vm2356 = vcmp.gt.f32.partialorder %v1376, %v2350
        %vm2357 = vcmp.gt.f32.partialorder %v1377, %v2350
        %vm2358 = vcmp.gt.f32.partialorder %v1378, %v2351
        %vm2359 = vcmp.gt.f32.partialorder %v1379, %v2351
        %vm2360 = vcmp.gt.f32.partialorder %v1380, %v2351
        %vm2361 = vcmp.gt.f32.partialorder %v1381, %v2351
        %vm2362 = vcmp.gt.f32.partialorder %v1382, %v2352
        %vm2363 = vcmp.gt.f32.partialorder %v1383, %v2352
        %vm2364 = vcmp.gt.f32.partialorder %v1384, %v2352
        %vm2365 = vcmp.gt.f32.partialorder %v1385, %v2352
        %vm2366 = vcmp.gt.f32.partialorder %v1386, %v2353
        %vm2367 = vcmp.gt.f32.partialorder %v1387, %v2353
        %vm2368 = vcmp.gt.f32.partialorder %v1388, %v2353
        %vm2369 = vcmp.gt.f32.partialorder %v1389, %v2353
        %v2370 = vsel %vm2354, 1.0, 0.0
        %v2371 = vsel %vm2355, 1.0, 0.0
        %v2372 = vsel %vm2356, 1.0, 0.0
        %v2373 = vsel %vm2357, 1.0, 0.0
        %v2374 = vsel %vm2358, 1.0, 0.0
        %v2375 = vsel %vm2359, 1.0, 0.0
        %v2376 = vsel %vm2360, 1.0, 0.0
        %v2377 = vsel %vm2361, 1.0, 0.0
        %v2378 = vsel %vm2362, 1.0, 0.0
        %v2379 = vsel %vm2363, 1.0, 0.0
        %v2380 = vsel %vm2364, 1.0, 0.0
        %v2381 = vsel %vm2365, 1.0, 0.0
        %v2382 = vsel %vm2366, 1.0, 0.0
        %v2383 = vsel %vm2367, 1.0, 0.0
        %v2384 = vsel %vm2368, 1.0, 0.0
        %v2385 = vsel %vm2369, 1.0, 0.0
        %v2386 = vadd.f32 %v2370, %v2371
        %v2387 = vadd.f32 %v2386, %v2372
        %v2388 = vadd.f32 %v2387, %v2373
        %2389 = vadd.xlane.f32.xlu0 %v2388
        %v2390 = vpop.xlane.xlu0 %2389
        %v2391 = vadd.f32 %v2374, %v2375
        %v2392 = vadd.f32 %v2391, %v2376
        %v2393 = vadd.f32 %v2392, %v2377
        %2394 = vadd.xlane.f32.xlu0 %v2393
        %v2395 = vpop.xlane.xlu0 %2394
        %v2396 = vadd.f32 %v2378, %v2379
        %v2397 = vadd.f32 %v2396, %v2380
        %v2398 = vadd.f32 %v2397, %v2381
        %2399 = vadd.xlane.f32.xlu0 %v2398
        %v2400 = vpop.xlane.xlu0 %2399
        %v2401 = vadd.f32 %v2382, %v2383
        %v2402 = vadd.f32 %v2401, %v2384
        %v2403 = vadd.f32 %v2402, %v2385
        %2404 = vadd.xlane.f32.xlu0 %v2403
        %v2405 = vpop.xlane.xlu0 %2404
        %vm2406 = vcmp.ge.f32.partialorder %v2390, 200.0
        %vm2407 = vcmp.ge.f32.partialorder %v2395, 200.0
        %vm2408 = vcmp.ge.f32.partialorder %v2400, 200.0
        %vm2409 = vcmp.ge.f32.partialorder %v2405, 200.0
        %v2410 = vsel %vm2406, %v2350, %v2338
        %v2411 = vsel %vm2407, %v2351, %v2339
        %v2412 = vsel %vm2408, %v2352, %v2340
        %v2413 = vsel %vm2409, %v2353, %v2341
        %v2414 = vsel %vm2406, %v2342, %v2350
        %v2415 = vsel %vm2407, %v2343, %v2351
        %v2416 = vsel %vm2408, %v2344, %v2352
        %v2417 = vsel %vm2409, %v2345, %v2353
        %v2418 = vadd.f32 %v2410, %v2414
        %v2419 = vadd.f32 %v2411, %v2415
        %v2420 = vadd.f32 %v2412, %v2416
        %v2421 = vadd.f32 %v2413, %v2417
        %v2422 = vmul.f32 %v2418, 0.5
        %v2423 = vmul.f32 %v2419, 0.5
        %v2424 = vmul.f32 %v2420, 0.5
        %v2425 = vmul.f32 %v2421, 0.5
        %vm2426 = vcmp.gt.f32.partialorder %v1374, %v2422
        %vm2427 = vcmp.gt.f32.partialorder %v1375, %v2422
        %vm2428 = vcmp.gt.f32.partialorder %v1376, %v2422
        %vm2429 = vcmp.gt.f32.partialorder %v1377, %v2422
        %vm2430 = vcmp.gt.f32.partialorder %v1378, %v2423
        %vm2431 = vcmp.gt.f32.partialorder %v1379, %v2423
        %vm2432 = vcmp.gt.f32.partialorder %v1380, %v2423
        %vm2433 = vcmp.gt.f32.partialorder %v1381, %v2423
        %vm2434 = vcmp.gt.f32.partialorder %v1382, %v2424
        %vm2435 = vcmp.gt.f32.partialorder %v1383, %v2424
        %vm2436 = vcmp.gt.f32.partialorder %v1384, %v2424
        %vm2437 = vcmp.gt.f32.partialorder %v1385, %v2424
        %vm2438 = vcmp.gt.f32.partialorder %v1386, %v2425
        %vm2439 = vcmp.gt.f32.partialorder %v1387, %v2425
        %vm2440 = vcmp.gt.f32.partialorder %v1388, %v2425
        %vm2441 = vcmp.gt.f32.partialorder %v1389, %v2425
        %v2442 = vsel %vm2426, 1.0, 0.0
        %v2443 = vsel %vm2427, 1.0, 0.0
        %v2444 = vsel %vm2428, 1.0, 0.0
        %v2445 = vsel %vm2429, 1.0, 0.0
        %v2446 = vsel %vm2430, 1.0, 0.0
        %v2447 = vsel %vm2431, 1.0, 0.0
        %v2448 = vsel %vm2432, 1.0, 0.0
        %v2449 = vsel %vm2433, 1.0, 0.0
        %v2450 = vsel %vm2434, 1.0, 0.0
        %v2451 = vsel %vm2435, 1.0, 0.0
        %v2452 = vsel %vm2436, 1.0, 0.0
        %v2453 = vsel %vm2437, 1.0, 0.0
        %v2454 = vsel %vm2438, 1.0, 0.0
        %v2455 = vsel %vm2439, 1.0, 0.0
        %v2456 = vsel %vm2440, 1.0, 0.0
        %v2457 = vsel %vm2441, 1.0, 0.0
        %v2458 = vadd.f32 %v2442, %v2443
        %v2459 = vadd.f32 %v2458, %v2444
        %v2460 = vadd.f32 %v2459, %v2445
        %2461 = vadd.xlane.f32.xlu0 %v2460
        %v2462 = vpop.xlane.xlu0 %2461
        %v2463 = vadd.f32 %v2446, %v2447
        %v2464 = vadd.f32 %v2463, %v2448
        %v2465 = vadd.f32 %v2464, %v2449
        %2466 = vadd.xlane.f32.xlu0 %v2465
        %v2467 = vpop.xlane.xlu0 %2466
        %v2468 = vadd.f32 %v2450, %v2451
        %v2469 = vadd.f32 %v2468, %v2452
        %v2470 = vadd.f32 %v2469, %v2453
        %2471 = vadd.xlane.f32.xlu0 %v2470
        %v2472 = vpop.xlane.xlu0 %2471
        %v2473 = vadd.f32 %v2454, %v2455
        %v2474 = vadd.f32 %v2473, %v2456
        %v2475 = vadd.f32 %v2474, %v2457
        %2476 = vadd.xlane.f32.xlu0 %v2475
        %v2477 = vpop.xlane.xlu0 %2476
        %vm2478 = vcmp.ge.f32.partialorder %v2462, 200.0
        %vm2479 = vcmp.ge.f32.partialorder %v2467, 200.0
        %vm2480 = vcmp.ge.f32.partialorder %v2472, 200.0
        %vm2481 = vcmp.ge.f32.partialorder %v2477, 200.0
        %v2482 = vsel %vm2478, %v2422, %v2410
        %v2483 = vsel %vm2479, %v2423, %v2411
        %v2484 = vsel %vm2480, %v2424, %v2412
        %v2485 = vsel %vm2481, %v2425, %v2413
        %v2486 = vsel %vm2478, %v2414, %v2422
        %v2487 = vsel %vm2479, %v2415, %v2423
        %v2488 = vsel %vm2480, %v2416, %v2424
        %v2489 = vsel %vm2481, %v2417, %v2425
        %v2490 = vadd.f32 %v2482, %v2486
        %v2491 = vadd.f32 %v2483, %v2487
        %v2492 = vadd.f32 %v2484, %v2488
        %v2493 = vadd.f32 %v2485, %v2489
        %v2494 = vmul.f32 %v2490, 0.5
        %v2495 = vmul.f32 %v2491, 0.5
        %v2496 = vmul.f32 %v2492, 0.5
        %v2497 = vmul.f32 %v2493, 0.5
        %vm2498 = vcmp.gt.f32.partialorder %v1374, %v2494
        %vm2499 = vcmp.gt.f32.partialorder %v1375, %v2494
        %vm2500 = vcmp.gt.f32.partialorder %v1376, %v2494
        %vm2501 = vcmp.gt.f32.partialorder %v1377, %v2494
        %vm2502 = vcmp.gt.f32.partialorder %v1378, %v2495
        %vm2503 = vcmp.gt.f32.partialorder %v1379, %v2495
        %vm2504 = vcmp.gt.f32.partialorder %v1380, %v2495
        %vm2505 = vcmp.gt.f32.partialorder %v1381, %v2495
        %vm2506 = vcmp.gt.f32.partialorder %v1382, %v2496
        %vm2507 = vcmp.gt.f32.partialorder %v1383, %v2496
        %vm2508 = vcmp.gt.f32.partialorder %v1384, %v2496
        %vm2509 = vcmp.gt.f32.partialorder %v1385, %v2496
        %vm2510 = vcmp.gt.f32.partialorder %v1386, %v2497
        %vm2511 = vcmp.gt.f32.partialorder %v1387, %v2497
        %vm2512 = vcmp.gt.f32.partialorder %v1388, %v2497
        %vm2513 = vcmp.gt.f32.partialorder %v1389, %v2497
        %v2514 = vsel %vm2498, 1.0, 0.0
        %v2515 = vsel %vm2499, 1.0, 0.0
        %v2516 = vsel %vm2500, 1.0, 0.0
        %v2517 = vsel %vm2501, 1.0, 0.0
        %v2518 = vsel %vm2502, 1.0, 0.0
        %v2519 = vsel %vm2503, 1.0, 0.0
        %v2520 = vsel %vm2504, 1.0, 0.0
        %v2521 = vsel %vm2505, 1.0, 0.0
        %v2522 = vsel %vm2506, 1.0, 0.0
        %v2523 = vsel %vm2507, 1.0, 0.0
        %v2524 = vsel %vm2508, 1.0, 0.0
        %v2525 = vsel %vm2509, 1.0, 0.0
        %v2526 = vsel %vm2510, 1.0, 0.0
        %v2527 = vsel %vm2511, 1.0, 0.0
        %v2528 = vsel %vm2512, 1.0, 0.0
        %v2529 = vsel %vm2513, 1.0, 0.0
        %v2530 = vadd.f32 %v2514, %v2515
        %v2531 = vadd.f32 %v2530, %v2516
        %v2532 = vadd.f32 %v2531, %v2517
        %2533 = vadd.xlane.f32.xlu0 %v2532
        %v2534 = vpop.xlane.xlu0 %2533
        %v2535 = vadd.f32 %v2518, %v2519
        %v2536 = vadd.f32 %v2535, %v2520
        %v2537 = vadd.f32 %v2536, %v2521
        %2538 = vadd.xlane.f32.xlu0 %v2537
        %v2539 = vpop.xlane.xlu0 %2538
        %v2540 = vadd.f32 %v2522, %v2523
        %v2541 = vadd.f32 %v2540, %v2524
        %v2542 = vadd.f32 %v2541, %v2525
        %2543 = vadd.xlane.f32.xlu0 %v2542
        %v2544 = vpop.xlane.xlu0 %2543
        %v2545 = vadd.f32 %v2526, %v2527
        %v2546 = vadd.f32 %v2545, %v2528
        %v2547 = vadd.f32 %v2546, %v2529
        %2548 = vadd.xlane.f32.xlu0 %v2547
        %v2549 = vpop.xlane.xlu0 %2548
        %vm2550 = vcmp.ge.f32.partialorder %v2534, 200.0
        %vm2551 = vcmp.ge.f32.partialorder %v2539, 200.0
        %vm2552 = vcmp.ge.f32.partialorder %v2544, 200.0
        %vm2553 = vcmp.ge.f32.partialorder %v2549, 200.0
        %v2554 = vsel %vm2550, %v2494, %v2482
        %v2555 = vsel %vm2551, %v2495, %v2483
        %v2556 = vsel %vm2552, %v2496, %v2484
        %v2557 = vsel %vm2553, %v2497, %v2485
        %v2558 = vsel %vm2550, %v2486, %v2494
        %v2559 = vsel %vm2551, %v2487, %v2495
        %v2560 = vsel %vm2552, %v2488, %v2496
        %v2561 = vsel %vm2553, %v2489, %v2497
        %v2562 = vadd.f32 %v2554, %v2558
        %v2563 = vadd.f32 %v2555, %v2559
        %v2564 = vadd.f32 %v2556, %v2560
        %v2565 = vadd.f32 %v2557, %v2561
        %v2566 = vmul.f32 %v2562, 0.5
        %v2567 = vmul.f32 %v2563, 0.5
        %v2568 = vmul.f32 %v2564, 0.5
        %v2569 = vmul.f32 %v2565, 0.5
        %vm2570 = vcmp.gt.f32.partialorder %v1374, %v2566
        %vm2571 = vcmp.gt.f32.partialorder %v1375, %v2566
        %vm2572 = vcmp.gt.f32.partialorder %v1376, %v2566
        %vm2573 = vcmp.gt.f32.partialorder %v1377, %v2566
        %vm2574 = vcmp.gt.f32.partialorder %v1378, %v2567
        %vm2575 = vcmp.gt.f32.partialorder %v1379, %v2567
        %vm2576 = vcmp.gt.f32.partialorder %v1380, %v2567
        %vm2577 = vcmp.gt.f32.partialorder %v1381, %v2567
        %vm2578 = vcmp.gt.f32.partialorder %v1382, %v2568
        %vm2579 = vcmp.gt.f32.partialorder %v1383, %v2568
        %vm2580 = vcmp.gt.f32.partialorder %v1384, %v2568
        %vm2581 = vcmp.gt.f32.partialorder %v1385, %v2568
        %vm2582 = vcmp.gt.f32.partialorder %v1386, %v2569
        %vm2583 = vcmp.gt.f32.partialorder %v1387, %v2569
        %vm2584 = vcmp.gt.f32.partialorder %v1388, %v2569
        %vm2585 = vcmp.gt.f32.partialorder %v1389, %v2569
        %v2586 = vsel %vm2570, 1.0, 0.0
        %v2587 = vsel %vm2571, 1.0, 0.0
        %v2588 = vsel %vm2572, 1.0, 0.0
        %v2589 = vsel %vm2573, 1.0, 0.0
        %v2590 = vsel %vm2574, 1.0, 0.0
        %v2591 = vsel %vm2575, 1.0, 0.0
        %v2592 = vsel %vm2576, 1.0, 0.0
        %v2593 = vsel %vm2577, 1.0, 0.0
        %v2594 = vsel %vm2578, 1.0, 0.0
        %v2595 = vsel %vm2579, 1.0, 0.0
        %v2596 = vsel %vm2580, 1.0, 0.0
        %v2597 = vsel %vm2581, 1.0, 0.0
        %v2598 = vsel %vm2582, 1.0, 0.0
        %v2599 = vsel %vm2583, 1.0, 0.0
        %v2600 = vsel %vm2584, 1.0, 0.0
        %v2601 = vsel %vm2585, 1.0, 0.0
        %v2602 = vadd.f32 %v2586, %v2587
        %v2603 = vadd.f32 %v2602, %v2588
        %v2604 = vadd.f32 %v2603, %v2589
        %2605 = vadd.xlane.f32.xlu0 %v2604
        %v2606 = vpop.xlane.xlu0 %2605
        %v2607 = vadd.f32 %v2590, %v2591
        %v2608 = vadd.f32 %v2607, %v2592
        %v2609 = vadd.f32 %v2608, %v2593
        %2610 = vadd.xlane.f32.xlu0 %v2609
        %v2611 = vpop.xlane.xlu0 %2610
        %v2612 = vadd.f32 %v2594, %v2595
        %v2613 = vadd.f32 %v2612, %v2596
        %v2614 = vadd.f32 %v2613, %v2597
        %2615 = vadd.xlane.f32.xlu0 %v2614
        %v2616 = vpop.xlane.xlu0 %2615
        %v2617 = vadd.f32 %v2598, %v2599
        %v2618 = vadd.f32 %v2617, %v2600
        %v2619 = vadd.f32 %v2618, %v2601
        %2620 = vadd.xlane.f32.xlu0 %v2619
        %v2621 = vpop.xlane.xlu0 %2620
        %vm2622 = vcmp.ge.f32.partialorder %v2606, 200.0
        %vm2623 = vcmp.ge.f32.partialorder %v2611, 200.0
        %vm2624 = vcmp.ge.f32.partialorder %v2616, 200.0
        %vm2625 = vcmp.ge.f32.partialorder %v2621, 200.0
        %v2626 = vsel %vm2622, %v2566, %v2554
        %v2627 = vsel %vm2623, %v2567, %v2555
        %v2628 = vsel %vm2624, %v2568, %v2556
        %v2629 = vsel %vm2625, %v2569, %v2557
        %v2630 = vsel %vm2622, %v2558, %v2566
        %v2631 = vsel %vm2623, %v2559, %v2567
        %v2632 = vsel %vm2624, %v2560, %v2568
        %v2633 = vsel %vm2625, %v2561, %v2569
        %v2634 = vadd.f32 %v2626, %v2630
        %v2635 = vadd.f32 %v2627, %v2631
        %v2636 = vadd.f32 %v2628, %v2632
        %v2637 = vadd.f32 %v2629, %v2633
        %v2638 = vmul.f32 %v2634, 0.5
        %v2639 = vmul.f32 %v2635, 0.5
        %v2640 = vmul.f32 %v2636, 0.5
        %v2641 = vmul.f32 %v2637, 0.5
        %vm2642 = vcmp.gt.f32.partialorder %v1374, %v2638
        %vm2643 = vcmp.gt.f32.partialorder %v1375, %v2638
        %vm2644 = vcmp.gt.f32.partialorder %v1376, %v2638
        %vm2645 = vcmp.gt.f32.partialorder %v1377, %v2638
        %vm2646 = vcmp.gt.f32.partialorder %v1378, %v2639
        %vm2647 = vcmp.gt.f32.partialorder %v1379, %v2639
        %vm2648 = vcmp.gt.f32.partialorder %v1380, %v2639
        %vm2649 = vcmp.gt.f32.partialorder %v1381, %v2639
        %vm2650 = vcmp.gt.f32.partialorder %v1382, %v2640
        %vm2651 = vcmp.gt.f32.partialorder %v1383, %v2640
        %vm2652 = vcmp.gt.f32.partialorder %v1384, %v2640
        %vm2653 = vcmp.gt.f32.partialorder %v1385, %v2640
        %vm2654 = vcmp.gt.f32.partialorder %v1386, %v2641
        %vm2655 = vcmp.gt.f32.partialorder %v1387, %v2641
        %vm2656 = vcmp.gt.f32.partialorder %v1388, %v2641
        %vm2657 = vcmp.gt.f32.partialorder %v1389, %v2641
        %v2658 = vsel %vm2642, 1.0, 0.0
        %v2659 = vsel %vm2643, 1.0, 0.0
        %v2660 = vsel %vm2644, 1.0, 0.0
        %v2661 = vsel %vm2645, 1.0, 0.0
        %v2662 = vsel %vm2646, 1.0, 0.0
        %v2663 = vsel %vm2647, 1.0, 0.0
        %v2664 = vsel %vm2648, 1.0, 0.0
        %v2665 = vsel %vm2649, 1.0, 0.0
        %v2666 = vsel %vm2650, 1.0, 0.0
        %v2667 = vsel %vm2651, 1.0, 0.0
        %v2668 = vsel %vm2652, 1.0, 0.0
        %v2669 = vsel %vm2653, 1.0, 0.0
        %v2670 = vsel %vm2654, 1.0, 0.0
        %v2671 = vsel %vm2655, 1.0, 0.0
        %v2672 = vsel %vm2656, 1.0, 0.0
        %v2673 = vsel %vm2657, 1.0, 0.0
        %v2674 = vadd.f32 %v2658, %v2659
        %v2675 = vadd.f32 %v2674, %v2660
        %v2676 = vadd.f32 %v2675, %v2661
        %2677 = vadd.xlane.f32.xlu0 %v2676
        %v2678 = vpop.xlane.xlu0 %2677
        %v2679 = vadd.f32 %v2662, %v2663
        %v2680 = vadd.f32 %v2679, %v2664
        %v2681 = vadd.f32 %v2680, %v2665
        %2682 = vadd.xlane.f32.xlu0 %v2681
        %v2683 = vpop.xlane.xlu0 %2682
        %v2684 = vadd.f32 %v2666, %v2667
        %v2685 = vadd.f32 %v2684, %v2668
        %v2686 = vadd.f32 %v2685, %v2669
        %2687 = vadd.xlane.f32.xlu0 %v2686
        %v2688 = vpop.xlane.xlu0 %2687
        %v2689 = vadd.f32 %v2670, %v2671
        %v2690 = vadd.f32 %v2689, %v2672
        %v2691 = vadd.f32 %v2690, %v2673
        %2692 = vadd.xlane.f32.xlu0 %v2691
        %v2693 = vpop.xlane.xlu0 %2692
        %vm2694 = vcmp.ge.f32.partialorder %v2678, 200.0
        %vm2695 = vcmp.ge.f32.partialorder %v2683, 200.0
        %vm2696 = vcmp.ge.f32.partialorder %v2688, 200.0
        %vm2697 = vcmp.ge.f32.partialorder %v2693, 200.0
        %v2698 = vsel %vm2694, %v2638, %v2626
        %v2699 = vsel %vm2695, %v2639, %v2627
        %v2700 = vsel %vm2696, %v2640, %v2628
        %v2701 = vsel %vm2697, %v2641, %v2629
        %v2702 = vsel %vm2694, %v2630, %v2638
        %v2703 = vsel %vm2695, %v2631, %v2639
        %v2704 = vsel %vm2696, %v2632, %v2640
        %v2705 = vsel %vm2697, %v2633, %v2641
        %v2706 = vadd.f32 %v2698, %v2702
        %v2707 = vadd.f32 %v2699, %v2703
        %v2708 = vadd.f32 %v2700, %v2704
        %v2709 = vadd.f32 %v2701, %v2705
        %v2710 = vmul.f32 %v2706, 0.5
        %v2711 = vmul.f32 %v2707, 0.5
        %v2712 = vmul.f32 %v2708, 0.5
        %v2713 = vmul.f32 %v2709, 0.5
        %vm2714 = vcmp.gt.f32.partialorder %v1374, %v2710
        %vm2715 = vcmp.gt.f32.partialorder %v1375, %v2710
        %vm2716 = vcmp.gt.f32.partialorder %v1376, %v2710
        %vm2717 = vcmp.gt.f32.partialorder %v1377, %v2710
        %vm2718 = vcmp.gt.f32.partialorder %v1378, %v2711
        %vm2719 = vcmp.gt.f32.partialorder %v1379, %v2711
        %vm2720 = vcmp.gt.f32.partialorder %v1380, %v2711
        %vm2721 = vcmp.gt.f32.partialorder %v1381, %v2711
        %vm2722 = vcmp.gt.f32.partialorder %v1382, %v2712
        %vm2723 = vcmp.gt.f32.partialorder %v1383, %v2712
        %vm2724 = vcmp.gt.f32.partialorder %v1384, %v2712
        %vm2725 = vcmp.gt.f32.partialorder %v1385, %v2712
        %vm2726 = vcmp.gt.f32.partialorder %v1386, %v2713
        %vm2727 = vcmp.gt.f32.partialorder %v1387, %v2713
        %vm2728 = vcmp.gt.f32.partialorder %v1388, %v2713
        %vm2729 = vcmp.gt.f32.partialorder %v1389, %v2713
        %v2730 = vsel %vm2714, 1.0, 0.0
        %v2731 = vsel %vm2715, 1.0, 0.0
        %v2732 = vsel %vm2716, 1.0, 0.0
        %v2733 = vsel %vm2717, 1.0, 0.0
        %v2734 = vsel %vm2718, 1.0, 0.0
        %v2735 = vsel %vm2719, 1.0, 0.0
        %v2736 = vsel %vm2720, 1.0, 0.0
        %v2737 = vsel %vm2721, 1.0, 0.0
        %v2738 = vsel %vm2722, 1.0, 0.0
        %v2739 = vsel %vm2723, 1.0, 0.0
        %v2740 = vsel %vm2724, 1.0, 0.0
        %v2741 = vsel %vm2725, 1.0, 0.0
        %v2742 = vsel %vm2726, 1.0, 0.0
        %v2743 = vsel %vm2727, 1.0, 0.0
        %v2744 = vsel %vm2728, 1.0, 0.0
        %v2745 = vsel %vm2729, 1.0, 0.0
        %v2746 = vadd.f32 %v2730, %v2731
        %v2747 = vadd.f32 %v2746, %v2732
        %v2748 = vadd.f32 %v2747, %v2733
        %2749 = vadd.xlane.f32.xlu0 %v2748
        %v2750 = vpop.xlane.xlu0 %2749
        %v2751 = vadd.f32 %v2734, %v2735
        %v2752 = vadd.f32 %v2751, %v2736
        %v2753 = vadd.f32 %v2752, %v2737
        %2754 = vadd.xlane.f32.xlu0 %v2753
        %v2755 = vpop.xlane.xlu0 %2754
        %v2756 = vadd.f32 %v2738, %v2739
        %v2757 = vadd.f32 %v2756, %v2740
        %v2758 = vadd.f32 %v2757, %v2741
        %2759 = vadd.xlane.f32.xlu0 %v2758
        %v2760 = vpop.xlane.xlu0 %2759
        %v2761 = vadd.f32 %v2742, %v2743
        %v2762 = vadd.f32 %v2761, %v2744
        %v2763 = vadd.f32 %v2762, %v2745
        %2764 = vadd.xlane.f32.xlu0 %v2763
        %v2765 = vpop.xlane.xlu0 %2764
        %vm2766 = vcmp.ge.f32.partialorder %v2750, 200.0
        %vm2767 = vcmp.ge.f32.partialorder %v2755, 200.0
        %vm2768 = vcmp.ge.f32.partialorder %v2760, 200.0
        %vm2769 = vcmp.ge.f32.partialorder %v2765, 200.0
        %v2770 = vsel %vm2766, %v2710, %v2698
        %v2771 = vsel %vm2767, %v2711, %v2699
        %v2772 = vsel %vm2768, %v2712, %v2700
        %v2773 = vsel %vm2769, %v2713, %v2701
        %v2774 = vsel %vm2766, %v2702, %v2710
        %v2775 = vsel %vm2767, %v2703, %v2711
        %v2776 = vsel %vm2768, %v2704, %v2712
        %v2777 = vsel %vm2769, %v2705, %v2713
        %v2778 = vadd.f32 %v2770, %v2774
        %v2779 = vadd.f32 %v2771, %v2775
        %v2780 = vadd.f32 %v2772, %v2776
        %v2781 = vadd.f32 %v2773, %v2777
        %v2782 = vmul.f32 %v2778, 0.5
        %v2783 = vmul.f32 %v2779, 0.5
        %v2784 = vmul.f32 %v2780, 0.5
        %v2785 = vmul.f32 %v2781, 0.5
        %vm2786 = vcmp.gt.f32.partialorder %v1374, %v2782
        %vm2787 = vcmp.gt.f32.partialorder %v1375, %v2782
        %vm2788 = vcmp.gt.f32.partialorder %v1376, %v2782
        %vm2789 = vcmp.gt.f32.partialorder %v1377, %v2782
        %vm2790 = vcmp.gt.f32.partialorder %v1378, %v2783
        %vm2791 = vcmp.gt.f32.partialorder %v1379, %v2783
        %vm2792 = vcmp.gt.f32.partialorder %v1380, %v2783
        %vm2793 = vcmp.gt.f32.partialorder %v1381, %v2783
        %vm2794 = vcmp.gt.f32.partialorder %v1382, %v2784
        %vm2795 = vcmp.gt.f32.partialorder %v1383, %v2784
        %vm2796 = vcmp.gt.f32.partialorder %v1384, %v2784
        %vm2797 = vcmp.gt.f32.partialorder %v1385, %v2784
        %vm2798 = vcmp.gt.f32.partialorder %v1386, %v2785
        %vm2799 = vcmp.gt.f32.partialorder %v1387, %v2785
        %vm2800 = vcmp.gt.f32.partialorder %v1388, %v2785
        %vm2801 = vcmp.gt.f32.partialorder %v1389, %v2785
        %v2802 = vsel %vm2786, 1.0, 0.0
        %v2803 = vsel %vm2787, 1.0, 0.0
        %v2804 = vsel %vm2788, 1.0, 0.0
        %v2805 = vsel %vm2789, 1.0, 0.0
        %v2806 = vsel %vm2790, 1.0, 0.0
        %v2807 = vsel %vm2791, 1.0, 0.0
        %v2808 = vsel %vm2792, 1.0, 0.0
        %v2809 = vsel %vm2793, 1.0, 0.0
        %v2810 = vsel %vm2794, 1.0, 0.0
        %v2811 = vsel %vm2795, 1.0, 0.0
        %v2812 = vsel %vm2796, 1.0, 0.0
        %v2813 = vsel %vm2797, 1.0, 0.0
        %v2814 = vsel %vm2798, 1.0, 0.0
        %v2815 = vsel %vm2799, 1.0, 0.0
        %v2816 = vsel %vm2800, 1.0, 0.0
        %v2817 = vsel %vm2801, 1.0, 0.0
        %v2818 = vadd.f32 %v2802, %v2803
        %v2819 = vadd.f32 %v2818, %v2804
        %v2820 = vadd.f32 %v2819, %v2805
        %2821 = vadd.xlane.f32.xlu0 %v2820
        %v2822 = vpop.xlane.xlu0 %2821
        %v2823 = vadd.f32 %v2806, %v2807
        %v2824 = vadd.f32 %v2823, %v2808
        %v2825 = vadd.f32 %v2824, %v2809
        %2826 = vadd.xlane.f32.xlu0 %v2825
        %v2827 = vpop.xlane.xlu0 %2826
        %v2828 = vadd.f32 %v2810, %v2811
        %v2829 = vadd.f32 %v2828, %v2812
        %v2830 = vadd.f32 %v2829, %v2813
        %2831 = vadd.xlane.f32.xlu0 %v2830
        %v2832 = vpop.xlane.xlu0 %2831
        %v2833 = vadd.f32 %v2814, %v2815
        %v2834 = vadd.f32 %v2833, %v2816
        %v2835 = vadd.f32 %v2834, %v2817
        %2836 = vadd.xlane.f32.xlu0 %v2835
        %v2837 = vpop.xlane.xlu0 %2836
        %vm2838 = vcmp.ge.f32.partialorder %v2822, 200.0
        %vm2839 = vcmp.ge.f32.partialorder %v2827, 200.0
        %vm2840 = vcmp.ge.f32.partialorder %v2832, 200.0
        %vm2841 = vcmp.ge.f32.partialorder %v2837, 200.0
        %v2842 = vsel %vm2838, %v2782, %v2770
        %v2843 = vsel %vm2839, %v2783, %v2771
        %v2844 = vsel %vm2840, %v2784, %v2772
        %v2845 = vsel %vm2841, %v2785, %v2773
        %v2846 = vsel %vm2838, %v2774, %v2782
        %v2847 = vsel %vm2839, %v2775, %v2783
        %v2848 = vsel %vm2840, %v2776, %v2784
        %v2849 = vsel %vm2841, %v2777, %v2785
        %v2850 = vadd.f32 %v2842, %v2846
        %v2851 = vadd.f32 %v2843, %v2847
        %v2852 = vadd.f32 %v2844, %v2848
        %v2853 = vadd.f32 %v2845, %v2849
        %v2854 = vmul.f32 %v2850, 0.5
        %v2855 = vmul.f32 %v2851, 0.5
        %v2856 = vmul.f32 %v2852, 0.5
        %v2857 = vmul.f32 %v2853, 0.5
        %vm2858 = vcmp.gt.f32.partialorder %v1374, %v2854
        %vm2859 = vcmp.gt.f32.partialorder %v1375, %v2854
        %vm2860 = vcmp.gt.f32.partialorder %v1376, %v2854
        %vm2861 = vcmp.gt.f32.partialorder %v1377, %v2854
        %vm2862 = vcmp.gt.f32.partialorder %v1378, %v2855
        %vm2863 = vcmp.gt.f32.partialorder %v1379, %v2855
        %vm2864 = vcmp.gt.f32.partialorder %v1380, %v2855
        %vm2865 = vcmp.gt.f32.partialorder %v1381, %v2855
        %vm2866 = vcmp.gt.f32.partialorder %v1382, %v2856
        %vm2867 = vcmp.gt.f32.partialorder %v1383, %v2856
        %vm2868 = vcmp.gt.f32.partialorder %v1384, %v2856
        %vm2869 = vcmp.gt.f32.partialorder %v1385, %v2856
        %vm2870 = vcmp.gt.f32.partialorder %v1386, %v2857
        %vm2871 = vcmp.gt.f32.partialorder %v1387, %v2857
        %vm2872 = vcmp.gt.f32.partialorder %v1388, %v2857
        %vm2873 = vcmp.gt.f32.partialorder %v1389, %v2857
        %v2874 = vsel %vm2858, 1.0, 0.0
        %v2875 = vsel %vm2859, 1.0, 0.0
        %v2876 = vsel %vm2860, 1.0, 0.0
        %v2877 = vsel %vm2861, 1.0, 0.0
        %v2878 = vsel %vm2862, 1.0, 0.0
        %v2879 = vsel %vm2863, 1.0, 0.0
        %v2880 = vsel %vm2864, 1.0, 0.0
        %v2881 = vsel %vm2865, 1.0, 0.0
        %v2882 = vsel %vm2866, 1.0, 0.0
        %v2883 = vsel %vm2867, 1.0, 0.0
        %v2884 = vsel %vm2868, 1.0, 0.0
        %v2885 = vsel %vm2869, 1.0, 0.0
        %v2886 = vsel %vm2870, 1.0, 0.0
        %v2887 = vsel %vm2871, 1.0, 0.0
        %v2888 = vsel %vm2872, 1.0, 0.0
        %v2889 = vsel %vm2873, 1.0, 0.0
        %v2890 = vadd.f32 %v2874, %v2875
        %v2891 = vadd.f32 %v2890, %v2876
        %v2892 = vadd.f32 %v2891, %v2877
        %2893 = vadd.xlane.f32.xlu0 %v2892
        %v2894 = vpop.xlane.xlu0 %2893
        %v2895 = vadd.f32 %v2878, %v2879
        %v2896 = vadd.f32 %v2895, %v2880
        %v2897 = vadd.f32 %v2896, %v2881
        %2898 = vadd.xlane.f32.xlu0 %v2897
        %v2899 = vpop.xlane.xlu0 %2898
        %v2900 = vadd.f32 %v2882, %v2883
        %v2901 = vadd.f32 %v2900, %v2884
        %v2902 = vadd.f32 %v2901, %v2885
        %2903 = vadd.xlane.f32.xlu0 %v2902
        %v2904 = vpop.xlane.xlu0 %2903
        %v2905 = vadd.f32 %v2886, %v2887
        %v2906 = vadd.f32 %v2905, %v2888
        %v2907 = vadd.f32 %v2906, %v2889
        %2908 = vadd.xlane.f32.xlu0 %v2907
        %v2909 = vpop.xlane.xlu0 %2908
        %vm2910 = vcmp.ge.f32.partialorder %v2894, 200.0
        %vm2911 = vcmp.ge.f32.partialorder %v2899, 200.0
        %vm2912 = vcmp.ge.f32.partialorder %v2904, 200.0
        %vm2913 = vcmp.ge.f32.partialorder %v2909, 200.0
        %v2914 = vsel %vm2910, %v2854, %v2842
        %v2915 = vsel %vm2911, %v2855, %v2843
        %v2916 = vsel %vm2912, %v2856, %v2844
        %v2917 = vsel %vm2913, %v2857, %v2845
        %v2918 = vsel %vm2910, %v2846, %v2854
        %v2919 = vsel %vm2911, %v2847, %v2855
        %v2920 = vsel %vm2912, %v2848, %v2856
        %v2921 = vsel %vm2913, %v2849, %v2857
        %v2922 = vadd.f32 %v2914, %v2918
        %v2923 = vadd.f32 %v2915, %v2919
        %v2924 = vadd.f32 %v2916, %v2920
        %v2925 = vadd.f32 %v2917, %v2921
        %v2926 = vmul.f32 %v2922, 0.5
        %v2927 = vmul.f32 %v2923, 0.5
        %v2928 = vmul.f32 %v2924, 0.5
        %v2929 = vmul.f32 %v2925, 0.5
        %vm2930 = vcmp.gt.f32.partialorder %v1374, %v2926
        %vm2931 = vcmp.gt.f32.partialorder %v1375, %v2926
        %vm2932 = vcmp.gt.f32.partialorder %v1376, %v2926
        %vm2933 = vcmp.gt.f32.partialorder %v1377, %v2926
        %vm2934 = vcmp.gt.f32.partialorder %v1378, %v2927
        %vm2935 = vcmp.gt.f32.partialorder %v1379, %v2927
        %vm2936 = vcmp.gt.f32.partialorder %v1380, %v2927
        %vm2937 = vcmp.gt.f32.partialorder %v1381, %v2927
        %vm2938 = vcmp.gt.f32.partialorder %v1382, %v2928
        %vm2939 = vcmp.gt.f32.partialorder %v1383, %v2928
        %vm2940 = vcmp.gt.f32.partialorder %v1384, %v2928
        %vm2941 = vcmp.gt.f32.partialorder %v1385, %v2928
        %vm2942 = vcmp.gt.f32.partialorder %v1386, %v2929
        %vm2943 = vcmp.gt.f32.partialorder %v1387, %v2929
        %vm2944 = vcmp.gt.f32.partialorder %v1388, %v2929
        %vm2945 = vcmp.gt.f32.partialorder %v1389, %v2929
        %v2946 = vsel %vm2930, 1.0, 0.0
        %v2947 = vsel %vm2931, 1.0, 0.0
        %v2948 = vsel %vm2932, 1.0, 0.0
        %v2949 = vsel %vm2933, 1.0, 0.0
        %v2950 = vsel %vm2934, 1.0, 0.0
        %v2951 = vsel %vm2935, 1.0, 0.0
        %v2952 = vsel %vm2936, 1.0, 0.0
        %v2953 = vsel %vm2937, 1.0, 0.0
        %v2954 = vsel %vm2938, 1.0, 0.0
        %v2955 = vsel %vm2939, 1.0, 0.0
        %v2956 = vsel %vm2940, 1.0, 0.0
        %v2957 = vsel %vm2941, 1.0, 0.0
        %v2958 = vsel %vm2942, 1.0, 0.0
        %v2959 = vsel %vm2943, 1.0, 0.0
        %v2960 = vsel %vm2944, 1.0, 0.0
        %v2961 = vsel %vm2945, 1.0, 0.0
        %v2962 = vadd.f32 %v2946, %v2947
        %v2963 = vadd.f32 %v2962, %v2948
        %v2964 = vadd.f32 %v2963, %v2949
        %2965 = vadd.xlane.f32.xlu0 %v2964
        %v2966 = vpop.xlane.xlu0 %2965
        %v2967 = vadd.f32 %v2950, %v2951
        %v2968 = vadd.f32 %v2967, %v2952
        %v2969 = vadd.f32 %v2968, %v2953
        %2970 = vadd.xlane.f32.xlu0 %v2969
        %v2971 = vpop.xlane.xlu0 %2970
        %v2972 = vadd.f32 %v2954, %v2955
        %v2973 = vadd.f32 %v2972, %v2956
        %v2974 = vadd.f32 %v2973, %v2957
        %2975 = vadd.xlane.f32.xlu0 %v2974
        %v2976 = vpop.xlane.xlu0 %2975
        %v2977 = vadd.f32 %v2958, %v2959
        %v2978 = vadd.f32 %v2977, %v2960
        %v2979 = vadd.f32 %v2978, %v2961
        %2980 = vadd.xlane.f32.xlu0 %v2979
        %v2981 = vpop.xlane.xlu0 %2980
        %vm2982 = vcmp.ge.f32.partialorder %v2966, 200.0
        %vm2983 = vcmp.ge.f32.partialorder %v2971, 200.0
        %vm2984 = vcmp.ge.f32.partialorder %v2976, 200.0
        %vm2985 = vcmp.ge.f32.partialorder %v2981, 200.0
        %v2986 = vsel %vm2982, %v2926, %v2914
        %v2987 = vsel %vm2983, %v2927, %v2915
        %v2988 = vsel %vm2984, %v2928, %v2916
        %v2989 = vsel %vm2985, %v2929, %v2917
        %v2990 = vsel %vm2982, %v2918, %v2926
        %v2991 = vsel %vm2983, %v2919, %v2927
        %v2992 = vsel %vm2984, %v2920, %v2928
        %v2993 = vsel %vm2985, %v2921, %v2929
        %v2994 = vadd.f32 %v2986, %v2990
        %v2995 = vadd.f32 %v2987, %v2991
        %v2996 = vadd.f32 %v2988, %v2992
        %v2997 = vadd.f32 %v2989, %v2993
        %v2998 = vmul.f32 %v2994, 0.5
        %v2999 = vmul.f32 %v2995, 0.5
        %v3000 = vmul.f32 %v2996, 0.5
        %v3001 = vmul.f32 %v2997, 0.5
        %vm3002 = vcmp.gt.f32.partialorder %v1374, %v2998
        %vm3003 = vcmp.gt.f32.partialorder %v1375, %v2998
        %vm3004 = vcmp.gt.f32.partialorder %v1376, %v2998
        %vm3005 = vcmp.gt.f32.partialorder %v1377, %v2998
        %vm3006 = vcmp.gt.f32.partialorder %v1378, %v2999
        %vm3007 = vcmp.gt.f32.partialorder %v1379, %v2999
        %vm3008 = vcmp.gt.f32.partialorder %v1380, %v2999
        %vm3009 = vcmp.gt.f32.partialorder %v1381, %v2999
        %vm3010 = vcmp.gt.f32.partialorder %v1382, %v3000
        %vm3011 = vcmp.gt.f32.partialorder %v1383, %v3000
        %vm3012 = vcmp.gt.f32.partialorder %v1384, %v3000
        %vm3013 = vcmp.gt.f32.partialorder %v1385, %v3000
        %vm3014 = vcmp.gt.f32.partialorder %v1386, %v3001
        %vm3015 = vcmp.gt.f32.partialorder %v1387, %v3001
        %vm3016 = vcmp.gt.f32.partialorder %v1388, %v3001
        %vm3017 = vcmp.gt.f32.partialorder %v1389, %v3001
        %v3018 = vsel %vm3002, 1.0, 0.0
        %v3019 = vsel %vm3003, 1.0, 0.0
        %v3020 = vsel %vm3004, 1.0, 0.0
        %v3021 = vsel %vm3005, 1.0, 0.0
        %v3022 = vsel %vm3006, 1.0, 0.0
        %v3023 = vsel %vm3007, 1.0, 0.0
        %v3024 = vsel %vm3008, 1.0, 0.0
        %v3025 = vsel %vm3009, 1.0, 0.0
        %v3026 = vsel %vm3010, 1.0, 0.0
        %v3027 = vsel %vm3011, 1.0, 0.0
        %v3028 = vsel %vm3012, 1.0, 0.0
        %v3029 = vsel %vm3013, 1.0, 0.0
        %v3030 = vsel %vm3014, 1.0, 0.0
        %v3031 = vsel %vm3015, 1.0, 0.0
        %v3032 = vsel %vm3016, 1.0, 0.0
        %v3033 = vsel %vm3017, 1.0, 0.0
        %v3034 = vadd.f32 %v3018, %v3019
        %v3035 = vadd.f32 %v3034, %v3020
        %v3036 = vadd.f32 %v3035, %v3021
        %3037 = vadd.xlane.f32.xlu0 %v3036
        %v3038 = vpop.xlane.xlu0 %3037
        %v3039 = vadd.f32 %v3022, %v3023
        %v3040 = vadd.f32 %v3039, %v3024
        %v3041 = vadd.f32 %v3040, %v3025
        %3042 = vadd.xlane.f32.xlu0 %v3041
        %v3043 = vpop.xlane.xlu0 %3042
        %v3044 = vadd.f32 %v3026, %v3027
        %v3045 = vadd.f32 %v3044, %v3028
        %v3046 = vadd.f32 %v3045, %v3029
        %3047 = vadd.xlane.f32.xlu0 %v3046
        %v3048 = vpop.xlane.xlu0 %3047
        %v3049 = vadd.f32 %v3030, %v3031
        %v3050 = vadd.f32 %v3049, %v3032
        %v3051 = vadd.f32 %v3050, %v3033
        %3052 = vadd.xlane.f32.xlu0 %v3051
        %v3053 = vpop.xlane.xlu0 %3052
        %vm3054 = vcmp.ge.f32.partialorder %v3038, 200.0
        %vm3055 = vcmp.ge.f32.partialorder %v3043, 200.0
        %vm3056 = vcmp.ge.f32.partialorder %v3048, 200.0
        %vm3057 = vcmp.ge.f32.partialorder %v3053, 200.0
        %v3058 = vsel %vm3054, %v2998, %v2986
        %v3059 = vsel %vm3055, %v2999, %v2987
        %v3060 = vsel %vm3056, %v3000, %v2988
        %v3061 = vsel %vm3057, %v3001, %v2989
        %v3062 = vsel %vm3054, %v2990, %v2998
        %v3063 = vsel %vm3055, %v2991, %v2999
        %v3064 = vsel %vm3056, %v2992, %v3000
        %v3065 = vsel %vm3057, %v2993, %v3001
        %v3066 = vadd.f32 %v3058, %v3062
        %v3067 = vadd.f32 %v3059, %v3063
        %v3068 = vadd.f32 %v3060, %v3064
        %v3069 = vadd.f32 %v3061, %v3065
        %v3070 = vmul.f32 %v3066, 0.5
        %v3071 = vmul.f32 %v3067, 0.5
        %v3072 = vmul.f32 %v3068, 0.5
        %v3073 = vmul.f32 %v3069, 0.5
        %vm3074 = vcmp.gt.f32.partialorder %v1374, %v3070
        %vm3075 = vcmp.gt.f32.partialorder %v1375, %v3070
        %vm3076 = vcmp.gt.f32.partialorder %v1376, %v3070
        %vm3077 = vcmp.gt.f32.partialorder %v1377, %v3070
        %vm3078 = vcmp.gt.f32.partialorder %v1378, %v3071
        %vm3079 = vcmp.gt.f32.partialorder %v1379, %v3071
        %vm3080 = vcmp.gt.f32.partialorder %v1380, %v3071
        %vm3081 = vcmp.gt.f32.partialorder %v1381, %v3071
        %vm3082 = vcmp.gt.f32.partialorder %v1382, %v3072
        %vm3083 = vcmp.gt.f32.partialorder %v1383, %v3072
        %vm3084 = vcmp.gt.f32.partialorder %v1384, %v3072
        %vm3085 = vcmp.gt.f32.partialorder %v1385, %v3072
        %vm3086 = vcmp.gt.f32.partialorder %v1386, %v3073
        %vm3087 = vcmp.gt.f32.partialorder %v1387, %v3073
        %vm3088 = vcmp.gt.f32.partialorder %v1388, %v3073
        %vm3089 = vcmp.gt.f32.partialorder %v1389, %v3073
        %v3090 = vsel %vm3074, 1.0, 0.0
        %v3091 = vsel %vm3075, 1.0, 0.0
        %v3092 = vsel %vm3076, 1.0, 0.0
        %v3093 = vsel %vm3077, 1.0, 0.0
        %v3094 = vsel %vm3078, 1.0, 0.0
        %v3095 = vsel %vm3079, 1.0, 0.0
        %v3096 = vsel %vm3080, 1.0, 0.0
        %v3097 = vsel %vm3081, 1.0, 0.0
        %v3098 = vsel %vm3082, 1.0, 0.0
        %v3099 = vsel %vm3083, 1.0, 0.0
        %v3100 = vsel %vm3084, 1.0, 0.0
        %v3101 = vsel %vm3085, 1.0, 0.0
        %v3102 = vsel %vm3086, 1.0, 0.0
        %v3103 = vsel %vm3087, 1.0, 0.0
        %v3104 = vsel %vm3088, 1.0, 0.0
        %v3105 = vsel %vm3089, 1.0, 0.0
        %v3106 = vadd.f32 %v3090, %v3091
        %v3107 = vadd.f32 %v3106, %v3092
        %v3108 = vadd.f32 %v3107, %v3093
        %3109 = vadd.xlane.f32.xlu0 %v3108
        %v3110 = vpop.xlane.xlu0 %3109
        %v3111 = vadd.f32 %v3094, %v3095
        %v3112 = vadd.f32 %v3111, %v3096
        %v3113 = vadd.f32 %v3112, %v3097
        %3114 = vadd.xlane.f32.xlu0 %v3113
        %v3115 = vpop.xlane.xlu0 %3114
        %v3116 = vadd.f32 %v3098, %v3099
        %v3117 = vadd.f32 %v3116, %v3100
        %v3118 = vadd.f32 %v3117, %v3101
        %3119 = vadd.xlane.f32.xlu0 %v3118
        %v3120 = vpop.xlane.xlu0 %3119
        %v3121 = vadd.f32 %v3102, %v3103
        %v3122 = vadd.f32 %v3121, %v3104
        %v3123 = vadd.f32 %v3122, %v3105
        %3124 = vadd.xlane.f32.xlu0 %v3123
        %v3125 = vpop.xlane.xlu0 %3124
        %vm3126 = vcmp.ge.f32.partialorder %v3110, 200.0
        %vm3127 = vcmp.ge.f32.partialorder %v3115, 200.0
        %vm3128 = vcmp.ge.f32.partialorder %v3120, 200.0
        %vm3129 = vcmp.ge.f32.partialorder %v3125, 200.0
        %v3130 = vsel %vm3126, %v3070, %v3058
        %v3131 = vsel %vm3127, %v3071, %v3059
        %v3132 = vsel %vm3128, %v3072, %v3060
        %v3133 = vsel %vm3129, %v3073, %v3061
        %v3134 = vsel %vm3126, %v3062, %v3070
        %v3135 = vsel %vm3127, %v3063, %v3071
        %v3136 = vsel %vm3128, %v3064, %v3072
        %v3137 = vsel %vm3129, %v3065, %v3073
        %v3138 = vadd.f32 %v3130, %v3134
        %v3139 = vadd.f32 %v3131, %v3135
        %v3140 = vadd.f32 %v3132, %v3136
        %v3141 = vadd.f32 %v3133, %v3137
        %v3142 = vmul.f32 %v3138, 0.5
        %v3143 = vmul.f32 %v3139, 0.5
        %v3144 = vmul.f32 %v3140, 0.5
        %v3145 = vmul.f32 %v3141, 0.5
        %vm3146 = vcmp.gt.f32.partialorder %v1374, %v3142
        %vm3147 = vcmp.gt.f32.partialorder %v1375, %v3142
        %vm3148 = vcmp.gt.f32.partialorder %v1376, %v3142
        %vm3149 = vcmp.gt.f32.partialorder %v1377, %v3142
        %vm3150 = vcmp.gt.f32.partialorder %v1378, %v3143
        %vm3151 = vcmp.gt.f32.partialorder %v1379, %v3143
        %vm3152 = vcmp.gt.f32.partialorder %v1380, %v3143
        %vm3153 = vcmp.gt.f32.partialorder %v1381, %v3143
        %vm3154 = vcmp.gt.f32.partialorder %v1382, %v3144
        %vm3155 = vcmp.gt.f32.partialorder %v1383, %v3144
        %vm3156 = vcmp.gt.f32.partialorder %v1384, %v3144
        %vm3157 = vcmp.gt.f32.partialorder %v1385, %v3144
        %vm3158 = vcmp.gt.f32.partialorder %v1386, %v3145
        %vm3159 = vcmp.gt.f32.partialorder %v1387, %v3145
        %vm3160 = vcmp.gt.f32.partialorder %v1388, %v3145
        %vm3161 = vcmp.gt.f32.partialorder %v1389, %v3145
        %v3162 = vsel %vm3146, 1.0, 0.0
        %v3163 = vsel %vm3147, 1.0, 0.0
        %v3164 = vsel %vm3148, 1.0, 0.0
        %v3165 = vsel %vm3149, 1.0, 0.0
        %v3166 = vsel %vm3150, 1.0, 0.0
        %v3167 = vsel %vm3151, 1.0, 0.0
        %v3168 = vsel %vm3152, 1.0, 0.0
        %v3169 = vsel %vm3153, 1.0, 0.0
        %v3170 = vsel %vm3154, 1.0, 0.0
        %v3171 = vsel %vm3155, 1.0, 0.0
        %v3172 = vsel %vm3156, 1.0, 0.0
        %v3173 = vsel %vm3157, 1.0, 0.0
        %v3174 = vsel %vm3158, 1.0, 0.0
        %v3175 = vsel %vm3159, 1.0, 0.0
        %v3176 = vsel %vm3160, 1.0, 0.0
        %v3177 = vsel %vm3161, 1.0, 0.0
        %v3178 = vadd.f32 %v3162, %v3163
        %v3179 = vadd.f32 %v3178, %v3164
        %v3180 = vadd.f32 %v3179, %v3165
        %3181 = vadd.xlane.f32.xlu0 %v3180
        %v3182 = vpop.xlane.xlu0 %3181
        %v3183 = vadd.f32 %v3166, %v3167
        %v3184 = vadd.f32 %v3183, %v3168
        %v3185 = vadd.f32 %v3184, %v3169
        %3186 = vadd.xlane.f32.xlu0 %v3185
        %v3187 = vpop.xlane.xlu0 %3186
        %v3188 = vadd.f32 %v3170, %v3171
        %v3189 = vadd.f32 %v3188, %v3172
        %v3190 = vadd.f32 %v3189, %v3173
        %3191 = vadd.xlane.f32.xlu0 %v3190
        %v3192 = vpop.xlane.xlu0 %3191
        %v3193 = vadd.f32 %v3174, %v3175
        %v3194 = vadd.f32 %v3193, %v3176
        %v3195 = vadd.f32 %v3194, %v3177
        %3196 = vadd.xlane.f32.xlu0 %v3195
        %v3197 = vpop.xlane.xlu0 %3196
        %vm3198 = vcmp.ge.f32.partialorder %v3182, 200.0
        %vm3199 = vcmp.ge.f32.partialorder %v3187, 200.0
        %vm3200 = vcmp.ge.f32.partialorder %v3192, 200.0
        %vm3201 = vcmp.ge.f32.partialorder %v3197, 200.0
        %v3202 = vsel %vm3198, %v3142, %v3130
        %v3203 = vsel %vm3199, %v3143, %v3131
        %v3204 = vsel %vm3200, %v3144, %v3132
        %v3205 = vsel %vm3201, %v3145, %v3133
        %v3206 = vsel %vm3198, %v3134, %v3142
        %v3207 = vsel %vm3199, %v3135, %v3143
        %v3208 = vsel %vm3200, %v3136, %v3144
        %v3209 = vsel %vm3201, %v3137, %v3145
        %v3210 = vadd.f32 %v3202, %v3206
        %v3211 = vadd.f32 %v3203, %v3207
        %v3212 = vadd.f32 %v3204, %v3208
        %v3213 = vadd.f32 %v3205, %v3209
        %v3214 = vmul.f32 %v3210, 0.5
        %v3215 = vmul.f32 %v3211, 0.5
        %v3216 = vmul.f32 %v3212, 0.5
        %v3217 = vmul.f32 %v3213, 0.5
        %vm3218 = vcmp.gt.f32.partialorder %v1374, %v3214
        %vm3219 = vcmp.gt.f32.partialorder %v1375, %v3214
        %vm3220 = vcmp.gt.f32.partialorder %v1376, %v3214
        %vm3221 = vcmp.gt.f32.partialorder %v1377, %v3214
        %vm3222 = vcmp.gt.f32.partialorder %v1378, %v3215
        %vm3223 = vcmp.gt.f32.partialorder %v1379, %v3215
        %vm3224 = vcmp.gt.f32.partialorder %v1380, %v3215
        %vm3225 = vcmp.gt.f32.partialorder %v1381, %v3215
        %vm3226 = vcmp.gt.f32.partialorder %v1382, %v3216
        %vm3227 = vcmp.gt.f32.partialorder %v1383, %v3216
        %vm3228 = vcmp.gt.f32.partialorder %v1384, %v3216
        %vm3229 = vcmp.gt.f32.partialorder %v1385, %v3216
        %vm3230 = vcmp.gt.f32.partialorder %v1386, %v3217
        %vm3231 = vcmp.gt.f32.partialorder %v1387, %v3217
        %vm3232 = vcmp.gt.f32.partialorder %v1388, %v3217
        %vm3233 = vcmp.gt.f32.partialorder %v1389, %v3217
        %v3234 = vsel %vm3218, 1.0, 0.0
        %v3235 = vsel %vm3219, 1.0, 0.0
        %v3236 = vsel %vm3220, 1.0, 0.0
        %v3237 = vsel %vm3221, 1.0, 0.0
        %v3238 = vsel %vm3222, 1.0, 0.0
        %v3239 = vsel %vm3223, 1.0, 0.0
        %v3240 = vsel %vm3224, 1.0, 0.0
        %v3241 = vsel %vm3225, 1.0, 0.0
        %v3242 = vsel %vm3226, 1.0, 0.0
        %v3243 = vsel %vm3227, 1.0, 0.0
        %v3244 = vsel %vm3228, 1.0, 0.0
        %v3245 = vsel %vm3229, 1.0, 0.0
        %v3246 = vsel %vm3230, 1.0, 0.0
        %v3247 = vsel %vm3231, 1.0, 0.0
        %v3248 = vsel %vm3232, 1.0, 0.0
        %v3249 = vsel %vm3233, 1.0, 0.0
        %v3250 = vadd.f32 %v3234, %v3235
        %v3251 = vadd.f32 %v3250, %v3236
        %v3252 = vadd.f32 %v3251, %v3237
        %3253 = vadd.xlane.f32.xlu0 %v3252
        %v3254 = vpop.xlane.xlu0 %3253
        %v3255 = vadd.f32 %v3238, %v3239
        %v3256 = vadd.f32 %v3255, %v3240
        %v3257 = vadd.f32 %v3256, %v3241
        %3258 = vadd.xlane.f32.xlu0 %v3257
        %v3259 = vpop.xlane.xlu0 %3258
        %v3260 = vadd.f32 %v3242, %v3243
        %v3261 = vadd.f32 %v3260, %v3244
        %v3262 = vadd.f32 %v3261, %v3245
        %3263 = vadd.xlane.f32.xlu0 %v3262
        %v3264 = vpop.xlane.xlu0 %3263
        %v3265 = vadd.f32 %v3246, %v3247
        %v3266 = vadd.f32 %v3265, %v3248
        %v3267 = vadd.f32 %v3266, %v3249
        %3268 = vadd.xlane.f32.xlu0 %v3267
        %v3269 = vpop.xlane.xlu0 %3268
        %vm3270 = vcmp.ge.f32.partialorder %v3254, 200.0
        %vm3271 = vcmp.ge.f32.partialorder %v3259, 200.0
        %vm3272 = vcmp.ge.f32.partialorder %v3264, 200.0
        %vm3273 = vcmp.ge.f32.partialorder %v3269, 200.0
        %v3274 = vsel %vm3270, %v3214, %v3202
        %v3275 = vsel %vm3271, %v3215, %v3203
        %v3276 = vsel %vm3272, %v3216, %v3204
        %v3277 = vsel %vm3273, %v3217, %v3205
        %vm3278 = vcmp.gt.f32.partialorder %v1374, %v3274
        %vm3279 = vcmp.gt.f32.partialorder %v1375, %v3274
        %vm3280 = vcmp.gt.f32.partialorder %v1376, %v3274
        %vm3281 = vcmp.gt.f32.partialorder %v1377, %v3274
        %vm3282 = vcmp.gt.f32.partialorder %v1378, %v3275
        %vm3283 = vcmp.gt.f32.partialorder %v1379, %v3275
        %vm3284 = vcmp.gt.f32.partialorder %v1380, %v3275
        %vm3285 = vcmp.gt.f32.partialorder %v1381, %v3275
        %vm3286 = vcmp.gt.f32.partialorder %v1382, %v3276
        %vm3287 = vcmp.gt.f32.partialorder %v1383, %v3276
        %vm3288 = vcmp.gt.f32.partialorder %v1384, %v3276
        %vm3289 = vcmp.gt.f32.partialorder %v1385, %v3276
        %vm3290 = vcmp.gt.f32.partialorder %v1386, %v3277
        %vm3291 = vcmp.gt.f32.partialorder %v1387, %v3277
        %vm3292 = vcmp.gt.f32.partialorder %v1388, %v3277
        %vm3293 = vcmp.gt.f32.partialorder %v1389, %v3277
        %v3294 = vsel %vm3278, 1.0, 0.0
        %v3295 = vsel %vm3279, 1.0, 0.0
        %v3296 = vsel %vm3280, 1.0, 0.0
        %v3297 = vsel %vm3281, 1.0, 0.0
        %v3298 = vsel %vm3282, 1.0, 0.0
        %v3299 = vsel %vm3283, 1.0, 0.0
        %v3300 = vsel %vm3284, 1.0, 0.0
        %v3301 = vsel %vm3285, 1.0, 0.0
        %v3302 = vsel %vm3286, 1.0, 0.0
        %v3303 = vsel %vm3287, 1.0, 0.0
        %v3304 = vsel %vm3288, 1.0, 0.0
        %v3305 = vsel %vm3289, 1.0, 0.0
        %v3306 = vsel %vm3290, 1.0, 0.0
        %v3307 = vsel %vm3291, 1.0, 0.0
        %v3308 = vsel %vm3292, 1.0, 0.0
        %v3309 = vsel %vm3293, 1.0, 0.0
        %v3310 = vadd.f32 %v3294, %v3295
        %v3311 = vadd.f32 %v3310, %v3296
        %v3312 = vadd.f32 %v3311, %v3297
        %3313 = vadd.xlane.f32.xlu0 %v3312
        %v3314 = vpop.xlane.xlu0 %3313
        %v3315 = vadd.f32 %v3298, %v3299
        %v3316 = vadd.f32 %v3315, %v3300
        %v3317 = vadd.f32 %v3316, %v3301
        %3318 = vadd.xlane.f32.xlu0 %v3317
        %v3319 = vpop.xlane.xlu0 %3318
        %v3320 = vadd.f32 %v3302, %v3303
        %v3321 = vadd.f32 %v3320, %v3304
        %v3322 = vadd.f32 %v3321, %v3305
        %3323 = vadd.xlane.f32.xlu0 %v3322
        %v3324 = vpop.xlane.xlu0 %3323
        %v3325 = vadd.f32 %v3306, %v3307
        %v3326 = vadd.f32 %v3325, %v3308
        %v3327 = vadd.f32 %v3326, %v3309
        %3328 = vadd.xlane.f32.xlu0 %v3327
        %v3329 = vpop.xlane.xlu0 %3328
        %v3330 = vsel %vm3278, %v1374, 0.0
        %v3331 = vsel %vm3279, %v1375, 0.0
        %v3332 = vsel %vm3280, %v1376, 0.0
        %v3333 = vsel %vm3281, %v1377, 0.0
        %v3334 = vsel %vm3282, %v1378, 0.0
        %v3335 = vsel %vm3283, %v1379, 0.0
        %v3336 = vsel %vm3284, %v1380, 0.0
        %v3337 = vsel %vm3285, %v1381, 0.0
        %v3338 = vsel %vm3286, %v1382, 0.0
        %v3339 = vsel %vm3287, %v1383, 0.0
        %v3340 = vsel %vm3288, %v1384, 0.0
        %v3341 = vsel %vm3289, %v1385, 0.0
        %v3342 = vsel %vm3290, %v1386, 0.0
        %v3343 = vsel %vm3291, %v1387, 0.0
        %v3344 = vsel %vm3292, %v1388, 0.0
        %v3345 = vsel %vm3293, %v1389, 0.0
        %v3346 = vadd.f32 %v3330, %v3331
        %v3347 = vadd.f32 %v3346, %v3332
        %v3348 = vadd.f32 %v3347, %v3333
        %3349 = vadd.xlane.f32.xlu0 %v3348
        %v3350 = vpop.xlane.xlu0 %3349
        %v3351 = vadd.f32 %v3334, %v3335
        %v3352 = vadd.f32 %v3351, %v3336
        %v3353 = vadd.f32 %v3352, %v3337
        %3354 = vadd.xlane.f32.xlu0 %v3353
        %v3355 = vpop.xlane.xlu0 %3354
        %v3356 = vadd.f32 %v3338, %v3339
        %v3357 = vadd.f32 %v3356, %v3340
        %v3358 = vadd.f32 %v3357, %v3341
        %3359 = vadd.xlane.f32.xlu0 %v3358
        %v3360 = vpop.xlane.xlu0 %3359
        %v3361 = vadd.f32 %v3342, %v3343
        %v3362 = vadd.f32 %v3361, %v3344
        %v3363 = vadd.f32 %v3362, %v3345
        %3364 = vadd.xlane.f32.xlu0 %v3363
        %v3365 = vpop.xlane.xlu0 %3364
        %v3366 = vsub.f32 200.0, %v3314
        %v3367 = vsub.f32 200.0, %v3319
        %v3368 = vsub.f32 200.0, %v3324
        %v3369 = vsub.f32 200.0, %v3329
        %v3370 = vmul.f32 %v3366, %v3274
        %v3371 = vmul.f32 %v3367, %v3275
        %v3372 = vmul.f32 %v3368, %v3276
        %v3373 = vmul.f32 %v3369, %v3277
        %v3374 = vadd.f32 %v3350, %v3370
        %v3375 = vadd.f32 %v3355, %v3371
        %v3376 = vadd.f32 %v3360, %v3372
        %v3377 = vadd.f32 %v3365, %v3373
        %v3378 = vadd.f32 %v1358, %v3374
        %v3379 = vadd.f32 %v1363, %v3375
        %v3380 = vadd.f32 %v1368, %v3376
        %v3381 = vadd.f32 %v1373, %v3377
        %v3382 = vsel %vm1269, 1.0, 0.0
        %v3383 = vsel %vm1270, 1.0, 0.0
        %v3384 = vsel %vm1271, 1.0, 0.0
        %v3385 = vsel %vm1272, 1.0, 0.0
        %v3386 = vsel %vm1273, 1.0, 0.0
        %v3387 = vsel %vm1274, 1.0, 0.0
        %v3388 = vsel %vm1275, 1.0, 0.0
        %v3389 = vsel %vm1276, 1.0, 0.0
        %v3390 = vsel %vm1277, 1.0, 0.0
        %v3391 = vsel %vm1278, 1.0, 0.0
        %v3392 = vsel %vm1279, 1.0, 0.0
        %v3393 = vsel %vm1280, 1.0, 0.0
        %v3394 = vsel %vm1281, 1.0, 0.0
        %v3395 = vsel %vm1282, 1.0, 0.0
        %v3396 = vsel %vm1283, 1.0, 0.0
        %v3397 = vsel %vm1284, 1.0, 0.0
        %v3398 = vadd.f32 %v3382, %v3383
        %v3399 = vadd.f32 %v3398, %v3384
        %v3400 = vadd.f32 %v3399, %v3385
        %3401 = vadd.xlane.f32.xlu0 %v3400
        %v3402 = vpop.xlane.xlu0 %3401
        %v3403 = vadd.f32 %v3386, %v3387
        %v3404 = vadd.f32 %v3403, %v3388
        %v3405 = vadd.f32 %v3404, %v3389
        %3406 = vadd.xlane.f32.xlu0 %v3405
        %v3407 = vpop.xlane.xlu0 %3406
        %v3408 = vadd.f32 %v3390, %v3391
        %v3409 = vadd.f32 %v3408, %v3392
        %v3410 = vadd.f32 %v3409, %v3393
        %3411 = vadd.xlane.f32.xlu0 %v3410
        %v3412 = vpop.xlane.xlu0 %3411
        %v3413 = vadd.f32 %v3394, %v3395
        %v3414 = vadd.f32 %v3413, %v3396
        %v3415 = vadd.f32 %v3414, %v3397
        %3416 = vadd.xlane.f32.xlu0 %v3415
        %v3417 = vpop.xlane.xlu0 %3416
        %v3418 = vsel %vm1269, %v1290, 0.0
        %v3419 = vsel %vm1270, %v1291, 0.0
        %v3420 = vsel %vm1271, %v1292, 0.0
        %v3421 = vsel %vm1272, %v1293, 0.0
        %v3422 = vsel %vm1273, %v1294, 0.0
        %v3423 = vsel %vm1274, %v1295, 0.0
        %v3424 = vsel %vm1275, %v1296, 0.0
        %v3425 = vsel %vm1276, %v1297, 0.0
        %v3426 = vsel %vm1277, %v1298, 0.0
        %v3427 = vsel %vm1278, %v1299, 0.0
        %v3428 = vsel %vm1279, %v1300, 0.0
        %v3429 = vsel %vm1280, %v1301, 0.0
        %v3430 = vsel %vm1281, %v1302, 0.0
        %v3431 = vsel %vm1282, %v1303, 0.0
        %v3432 = vsel %vm1283, %v1304, 0.0
        %v3433 = vsel %vm1284, %v1305, 0.0
        %v3434 = vadd.f32 %v3418, %v3419
        %v3435 = vadd.f32 %v3434, %v3420
        %v3436 = vadd.f32 %v3435, %v3421
        %3437 = vadd.xlane.f32.xlu0 %v3436
        %v3438 = vpop.xlane.xlu0 %3437
        %v3439 = vadd.f32 %v3422, %v3423
        %v3440 = vadd.f32 %v3439, %v3424
        %v3441 = vadd.f32 %v3440, %v3425
        %3442 = vadd.xlane.f32.xlu0 %v3441
        %v3443 = vpop.xlane.xlu0 %3442
        %v3444 = vadd.f32 %v3426, %v3427
        %v3445 = vadd.f32 %v3444, %v3428
        %v3446 = vadd.f32 %v3445, %v3429
        %3447 = vadd.xlane.f32.xlu0 %v3446
        %v3448 = vpop.xlane.xlu0 %3447
        %v3449 = vadd.f32 %v3430, %v3431
        %v3450 = vadd.f32 %v3449, %v3432
        %v3451 = vadd.f32 %v3450, %v3433
        %3452 = vadd.xlane.f32.xlu0 %v3451
        %v3453 = vpop.xlane.xlu0 %3452
        %v3454 = vlog2.pop %v3378
        %v3455 = vmul.f32 %v3454, 0.6931472
        %v3456 = vlog2.pop %v3379
        %v3457 = vmul.f32 %v3456, 0.6931472
        %v3458 = vlog2.pop %v3380
        %v3459 = vmul.f32 %v3458, 0.6931472
        %v3460 = vlog2.pop %v3381
        %v3461 = vmul.f32 %v3460, 0.6931472
        %v3462 = vmul.f32 %v3402, %v3455
        %v3463 = vmul.f32 %v3407, %v3457
        %v3464 = vmul.f32 %v3412, %v3459
        %v3465 = vmul.f32 %v3417, %v3461
        %v3466 = vsub.f32 %v3438, %v3462
        %v3467 = vsub.f32 %v3443, %v3463
        %v3468 = vsub.f32 %v3448, %v3464
        %v3469 = vsub.f32 %v3453, %v3465
        %v3470 = vmax.f32 %v3402, 1.0
        %v3471 = vmax.f32 %v3407, 1.0
        %v3472 = vmax.f32 %v3412, 1.0
        %v3473 = vmax.f32 %v3417, 1.0
        %v3474 = vrcp.pop %v3470
        %v3475 = vmul.f32 %v3466, %v3474
        %v3476 = vrcp.pop %v3471
        %v3477 = vmul.f32 %v3467, %v3476
        %v3478 = vrcp.pop %v3472
        %v3479 = vmul.f32 %v3468, %v3478
        %v3480 = vrcp.pop %v3473
        %v3481 = vmul.f32 %v3469, %v3480
        %s3482 = scalar_lea.vmem %s256, %s1185
        %vm3483 = vcmask 7168
        %3484 = vst.msk [vmem:[%s3482] sm:$0xff] %vm3483, %v3475
        %3485 = vst.msk [vmem:[%s3482 + $0x8] sm:$0xff] %vm3483, %v3477
        %3486 = vst.msk [vmem:[%s3482 + $0x10] sm:$0xff] %vm3483, %v3479
        %3487 = vst.msk [vmem:[%s3482 + $0x18] sm:$0xff] %vm3483, %v3481
        %s3488 = scalar_lea.vmem %s262, %s1185
        %3489 = vst.msk [vmem:[%s3488] sm:$0xff] %vm3483, %v3402
        %3490 = vst.msk [vmem:[%s3488 + $0x8] sm:$0xff] %vm3483, %v3407
        %3491 = vst.msk [vmem:[%s3488 + $0x10] sm:$0xff] %vm3483, %v3412
        %3492 = vst.msk [vmem:[%s3488 + $0x18] sm:$0xff] %vm3483, %v3417
      $region41: #{supcon_topk_loss.1} parent=35 // loop_footer
        %s1184 = sadd.s32 1, %s1180
      $region42: #{supcon_topk_loss.1} parent=35 // loop_footer_branch
        %1179 = sbr.rel target = $region38
      $region43: #{supcon_topk_loss.1} parent=35 // loop_exit
        _
      %s3493 = smul.u32 16, %s17
      %p3494 = scmp.lt.s32.totalorder %s3493, 63
      %s3495 = scalar_select %p3494, %s3493, 63
      %s3496 = smul.addr %s3495, 8
      %s3497 = scalar_lea.vmem %s4, %s3496
      %s3498 = smul.u32 16, %s17
      %p3499 = scmp.lt.s32.totalorder %s3498, 63
      %s3500 = scalar_select %p3499, %s3498, 63
      %s3501 = smul.addr %s3500, 8
      %s3502 = scalar_lea.vmem %s5, %s3501
      // Predicated region
      $region44: #{supcon_topk_loss.1} parent=35 // pred_check
        %p3503 = pneg %p129
      $region45: #{supcon_topk_loss.1} parent=35 // pred_check_branch
        %3505 = sbr.rel (%p3503) target = $region47
      $region46: #{supcon_topk_loss.1} parent=35 // pred_region
        %s3506 = smul.u32 16, %s17
      $region47: #{supcon_topk_loss.1} parent=35 // pred_fallthru
        _
      // Predicated region
      $region48: #{supcon_topk_loss.1} parent=35 // pred_check
        %p3507 = pneg %p155
      $region49: #{supcon_topk_loss.1} parent=35 // pred_check_branch
        %3509 = sbr.rel (%p3507) target = $region51
      $region50: #{supcon_topk_loss.1} parent=35 // pred_region
        %s3510 = smul.u32 16, %s17
      $region51: #{supcon_topk_loss.1} parent=35 // pred_fallthru
        _
    $region36: #{supcon_topk_loss.1} parent=5 // pred_fallthru
      _
    %p3511 = scmp.le.s32.totalorder 2, %s12
    // Predicated region
    $region52: #{supcon_topk_loss.1} parent=5 // pred_check
      %p3512 = pneg %p3511
    $region53: #{supcon_topk_loss.1} parent=5 // pred_check_branch
      %3514 = sbr.rel (%p3512) target = $region55
    $region54: #{supcon_topk_loss.1} parent=5 // pred_region
      %s3515 = ssub.s32 %s12, 2
      // Predicated region
      $region56: #{supcon_topk_loss.1} parent=54 // pred_check
        %p3516 = pneg %p135
      $region57: #{supcon_topk_loss.1} parent=54 // pred_check_branch
        %3518 = sbr.rel (%p3516) target = $region59
      $region58: #{supcon_topk_loss.1} parent=54 // pred_region
        %s3519 = smul.u32 16, %s18
        %p3520 = scmp.lt.s32.totalorder %s3519, 63
        %s3521 = scalar_select %p3520, %s3519, 63
        %s3522 = smul.addr %s3521, 8
        %s3523 = scalar_lea.vmem %s4, %s3522
      $region59: #{supcon_topk_loss.1} parent=54 // pred_fallthru
        _
      // Predicated region
      $region60: #{supcon_topk_loss.1} parent=54 // pred_check
        %p3524 = pneg %p161
      $region61: #{supcon_topk_loss.1} parent=54 // pred_check_branch
        %3526 = sbr.rel (%p3524) target = $region63
      $region62: #{supcon_topk_loss.1} parent=54 // pred_region
        %s3527 = smul.u32 16, %s18
        %p3528 = scmp.lt.s32.totalorder %s3527, 63
        %s3529 = scalar_select %p3528, %s3527, 63
        %s3530 = smul.addr %s3529, 8
        %s3531 = scalar_lea.vmem %s5, %s3530
      $region63: #{supcon_topk_loss.1} parent=54 // pred_fallthru
        _
    $region55: #{supcon_topk_loss.1} parent=5 // pred_fallthru
      _
  $region6: #{supcon_topk_loss.1} parent=0 // loop_footer
    %s16 = sadd.s32 1, %s12
  $region7: #{supcon_topk_loss.1} parent=0 // loop_footer_branch
    %11 = sbr.rel target = $region3
  $region8: #{supcon_topk_loss.1} parent=0 // loop_exit
    _

</llo_original>
